<compile_context>
chip_gen: v7x
topology: tpu7x:2x2x1
jax: 0.10.0
libtpu: 0.0.40
codegen_flags: <defaults>
</compile_context>

<pallas_src>
import functools
import math

import jax
import jax.numpy as jnp
from jax import lax
from jax.experimental import pallas as pl
from jax.experimental.pallas import tpu as pltpu


def _round_up(x, m):
    return ((x + m - 1) // m) * m


# ----------------------------------------------------------------------------
# Fused kernel: streaming exact k-NN residuals + threshold clamp + PointNet
# ----------------------------------------------------------------------------
def _encoder_kernel(xc_ref, xo_rm_ref, xo_t_ref, w1_ref, b1_ref, w2_ref,
                    b2_ref, w3_ref, b3_ref, out_ref, pool_ref, *, k, thres):
    tile_nc = xc_ref.shape[0]
    tile_no = xo_t_ref.shape[1]
    no_idx = pl.program_id(1)

    # Reset the packed running k-best pool ([d | x | y | z], k lanes each) at
    # the first N_orig chunk of every coarse tile.
    @pl.when(no_idx == 0)
    def _():
        pool_ref[...] = jnp.concatenate(
            [jnp.full((tile_nc, k), jnp.inf, jnp.float32),
             jnp.zeros((tile_nc, 3 * k), jnp.float32)], axis=1)

    xc = xc_ref[...]                                      # (tile_nc, 3)
    xcx, xcy, xcz = xc[:, 0:1], xc[:, 1:2], xc[:, 2:3]    # (tile_nc, 1) columns
    xox = xo_t_ref[0:1, :]                                # (1, tile_no) rows
    xoy = xo_t_ref[1:2, :]
    xoz = xo_t_ref[2:3, :]

    # Exact squared distances on the VPU (no degenerate K=3 matmul, no
    # ||x||^2 cancellation).
    dx = xcx - xox
    dy = xcy - xoy
    dz = xcz - xoz
    d2 = dx * dx + dy * dy + dz * dz                      # (tile_nc, tile_no)

    chunk_iota = lax.broadcasted_iota(jnp.int32, (tile_nc, tile_no), 1)
    xo_rm = xo_rm_ref[...]                                # (tile_no, 3)

    # ---- chunk-local top-k: k rounds of argmin-extract on d2 only -----------
    # Per round: 2 full-width reductions + ~5 full-width VPU passes; the
    # coordinate gather is a one-hot matmul on the otherwise-idle MXU.
    # Retirement is unconditional (no pool coupling) and skipped on the last
    # round.  k is tiny/static so the Python loop is a fixed unrolled loop.
    cand_d, cand_c = [], []
    for r in range(k):
        c_min = jnp.min(d2, axis=1, keepdims=True)                # (tile_nc, 1)
        eq = d2 == c_min                                          # reused below
        c_arg = jnp.min(jnp.where(eq, chunk_iota, tile_no),
                        axis=1, keepdims=True)
        c_hot = chunk_iota == c_arg                               # exact one-hot
        cand_d.append(c_min)
        # one-hot coordinate gather on the MXU; HIGHEST keeps f32 coords exact
        cand_c.append(jnp.dot(c_hot.astype(jnp.float32), xo_rm,
                              preferred_element_type=jnp.float32,
                              precision=lax.Precision.HIGHEST))   # (tile_nc, 3)
        if r < k - 1:
            d2 = jnp.where(c_hot, jnp.inf, d2)

    # ---- narrow merge: sorted pool (k) with sorted chunk candidates (k) -----
    # Everything here runs at lane width 2k.  The pool occupies lanes [0, k),
    # so the lowest-lane tie-break prefers earlier original points, matching
    # lax.top_k's lowest-index behaviour.
    pool = pool_ref[...]                                          # (tile_nc, 4k)
    all_d = jnp.concatenate([pool[:, 0:k]] + cand_d, axis=1)
    all_x = jnp.concatenate([pool[:, k:2 * k]]
                            + [c[:, 0:1] for c in cand_c], axis=1)
    all_y = jnp.concatenate([pool[:, 2 * k:3 * k]]
                            + [c[:, 1:2] for c in cand_c], axis=1)
    all_z = jnp.concatenate([pool[:, 3 * k:4 * k]]
                            + [c[:, 2:3] for c in cand_c], axis=1)

    merge_iota = lax.broadcasted_iota(jnp.int32, (tile_nc, 2 * k), 1)
    new_d, new_x, new_y, new_z = [], [], [], []
    for r in range(k):
        m = jnp.min(all_d, axis=1, keepdims=True)
        m_eq = all_d == m
        m_arg = jnp.min(jnp.where(m_eq, merge_iota, 2 * k), axis=1, keepdims=True)
        m_hot = merge_iota == m_arg
        new_d.append(m)
        new_x.append(jnp.sum(jnp.where(m_hot, all_x, 0.0), axis=1, keepdims=True))
        new_y.append(jnp.sum(jnp.where(m_hot, all_y, 0.0), axis=1, keepdims=True))
        new_z.append(jnp.sum(jnp.where(m_hot, all_z, 0.0), axis=1, keepdims=True))
        if r < k - 1:
            all_d = jnp.where(m_hot, jnp.inf, all_d)

    pool_ref[...] = jnp.concatenate(new_d + new_x + new_y + new_z, axis=1)

    # TODO(synk): data-dependent early-out (skip the merge when this chunk's
    # minimum cannot beat the current k-th best) needs a vector->scalar
    # reduction feeding pl.when; omitted pending lowering verification.

    # ---- last N_orig chunk: thresholded residuals + fused PointNet ----------
    @pl.when(no_idx == pl.num_programs(1) - 1)
    def _():
        fin = pool_ref[...]
        rx = fin[:, k:2 * k] - xcx                 # residuals (tile_nc, k)
        ry = fin[:, 2 * k:3 * k] - xcy
        rz = fin[:, 3 * k:4 * k] - xcz

        hi = jnp.maximum(jnp.maximum(rx, ry), rz)
        lo = jnp.minimum(jnp.minimum(rx, ry), rz)
        outlier = jnp.logical_or(hi > thres, lo < -thres)
        # clamp outliers to the nearest neighbour's residual (j = 0 is a no-op)
        rx = jnp.where(outlier, rx[:, 0:1], rx)
        ry = jnp.where(outlier, ry[:, 0:1], ry)
        rz = jnp.where(outlier, rz[:, 0:1], rz)

        # neighbour-major stacking along sublanes -> (k*tile_nc, 1) columns so
        # layer 1 is a single broadcast-FMA + ReLU pass (w1/b1 broadcast once)
        rx_s = jnp.concatenate([rx[:, j:j + 1] for j in range(k)], axis=0)
        ry_s = jnp.concatenate([ry[:, j:j + 1] for j in range(k)], axis=0)
        rz_s = jnp.concatenate([rz[:, j:j + 1] for j in range(k)], axis=0)

        w1 = w1_ref[...]
        h1 = jnp.maximum(rx_s * w1[0:1, :] + ry_s * w1[1:2, :]
                         + rz_s * w1[2:3, :] + b1_ref[...], 0.0)  # (k*tnc, C1)

        # layer 2: one matmul for all k neighbours (single weight push)
        h2 = jnp.maximum(
            jnp.dot(h1, w2_ref[...], preferred_element_type=jnp.float32,
                    precision=lax.Precision.HIGHEST) + b2_ref[...], 0.0)

        # max-pool over the k neighbours (static, sublane-aligned slices)
        pooled = h2[0:tile_nc, :]
        for j in range(1, k):
            pooled = jnp.maximum(pooled, h2[j * tile_nc:(j + 1) * tile_nc, :])

        # final FC -> lane-dense (tile_nc, CW) store
        out_ref[...] = (jnp.dot(pooled, w3_ref[...],
                                preferred_element_type=jnp.float32,
                                precision=lax.Precision.HIGHEST)
                        + b3_ref[...])


# ----------------------------------------------------------------------------
# Wrapper
# ----------------------------------------------------------------------------
def point_residual_encoder_forward(x_orig, x_coarse, params, k, thres,
                                   tile_nc=256, tile_no=2048):
    """Inference-path forward of PointResidualEncoder.

    x_orig:   (1, N_orig, 3)   full point cloud
    x_coarse: (1, N_coarse, 3) coarse point cloud
    returns:  (N_coarse, CW)   per-coarse-point features
    """
    # TODO(synk): geo_subtraction_batch (training path with ragged per-cloud
    # batches / FAISS IVF approximate search) needs dynamic shapes and is not
    # implemented; the single-cloud exact-L2 inference path is implemented.
    xo = x_orig[0].astype(jnp.float32)      # (No, 3)
    xc = x_coarse[0].astype(jnp.float32)    # (Nc, 3)
    n_orig, n_coarse = xo.shape[0], xc.shape[0]
    if n_orig < k:
        raise ValueError(f"need at least k={k} original points, got {n_orig}")

    w1, b1, w2, b2, w3, b3 = params
    c1, c2, cw = w1.shape[1], w2.shape[1], w3.shape[1]

    nc8 = _round_up(n_coarse, 8)
    tile_nc = max(8, _round_up(min(tile_nc, nc8), 8))
    # v7x has 2 TensorCores: guarantee >= 2 blocks on the "parallel" Nc axis.
    if tile_nc >= nc8 and nc8 >= 16:
        tile_nc = _round_up((nc8 + 1) // 2, 8)
    no128 = _round_up(n_orig, 128)
    tile_no = max(128, _round_up(min(tile_no, no128), 128))

    nc_pad = _round_up(n_coarse, tile_nc)
    no_pad = _round_up(n_orig, tile_no)

    xc_p = jnp.pad(xc, ((0, nc_pad - n_coarse), (0, 0)))
    # pad the original cloud with far-away points so they are never selected
    # (d2 ~ 3e18 is finite in f32 and always loses to a real point)
    xo_p = jnp.pad(xo, ((0, no_pad - n_orig), (0, 0)), constant_values=1e9)
    xo_t = xo_p.T                            # coordinate-major (3, no_pad)

    grid = (nc_pad // tile_nc, no_pad // tile_no)

    feat = pl.pallas_call(
        functools.partial(_encoder_kernel, k=k, thres=float(thres)),
        out_shape=jax.ShapeDtypeStruct((nc_pad, cw), jnp.float32),
        grid_spec=pltpu.PrefetchScalarGridSpec(
            num_scalar_prefetch=0,
            grid=grid,
            in_specs=[
                pl.BlockSpec((tile_nc, 3), lambda i, j: (i, 0)),   # x_coarse
                pl.BlockSpec((tile_no, 3), lambda i, j: (j, 0)),   # x_orig row-major
                pl.BlockSpec((3, tile_no), lambda i, j: (0, j)),   # x_orig^T
                pl.BlockSpec((3, c1), lambda i, j: (0, 0)),        # w1
                pl.BlockSpec((1, c1), lambda i, j: (0, 0)),        # b1
                pl.BlockSpec((c1, c2), lambda i, j: (0, 0)),       # w2
                pl.BlockSpec((1, c2), lambda i, j: (0, 0)),        # b2
                pl.BlockSpec((c2, cw), lambda i, j: (0, 0)),       # w3
                pl.BlockSpec((1, cw), lambda i, j: (0, 0)),        # b3
            ],
            out_specs=pl.BlockSpec((tile_nc, cw), lambda i, j: (i, 0)),
            scratch_shapes=[
                # packed running k-best: [d(k) | x(k) | y(k) | z(k)]
                pltpu.VMEM((tile_nc, 4 * k), jnp.float32),
            ],
        ),
        compiler_params=pltpu.CompilerParams(
            dimension_semantics=("parallel", "arbitrary"),
            vmem_limit_bytes=48 * 1024 * 1024,   # headroom under v7x's 64 MiB
        ),
    )(xc_p, xo_p, xo_t, w1, b1, w2, b2, w3, b3)
    return feat[:n_coarse]


# ----------------------------------------------------------------------------
# Pure-JAX reference (verification only)
# ----------------------------------------------------------------------------
def _reference(x_orig, x_coarse, params, k, thres):
    hp = lax.Precision.HIGHEST
    xo = x_orig[0]
    xc = x_coarse[0]
    d2 = jnp.sum((xc[:, None, :] - xo[None, :, :]) ** 2, axis=-1)   # (Nc, No)
    _, idx = lax.top_k(-d2, k)                                      # (Nc, k)
    res = xo[idx] - xc[:, None, :]                                  # (Nc, k, 3)
    outlier = jnp.logical_or(res.max(-1) > thres, res.min(-1) < -thres)
    res = jnp.where(outlier[..., None], res[:, 0:1, :], res)
    w1, b1, w2, b2, w3, b3 = params
    h = jnp.maximum(jnp.einsum('nkc,cd->nkd', res, w1, precision=hp) + b1, 0.0)
    h = jnp.maximum(jnp.einsum('nkc,cd->nkd', h, w2, precision=hp) + b2, 0.0)
    pooled = h.max(axis=1)
    return jnp.einsum('nc,cd->nd', pooled, w3, precision=hp) + b3


# ----------------------------------------------------------------------------
# Main
# ----------------------------------------------------------------------------
if __name__ == "__main__":
    N_ORIG, N_COARSE, K = 300, 40, 4
    C1, C2, CW = 64, 128, 128          # CW multiple of 128 -> lane-dense store
    THRES = 0.3

    key = jax.random.PRNGKey(0)
    ko, kc, kp = jax.random.split(key, 3)
    x_orig = jax.random.uniform(ko, (1, N_ORIG, 3), dtype=jnp.float32)
    x_coarse = jax.random.uniform(kc, (1, N_COARSE, 3), dtype=jnp.float32)

    # Synthetic PointNet parameters (Conv1d(k=1)/Linear weights stored
    # transposed as (C_in, C_out); biases as (1, C_out)).
    kw1, kb1, kw2, kb2, kw3, kb3 = jax.random.split(kp, 6)

    def _init(kk, shape, fan_in):
        return jax.random.uniform(kk, shape, jnp.float32, -1.0, 1.0) / math.sqrt(fan_in)

    params = (
        _init(kw1, (3, C1), 3),   _init(kb1, (1, C1), 3),
        _init(kw2, (C1, C2), C1), _init(kb2, (1, C2), C1),
        _init(kw3, (C2, CW), C2), _init(kb3, (1, CW), C2),
    )

    # Small tiles so the demo exercises the multi-tile / multi-chunk paths
    # (3 coarse tiles x 3 orig chunks incl. padding); production defaults are
    # 256 x 2048.
    feat = point_residual_encoder_forward(x_orig, x_coarse, params, K, THRES,
                                          tile_nc=16, tile_no=128)
    feat = jax.block_until_ready(feat)

    ref = _reference(x_orig, x_coarse, params, K, THRES)
    assert feat.shape == (N_COARSE, CW)
    assert jnp.allclose(feat, ref, rtol=5e-3, atol=5e-3), (
        "mismatch vs pure-JAX reference")

    print("KERNEL_OK")
</pallas_src>

<mosaic_0001>
module attributes {stable_mosaic.version = 11 : i64} {
  func.func @_encoder_kernel(%arg0: i32, %arg1: i32, %arg2: memref<16x3xf32, #tpu.memory_space<vmem>>, %arg3: memref<128x3xf32, #tpu.memory_space<vmem>>, %arg4: memref<3x128xf32, #tpu.memory_space<vmem>>, %arg5: memref<3x64xf32, #tpu.memory_space<vmem>>, %arg6: memref<1x64xf32, #tpu.memory_space<vmem>>, %arg7: memref<64x128xf32, #tpu.memory_space<vmem>>, %arg8: memref<1x128xf32, #tpu.memory_space<vmem>>, %arg9: memref<128x128xf32, #tpu.memory_space<vmem>>, %arg10: memref<1x128xf32, #tpu.memory_space<vmem>>, %arg11: memref<16x128xf32, #tpu.memory_space<vmem>>, %arg12: memref<16x16xf32, #tpu.memory_space<vmem>>) attributes {dimension_semantics = [#tpu.dimension_semantics<parallel>, #tpu.dimension_semantics<arbitrary>], iteration_bounds = array<i64: 3, 3>, scalar_prefetch = 0 : i64, scratch_operands = 1 : i64, tpu.core_type = #tpu.core_type<tc>, window_params = [{transform_indices = @transform_0, window_bounds = array<i64: 16, 3>}, {transform_indices = @transform_1, window_bounds = array<i64: 128, 3>}, {transform_indices = @transform_2, window_bounds = array<i64: 3, 128>}, {pipeline_mode = #tpu.pipeline_mode<synchronous>, transform_indices = @transform_3, window_bounds = array<i64: 3, 64>}, {pipeline_mode = #tpu.pipeline_mode<synchronous>, transform_indices = @transform_4, window_bounds = array<i64: 1, 64>}, {pipeline_mode = #tpu.pipeline_mode<synchronous>, transform_indices = @transform_5, window_bounds = array<i64: 64, 128>}, {pipeline_mode = #tpu.pipeline_mode<synchronous>, transform_indices = @transform_6, window_bounds = array<i64: 1, 128>}, {pipeline_mode = #tpu.pipeline_mode<synchronous>, transform_indices = @transform_7, window_bounds = array<i64: 128, 128>}, {pipeline_mode = #tpu.pipeline_mode<synchronous>, transform_indices = @transform_8, window_bounds = array<i64: 1, 128>}, {transform_indices = @transform_9, window_bounds = array<i64: 16, 128>}]} {
    %c0_i32 = arith.constant 0 : i32
    %0 = arith.cmpi eq, %arg1, %c0_i32 : i32
    %1 = arith.extui %0 : i1 to i32
    %c0_i32_0 = arith.constant 0 : i32
    %2 = arith.cmpi ne, %1, %c0_i32_0 : i32
    scf.if %2 {
      %cst_68 = arith.constant 0x7F800000 : f32
      %205 = vector.broadcast %cst_68 : f32 to vector<16x4xf32>
      %cst_69 = arith.constant 0.000000e+00 : f32
      %206 = vector.broadcast %cst_69 : f32 to vector<16x12xf32>
      %207 = tpu.concatenate %205, %206 in 1 : vector<16x4xf32>, vector<16x12xf32> -> vector<16x16xf32>
      %c0_70 = arith.constant 0 : index
      %c0_71 = arith.constant 0 : index
      %208 = vector.load %arg12[%c0_70, %c0_71] : memref<16x16xf32, #tpu.memory_space<vmem>>, vector<16x16xf32>
      tpu.vector_store %arg12[%c0_70, %c0_71], %207 {strides = array<i32>} : memref<16x16xf32, #tpu.memory_space<vmem>>, vector<16x16xf32>,
    } else {
    }
    %c0 = arith.constant 0 : index
    %c0_1 = arith.constant 0 : index
    %3 = vector.load %arg2[%c0, %c0_1] : memref<16x3xf32, #tpu.memory_space<vmem>>, vector<16x3xf32>
    %4 = vector.extract_strided_slice %3 {offsets = [0, 0], sizes = [16, 1], strides = [1, 1]} : vector<16x3xf32> to vector<16x1xf32>
    %5 = vector.extract_strided_slice %3 {offsets = [0, 1], sizes = [16, 1], strides = [1, 1]} : vector<16x3xf32> to vector<16x1xf32>
    %6 = vector.extract_strided_slice %3 {offsets = [0, 2], sizes = [16, 1], strides = [1, 1]} : vector<16x3xf32> to vector<16x1xf32>
    %c0_2 = arith.constant 0 : index
    %c0_3 = arith.constant 0 : index
    %7 = vector.load %arg4[%c0_2, %c0_3] : memref<3x128xf32, #tpu.memory_space<vmem>>, vector<1x128xf32>
    %c1 = arith.constant 1 : index
    %c0_4 = arith.constant 0 : index
    %8 = vector.load %arg4[%c1, %c0_4] : memref<3x128xf32, #tpu.memory_space<vmem>>, vector<1x128xf32>
    %c2 = arith.constant 2 : index
    %c0_5 = arith.constant 0 : index
    %9 = vector.load %arg4[%c2, %c0_5] : memref<3x128xf32, #tpu.memory_space<vmem>>, vector<1x128xf32>
    %10 = vector.broadcast %4 : vector<16x1xf32> to vector<16x128xf32>
    %11 = vector.broadcast %7 : vector<1x128xf32> to vector<16x128xf32>
    %12 = arith.subf %10, %11 : vector<16x128xf32>
    %13 = vector.broadcast %5 : vector<16x1xf32> to vector<16x128xf32>
    %14 = vector.broadcast %8 : vector<1x128xf32> to vector<16x128xf32>
    %15 = arith.subf %13, %14 : vector<16x128xf32>
    %16 = vector.broadcast %6 : vector<16x1xf32> to vector<16x128xf32>
    %17 = vector.broadcast %9 : vector<1x128xf32> to vector<16x128xf32>
    %18 = arith.subf %16, %17 : vector<16x128xf32>
    %19 = arith.mulf %12, %12 : vector<16x128xf32>
    %20 = arith.mulf %15, %15 : vector<16x128xf32>
    %21 = arith.addf %19, %20 : vector<16x128xf32>
    %22 = arith.mulf %18, %18 : vector<16x128xf32>
    %23 = arith.addf %21, %22 : vector<16x128xf32>
    %24 = tpu.iota {dimensions = array<i32: 1>} : vector<16x128xi32>
    %c0_6 = arith.constant 0 : index
    %c0_7 = arith.constant 0 : index
    %25 = vector.load %arg3[%c0_6, %c0_7] : memref<128x3xf32, #tpu.memory_space<vmem>>, vector<128x3xf32>
    %cst = arith.constant dense<0x7F800000> : vector<16xf32>
    %26 = vector.multi_reduction <minimumf>, %23, %cst [1] : vector<16x128xf32> to vector<16xf32>
    %27 = vector.shape_cast %26 : vector<16xf32> to vector<16x1xf32>
    %28 = vector.broadcast %27 : vector<16x1xf32> to vector<16x128xf32>
    %29 = arith.cmpf oeq, %23, %28 : vector<16x128xf32>
    %c128_i32 = arith.constant 128 : i32
    %30 = vector.broadcast %c128_i32 : i32 to vector<16x128xi32>
    %31 = arith.select %29, %24, %30 : vector<16x128xi1>, vector<16x128xi32>
    %cst_8 = arith.constant dense<2147483647> : vector<16xi32>
    %32 = vector.multi_reduction <minsi>, %31, %cst_8 [1] : vector<16x128xi32> to vector<16xi32>
    %33 = vector.shape_cast %32 : vector<16xi32> to vector<16x1xi32>
    %34 = vector.broadcast %33 : vector<16x1xi32> to vector<16x128xi32>
    %35 = arith.cmpi eq, %24, %34 : vector<16x128xi32>
    %36 = arith.extui %35 : vector<16x128xi1> to vector<16x128xi32>
    %37 = arith.sitofp %36 : vector<16x128xi32> to vector<16x128xf32>
    %cst_9 = arith.constant dense<0.000000e+00> : vector<16x3xf32>
    %38 = tpu.matmul %37, %25, %cst_9 {dimension_numbers = #tpu.dot_dimension_numbers<[1], [0], [0], [1], [0, 0, 1, 1], [], []>, precision = #tpu.contract_precision<fp32>} : vector<16x128xf32>, vector<128x3xf32>, vector<16x3xf32> -> vector<16x3xf32>
    %cst_10 = arith.constant 0x7F800000 : f32
    %39 = vector.broadcast %cst_10 : f32 to vector<16x128xf32>
    %40 = arith.select %35, %39, %23 : vector<16x128xi1>, vector<16x128xf32>
    %cst_11 = arith.constant dense<0x7F800000> : vector<16xf32>
    %41 = vector.multi_reduction <minimumf>, %40, %cst_11 [1] : vector<16x128xf32> to vector<16xf32>
    %42 = vector.shape_cast %41 : vector<16xf32> to vector<16x1xf32>
    %43 = vector.broadcast %42 : vector<16x1xf32> to vector<16x128xf32>
    %44 = arith.cmpf oeq, %40, %43 : vector<16x128xf32>
    %c128_i32_12 = arith.constant 128 : i32
    %45 = vector.broadcast %c128_i32_12 : i32 to vector<16x128xi32>
    %46 = arith.select %44, %24, %45 : vector<16x128xi1>, vector<16x128xi32>
    %cst_13 = arith.constant dense<2147483647> : vector<16xi32>
    %47 = vector.multi_reduction <minsi>, %46, %cst_13 [1] : vector<16x128xi32> to vector<16xi32>
    %48 = vector.shape_cast %47 : vector<16xi32> to vector<16x1xi32>
    %49 = vector.broadcast %48 : vector<16x1xi32> to vector<16x128xi32>
    %50 = arith.cmpi eq, %24, %49 : vector<16x128xi32>
    %51 = arith.extui %50 : vector<16x128xi1> to vector<16x128xi32>
    %52 = arith.sitofp %51 : vector<16x128xi32> to vector<16x128xf32>
    %cst_14 = arith.constant dense<0.000000e+00> : vector<16x3xf32>
    %53 = tpu.matmul %52, %25, %cst_14 {dimension_numbers = #tpu.dot_dimension_numbers<[1], [0], [0], [1], [0, 0, 1, 1], [], []>, precision = #tpu.contract_precision<fp32>} : vector<16x128xf32>, vector<128x3xf32>, vector<16x3xf32> -> vector<16x3xf32>
    %cst_15 = arith.constant 0x7F800000 : f32
    %54 = vector.broadcast %cst_15 : f32 to vector<16x128xf32>
    %55 = arith.select %50, %54, %40 : vector<16x128xi1>, vector<16x128xf32>
    %cst_16 = arith.constant dense<0x7F800000> : vector<16xf32>
    %56 = vector.multi_reduction <minimumf>, %55, %cst_16 [1] : vector<16x128xf32> to vector<16xf32>
    %57 = vector.shape_cast %56 : vector<16xf32> to vector<16x1xf32>
    %58 = vector.broadcast %57 : vector<16x1xf32> to vector<16x128xf32>
    %59 = arith.cmpf oeq, %55, %58 : vector<16x128xf32>
    %c128_i32_17 = arith.constant 128 : i32
    %60 = vector.broadcast %c128_i32_17 : i32 to vector<16x128xi32>
    %61 = arith.select %59, %24, %60 : vector<16x128xi1>, vector<16x128xi32>
    %cst_18 = arith.constant dense<2147483647> : vector<16xi32>
    %62 = vector.multi_reduction <minsi>, %61, %cst_18 [1] : vector<16x128xi32> to vector<16xi32>
    %63 = vector.shape_cast %62 : vector<16xi32> to vector<16x1xi32>
    %64 = vector.broadcast %63 : vector<16x1xi32> to vector<16x128xi32>
    %65 = arith.cmpi eq, %24, %64 : vector<16x128xi32>
    %66 = arith.extui %65 : vector<16x128xi1> to vector<16x128xi32>
    %67 = arith.sitofp %66 : vector<16x128xi32> to vector<16x128xf32>
    %cst_19 = arith.constant dense<0.000000e+00> : vector<16x3xf32>
    %68 = tpu.matmul %67, %25, %cst_19 {dimension_numbers = #tpu.dot_dimension_numbers<[1], [0], [0], [1], [0, 0, 1, 1], [], []>, precision = #tpu.contract_precision<fp32>} : vector<16x128xf32>, vector<128x3xf32>, vector<16x3xf32> -> vector<16x3xf32>
    %cst_20 = arith.constant 0x7F800000 : f32
    %69 = vector.broadcast %cst_20 : f32 to vector<16x128xf32>
    %70 = arith.select %65, %69, %55 : vector<16x128xi1>, vector<16x128xf32>
    %cst_21 = arith.constant dense<0x7F800000> : vector<16xf32>
    %71 = vector.multi_reduction <minimumf>, %70, %cst_21 [1] : vector<16x128xf32> to vector<16xf32>
    %72 = vector.shape_cast %71 : vector<16xf32> to vector<16x1xf32>
    %73 = vector.broadcast %72 : vector<16x1xf32> to vector<16x128xf32>
    %74 = arith.cmpf oeq, %70, %73 : vector<16x128xf32>
    %c128_i32_22 = arith.constant 128 : i32
    %75 = vector.broadcast %c128_i32_22 : i32 to vector<16x128xi32>
    %76 = arith.select %74, %24, %75 : vector<16x128xi1>, vector<16x128xi32>
    %cst_23 = arith.constant dense<2147483647> : vector<16xi32>
    %77 = vector.multi_reduction <minsi>, %76, %cst_23 [1] : vector<16x128xi32> to vector<16xi32>
    %78 = vector.shape_cast %77 : vector<16xi32> to vector<16x1xi32>
    %79 = vector.broadcast %78 : vector<16x1xi32> to vector<16x128xi32>
    %80 = arith.cmpi eq, %24, %79 : vector<16x128xi32>
    %81 = arith.extui %80 : vector<16x128xi1> to vector<16x128xi32>
    %82 = arith.sitofp %81 : vector<16x128xi32> to vector<16x128xf32>
    %cst_24 = arith.constant dense<0.000000e+00> : vector<16x3xf32>
    %83 = tpu.matmul %82, %25, %cst_24 {dimension_numbers = #tpu.dot_dimension_numbers<[1], [0], [0], [1], [0, 0, 1, 1], [], []>, precision = #tpu.contract_precision<fp32>} : vector<16x128xf32>, vector<128x3xf32>, vector<16x3xf32> -> vector<16x3xf32>
    %c0_25 = arith.constant 0 : index
    %c0_26 = arith.constant 0 : index
    %84 = vector.load %arg12[%c0_25, %c0_26] : memref<16x16xf32, #tpu.memory_space<vmem>>, vector<16x16xf32>
    %85 = vector.extract_strided_slice %84 {offsets = [0, 0], sizes = [16, 4], strides = [1, 1]} : vector<16x16xf32> to vector<16x4xf32>
    %86 = tpu.concatenate %85, %27, %42, %57, %72 in 1 : vector<16x4xf32>, vector<16x1xf32>, vector<16x1xf32>, vector<16x1xf32>, vector<16x1xf32> -> vector<16x8xf32>
    %87 = vector.extract_strided_slice %84 {offsets = [0, 4], sizes = [16, 4], strides = [1, 1]} : vector<16x16xf32> to vector<16x4xf32>
    %88 = vector.extract_strided_slice %38 {offsets = [0, 0], sizes = [16, 1], strides = [1, 1]} : vector<16x3xf32> to vector<16x1xf32>
    %89 = vector.extract_strided_slice %53 {offsets = [0, 0], sizes = [16, 1], strides = [1, 1]} : vector<16x3xf32> to vector<16x1xf32>
    %90 = vector.extract_strided_slice %68 {offsets = [0, 0], sizes = [16, 1], strides = [1, 1]} : vector<16x3xf32> to vector<16x1xf32>
    %91 = vector.extract_strided_slice %83 {offsets = [0, 0], sizes = [16, 1], strides = [1, 1]} : vector<16x3xf32> to vector<16x1xf32>
    %92 = tpu.concatenate %87, %88, %89, %90, %91 in 1 : vector<16x4xf32>, vector<16x1xf32>, vector<16x1xf32>, vector<16x1xf32>, vector<16x1xf32> -> vector<16x8xf32>
    %93 = vector.extract_strided_slice %84 {offsets = [0, 8], sizes = [16, 4], strides = [1, 1]} : vector<16x16xf32> to vector<16x4xf32>
    %94 = vector.extract_strided_slice %38 {offsets = [0, 1], sizes = [16, 1], strides = [1, 1]} : vector<16x3xf32> to vector<16x1xf32>
    %95 = vector.extract_strided_slice %53 {offsets = [0, 1], sizes = [16, 1], strides = [1, 1]} : vector<16x3xf32> to vector<16x1xf32>
    %96 = vector.extract_strided_slice %68 {offsets = [0, 1], sizes = [16, 1], strides = [1, 1]} : vector<16x3xf32> to vector<16x1xf32>
    %97 = vector.extract_strided_slice %83 {offsets = [0, 1], sizes = [16, 1], strides = [1, 1]} : vector<16x3xf32> to vector<16x1xf32>
    %98 = tpu.concatenate %93, %94, %95, %96, %97 in 1 : vector<16x4xf32>, vector<16x1xf32>, vector<16x1xf32>, vector<16x1xf32>, vector<16x1xf32> -> vector<16x8xf32>
    %99 = vector.extract_strided_slice %84 {offsets = [0, 12], sizes = [16, 4], strides = [1, 1]} : vector<16x16xf32> to vector<16x4xf32>
    %100 = vector.extract_strided_slice %38 {offsets = [0, 2], sizes = [16, 1], strides = [1, 1]} : vector<16x3xf32> to vector<16x1xf32>
    %101 = vector.extract_strided_slice %53 {offsets = [0, 2], sizes = [16, 1], strides = [1, 1]} : vector<16x3xf32> to vector<16x1xf32>
    %102 = vector.extract_strided_slice %68 {offsets = [0, 2], sizes = [16, 1], strides = [1, 1]} : vector<16x3xf32> to vector<16x1xf32>
    %103 = vector.extract_strided_slice %83 {offsets = [0, 2], sizes = [16, 1], strides = [1, 1]} : vector<16x3xf32> to vector<16x1xf32>
    %104 = tpu.concatenate %99, %100, %101, %102, %103 in 1 : vector<16x4xf32>, vector<16x1xf32>, vector<16x1xf32>, vector<16x1xf32>, vector<16x1xf32> -> vector<16x8xf32>
    %105 = tpu.iota {dimensions = array<i32: 1>} : vector<16x8xi32>
    %cst_27 = arith.constant dense<0x7F800000> : vector<16xf32>
    %106 = vector.multi_reduction <minimumf>, %86, %cst_27 [1] : vector<16x8xf32> to vector<16xf32>
    %107 = vector.shape_cast %106 : vector<16xf32> to vector<16x1xf32>
    %108 = vector.broadcast %107 : vector<16x1xf32> to vector<16x8xf32>
    %109 = arith.cmpf oeq, %86, %108 : vector<16x8xf32>
    %c8_i32 = arith.constant 8 : i32
    %110 = vector.broadcast %c8_i32 : i32 to vector<16x8xi32>
    %111 = arith.select %109, %105, %110 : vector<16x8xi1>, vector<16x8xi32>
    %cst_28 = arith.constant dense<2147483647> : vector<16xi32>
    %112 = vector.multi_reduction <minsi>, %111, %cst_28 [1] : vector<16x8xi32> to vector<16xi32>
    %113 = vector.shape_cast %112 : vector<16xi32> to vector<16x1xi32>
    %114 = vector.broadcast %113 : vector<16x1xi32> to vector<16x8xi32>
    %115 = arith.cmpi eq, %105, %114 : vector<16x8xi32>
    %cst_29 = arith.constant 0.000000e+00 : f32
    %116 = vector.broadcast %cst_29 : f32 to vector<16x8xf32>
    %117 = arith.select %115, %92, %116 : vector<16x8xi1>, vector<16x8xf32>
    %cst_30 = arith.constant dense<0.000000e+00> : vector<16xf32>
    %118 = vector.multi_reduction <add>, %117, %cst_30 [1] : vector<16x8xf32> to vector<16xf32>
    %119 = vector.shape_cast %118 : vector<16xf32> to vector<16x1xf32>
    %cst_31 = arith.constant 0.000000e+00 : f32
    %120 = vector.broadcast %cst_31 : f32 to vector<16x8xf32>
    %121 = arith.select %115, %98, %120 : vector<16x8xi1>, vector<16x8xf32>
    %cst_32 = arith.constant dense<0.000000e+00> : vector<16xf32>
    %122 = vector.multi_reduction <add>, %121, %cst_32 [1] : vector<16x8xf32> to vector<16xf32>
    %123 = vector.shape_cast %122 : vector<16xf32> to vector<16x1xf32>
    %cst_33 = arith.constant 0.000000e+00 : f32
    %124 = vector.broadcast %cst_33 : f32 to vector<16x8xf32>
    %125 = arith.select %115, %104, %124 : vector<16x8xi1>, vector<16x8xf32>
    %cst_34 = arith.constant dense<0.000000e+00> : vector<16xf32>
    %126 = vector.multi_reduction <add>, %125, %cst_34 [1] : vector<16x8xf32> to vector<16xf32>
    %127 = vector.shape_cast %126 : vector<16xf32> to vector<16x1xf32>
    %cst_35 = arith.constant 0x7F800000 : f32
    %128 = vector.broadcast %cst_35 : f32 to vector<16x8xf32>
    %129 = arith.select %115, %128, %86 : vector<16x8xi1>, vector<16x8xf32>
    %cst_36 = arith.constant dense<0x7F800000> : vector<16xf32>
    %130 = vector.multi_reduction <minimumf>, %129, %cst_36 [1] : vector<16x8xf32> to vector<16xf32>
    %131 = vector.shape_cast %130 : vector<16xf32> to vector<16x1xf32>
    %132 = vector.broadcast %131 : vector<16x1xf32> to vector<16x8xf32>
    %133 = arith.cmpf oeq, %129, %132 : vector<16x8xf32>
    %c8_i32_37 = arith.constant 8 : i32
    %134 = vector.broadcast %c8_i32_37 : i32 to vector<16x8xi32>
    %135 = arith.select %133, %105, %134 : vector<16x8xi1>, vector<16x8xi32>
    %cst_38 = arith.constant dense<2147483647> : vector<16xi32>
    %136 = vector.multi_reduction <minsi>, %135, %cst_38 [1] : vector<16x8xi32> to vector<16xi32>
    %137 = vector.shape_cast %136 : vector<16xi32> to vector<16x1xi32>
    %138 = vector.broadcast %137 : vector<16x1xi32> to vector<16x8xi32>
    %139 = arith.cmpi eq, %105, %138 : vector<16x8xi32>
    %cst_39 = arith.constant 0.000000e+00 : f32
    %140 = vector.broadcast %cst_39 : f32 to vector<16x8xf32>
    %141 = arith.select %139, %92, %140 : vector<16x8xi1>, vector<16x8xf32>
    %cst_40 = arith.constant dense<0.000000e+00> : vector<16xf32>
    %142 = vector.multi_reduction <add>, %141, %cst_40 [1] : vector<16x8xf32> to vector<16xf32>
    %143 = vector.shape_cast %142 : vector<16xf32> to vector<16x1xf32>
    %cst_41 = arith.constant 0.000000e+00 : f32
    %144 = vector.broadcast %cst_41 : f32 to vector<16x8xf32>
    %145 = arith.select %139, %98, %144 : vector<16x8xi1>, vector<16x8xf32>
    %cst_42 = arith.constant dense<0.000000e+00> : vector<16xf32>
    %146 = vector.multi_reduction <add>, %145, %cst_42 [1] : vector<16x8xf32> to vector<16xf32>
    %147 = vector.shape_cast %146 : vector<16xf32> to vector<16x1xf32>
    %cst_43 = arith.constant 0.000000e+00 : f32
    %148 = vector.broadcast %cst_43 : f32 to vector<16x8xf32>
    %149 = arith.select %139, %104, %148 : vector<16x8xi1>, vector<16x8xf32>
    %cst_44 = arith.constant dense<0.000000e+00> : vector<16xf32>
    %150 = vector.multi_reduction <add>, %149, %cst_44 [1] : vector<16x8xf32> to vector<16xf32>
    %151 = vector.shape_cast %150 : vector<16xf32> to vector<16x1xf32>
    %cst_45 = arith.constant 0x7F800000 : f32
    %152 = vector.broadcast %cst_45 : f32 to vector<16x8xf32>
    %153 = arith.select %139, %152, %129 : vector<16x8xi1>, vector<16x8xf32>
    %cst_46 = arith.constant dense<0x7F800000> : vector<16xf32>
    %154 = vector.multi_reduction <minimumf>, %153, %cst_46 [1] : vector<16x8xf32> to vector<16xf32>
    %155 = vector.shape_cast %154 : vector<16xf32> to vector<16x1xf32>
    %156 = vector.broadcast %155 : vector<16x1xf32> to vector<16x8xf32>
    %157 = arith.cmpf oeq, %153, %156 : vector<16x8xf32>
    %c8_i32_47 = arith.constant 8 : i32
    %158 = vector.broadcast %c8_i32_47 : i32 to vector<16x8xi32>
    %159 = arith.select %157, %105, %158 : vector<16x8xi1>, vector<16x8xi32>
    %cst_48 = arith.constant dense<2147483647> : vector<16xi32>
    %160 = vector.multi_reduction <minsi>, %159, %cst_48 [1] : vector<16x8xi32> to vector<16xi32>
    %161 = vector.shape_cast %160 : vector<16xi32> to vector<16x1xi32>
    %162 = vector.broadcast %161 : vector<16x1xi32> to vector<16x8xi32>
    %163 = arith.cmpi eq, %105, %162 : vector<16x8xi32>
    %cst_49 = arith.constant 0.000000e+00 : f32
    %164 = vector.broadcast %cst_49 : f32 to vector<16x8xf32>
    %165 = arith.select %163, %92, %164 : vector<16x8xi1>, vector<16x8xf32>
    %cst_50 = arith.constant dense<0.000000e+00> : vector<16xf32>
    %166 = vector.multi_reduction <add>, %165, %cst_50 [1] : vector<16x8xf32> to vector<16xf32>
    %167 = vector.shape_cast %166 : vector<16xf32> to vector<16x1xf32>
    %cst_51 = arith.constant 0.000000e+00 : f32
    %168 = vector.broadcast %cst_51 : f32 to vector<16x8xf32>
    %169 = arith.select %163, %98, %168 : vector<16x8xi1>, vector<16x8xf32>
    %cst_52 = arith.constant dense<0.000000e+00> : vector<16xf32>
    %170 = vector.multi_reduction <add>, %169, %cst_52 [1] : vector<16x8xf32> to vector<16xf32>
    %171 = vector.shape_cast %170 : vector<16xf32> to vector<16x1xf32>
    %cst_53 = arith.constant 0.000000e+00 : f32
    %172 = vector.broadcast %cst_53 : f32 to vector<16x8xf32>
    %173 = arith.select %163, %104, %172 : vector<16x8xi1>, vector<16x8xf32>
    %cst_54 = arith.constant dense<0.000000e+00> : vector<16xf32>
    %174 = vector.multi_reduction <add>, %173, %cst_54 [1] : vector<16x8xf32> to vector<16xf32>
    %175 = vector.shape_cast %174 : vector<16xf32> to vector<16x1xf32>
    %cst_55 = arith.constant 0x7F800000 : f32
    %176 = vector.broadcast %cst_55 : f32 to vector<16x8xf32>
    %177 = arith.select %163, %176, %153 : vector<16x8xi1>, vector<16x8xf32>
    %cst_56 = arith.constant dense<0x7F800000> : vector<16xf32>
    %178 = vector.multi_reduction <minimumf>, %177, %cst_56 [1] : vector<16x8xf32> to vector<16xf32>
    %179 = vector.shape_cast %178 : vector<16xf32> to vector<16x1xf32>
    %180 = vector.broadcast %179 : vector<16x1xf32> to vector<16x8xf32>
    %181 = arith.cmpf oeq, %177, %180 : vector<16x8xf32>
    %c8_i32_57 = arith.constant 8 : i32
    %182 = vector.broadcast %c8_i32_57 : i32 to vector<16x8xi32>
    %183 = arith.select %181, %105, %182 : vector<16x8xi1>, vector<16x8xi32>
    %cst_58 = arith.constant dense<2147483647> : vector<16xi32>
    %184 = vector.multi_reduction <minsi>, %183, %cst_58 [1] : vector<16x8xi32> to vector<16xi32>
    %185 = vector.shape_cast %184 : vector<16xi32> to vector<16x1xi32>
    %186 = vector.broadcast %185 : vector<16x1xi32> to vector<16x8xi32>
    %187 = arith.cmpi eq, %105, %186 : vector<16x8xi32>
    %cst_59 = arith.constant 0.000000e+00 : f32
    %188 = vector.broadcast %cst_59 : f32 to vector<16x8xf32>
    %189 = arith.select %187, %92, %188 : vector<16x8xi1>, vector<16x8xf32>
    %cst_60 = arith.constant dense<0.000000e+00> : vector<16xf32>
    %190 = vector.multi_reduction <add>, %189, %cst_60 [1] : vector<16x8xf32> to vector<16xf32>
    %191 = vector.shape_cast %190 : vector<16xf32> to vector<16x1xf32>
    %cst_61 = arith.constant 0.000000e+00 : f32
    %192 = vector.broadcast %cst_61 : f32 to vector<16x8xf32>
    %193 = arith.select %187, %98, %192 : vector<16x8xi1>, vector<16x8xf32>
    %cst_62 = arith.constant dense<0.000000e+00> : vector<16xf32>
    %194 = vector.multi_reduction <add>, %193, %cst_62 [1] : vector<16x8xf32> to vector<16xf32>
    %195 = vector.shape_cast %194 : vector<16xf32> to vector<16x1xf32>
    %cst_63 = arith.constant 0.000000e+00 : f32
    %196 = vector.broadcast %cst_63 : f32 to vector<16x8xf32>
    %197 = arith.select %187, %104, %196 : vector<16x8xi1>, vector<16x8xf32>
    %cst_64 = arith.constant dense<0.000000e+00> : vector<16xf32>
    %198 = vector.multi_reduction <add>, %197, %cst_64 [1] : vector<16x8xf32> to vector<16xf32>
    %199 = vector.shape_cast %198 : vector<16xf32> to vector<16x1xf32>
    %200 = tpu.concatenate %107, %131, %155, %179, %119, %143, %167, %191, %123, %147, %171, %195, %127, %151, %175, %199 in 1 : vector<16x1xf32>, vector<16x1xf32>, vector<16x1xf32>, vector<16x1xf32>, vector<16x1xf32>, vector<16x1xf32>, vector<16x1xf32>, vector<16x1xf32>, vector<16x1xf32>, vector<16x1xf32>, vector<16x1xf32>, vector<16x1xf32>, vector<16x1xf32>, vector<16x1xf32>, vector<16x1xf32>, vector<16x1xf32> -> vector<16x16xf32>
    %c0_65 = arith.constant 0 : index
    %c0_66 = arith.constant 0 : index
    %201 = vector.load %arg12[%c0_65, %c0_66] : memref<16x16xf32, #tpu.memory_space<vmem>>, vector<16x16xf32>
    tpu.vector_store %arg12[%c0_65, %c0_66], %200 {strides = array<i32>} : memref<16x16xf32, #tpu.memory_space<vmem>>, vector<16x16xf32>,
    %c2_i32 = arith.constant 2 : i32
    %202 = arith.cmpi eq, %arg1, %c2_i32 : i32
    %203 = arith.extui %202 : i1 to i32
    %c0_i32_67 = arith.constant 0 : i32
    %204 = arith.cmpi ne, %203, %c0_i32_67 : i32
    scf.if %204 {
      %c0_68 = arith.constant 0 : index
      %c0_69 = arith.constant 0 : index
      %205 = vector.load %arg12[%c0_68, %c0_69] : memref<16x16xf32, #tpu.memory_space<vmem>>, vector<16x16xf32>
      %206 = vector.extract_strided_slice %205 {offsets = [0, 4], sizes = [16, 4], strides = [1, 1]} : vector<16x16xf32> to vector<16x4xf32>
      %207 = vector.broadcast %4 : vector<16x1xf32> to vector<16x4xf32>
      %208 = arith.subf %206, %207 : vector<16x4xf32>
      %209 = vector.extract_strided_slice %205 {offsets = [0, 8], sizes = [16, 4], strides = [1, 1]} : vector<16x16xf32> to vector<16x4xf32>
      %210 = vector.broadcast %5 : vector<16x1xf32> to vector<16x4xf32>
      %211 = arith.subf %209, %210 : vector<16x4xf32>
      %212 = vector.extract_strided_slice %205 {offsets = [0, 12], sizes = [16, 4], strides = [1, 1]} : vector<16x16xf32> to vector<16x4xf32>
      %213 = vector.broadcast %6 : vector<16x1xf32> to vector<16x4xf32>
      %214 = arith.subf %212, %213 : vector<16x4xf32>
      %215 = arith.maximumf %208, %211 : vector<16x4xf32>
      %216 = arith.maximumf %215, %214 : vector<16x4xf32>
      %217 = arith.minimumf %208, %211 : vector<16x4xf32>
      %218 = arith.minimumf %217, %214 : vector<16x4xf32>
      %cst_70 = arith.constant 3.000000e-01 : f32
      %219 = vector.broadcast %cst_70 : f32 to vector<16x4xf32>
      %220 = arith.cmpf ogt, %216, %219 : vector<16x4xf32>
      %cst_71 = arith.constant -3.000000e-01 : f32
      %221 = vector.broadcast %cst_71 : f32 to vector<16x4xf32>
      %222 = arith.cmpf olt, %218, %221 : vector<16x4xf32>
      %223 = arith.ori %220, %222 : vector<16x4xi1>
      %224 = vector.extract_strided_slice %208 {offsets = [0, 0], sizes = [16, 1], strides = [1, 1]} : vector<16x4xf32> to vector<16x1xf32>
      %225 = vector.shape_cast %224 : vector<16x1xf32> to vector<16x1xf32>
      %226 = vector.broadcast %225 : vector<16x1xf32> to vector<16x4xf32>
      %227 = arith.select %223, %226, %208 : vector<16x4xi1>, vector<16x4xf32>
      %228 = vector.extract_strided_slice %211 {offsets = [0, 0], sizes = [16, 1], strides = [1, 1]} : vector<16x4xf32> to vector<16x1xf32>
      %229 = vector.shape_cast %228 : vector<16x1xf32> to vector<16x1xf32>
      %230 = vector.broadcast %229 : vector<16x1xf32> to vector<16x4xf32>
      %231 = arith.select %223, %230, %211 : vector<16x4xi1>, vector<16x4xf32>
      %232 = vector.extract_strided_slice %214 {offsets = [0, 0], sizes = [16, 1], strides = [1, 1]} : vector<16x4xf32> to vector<16x1xf32>
      %233 = vector.shape_cast %232 : vector<16x1xf32> to vector<16x1xf32>
      %234 = vector.broadcast %233 : vector<16x1xf32> to vector<16x4xf32>
      %235 = arith.select %223, %234, %214 : vector<16x4xi1>, vector<16x4xf32>
      %236 = vector.extract_strided_slice %227 {offsets = [0, 0], sizes = [16, 1], strides = [1, 1]} : vector<16x4xf32> to vector<16x1xf32>
      %237 = vector.extract_strided_slice %227 {offsets = [0, 1], sizes = [16, 1], strides = [1, 1]} : vector<16x4xf32> to vector<16x1xf32>
      %238 = vector.extract_strided_slice %227 {offsets = [0, 2], sizes = [16, 1], strides = [1, 1]} : vector<16x4xf32> to vector<16x1xf32>
      %239 = vector.extract_strided_slice %227 {offsets = [0, 3], sizes = [16, 1], strides = [1, 1]} : vector<16x4xf32> to vector<16x1xf32>
      %240 = tpu.concatenate %236, %237, %238, %239 in 0 : vector<16x1xf32>, vector<16x1xf32>, vector<16x1xf32>, vector<16x1xf32> -> vector<64x1xf32>
      %241 = vector.extract_strided_slice %231 {offsets = [0, 0], sizes = [16, 1], strides = [1, 1]} : vector<16x4xf32> to vector<16x1xf32>
      %242 = vector.extract_strided_slice %231 {offsets = [0, 1], sizes = [16, 1], strides = [1, 1]} : vector<16x4xf32> to vector<16x1xf32>
      %243 = vector.extract_strided_slice %231 {offsets = [0, 2], sizes = [16, 1], strides = [1, 1]} : vector<16x4xf32> to vector<16x1xf32>
      %244 = vector.extract_strided_slice %231 {offsets = [0, 3], sizes = [16, 1], strides = [1, 1]} : vector<16x4xf32> to vector<16x1xf32>
      %245 = tpu.concatenate %241, %242, %243, %244 in 0 : vector<16x1xf32>, vector<16x1xf32>, vector<16x1xf32>, vector<16x1xf32> -> vector<64x1xf32>
      %246 = vector.extract_strided_slice %235 {offsets = [0, 0], sizes = [16, 1], strides = [1, 1]} : vector<16x4xf32> to vector<16x1xf32>
      %247 = vector.extract_strided_slice %235 {offsets = [0, 1], sizes = [16, 1], strides = [1, 1]} : vector<16x4xf32> to vector<16x1xf32>
      %248 = vector.extract_strided_slice %235 {offsets = [0, 2], sizes = [16, 1], strides = [1, 1]} : vector<16x4xf32> to vector<16x1xf32>
      %249 = vector.extract_strided_slice %235 {offsets = [0, 3], sizes = [16, 1], strides = [1, 1]} : vector<16x4xf32> to vector<16x1xf32>
      %250 = tpu.concatenate %246, %247, %248, %249 in 0 : vector<16x1xf32>, vector<16x1xf32>, vector<16x1xf32>, vector<16x1xf32> -> vector<64x1xf32>
      %c0_72 = arith.constant 0 : index
      %c0_73 = arith.constant 0 : index
      %251 = vector.load %arg5[%c0_72, %c0_73] : memref<3x64xf32, #tpu.memory_space<vmem>>, vector<3x64xf32>
      %252 = vector.extract_strided_slice %251 {offsets = [0, 0], sizes = [1, 64], strides = [1, 1]} : vector<3x64xf32> to vector<1x64xf32>
      %253 = vector.broadcast %240 : vector<64x1xf32> to vector<64x64xf32>
      %254 = vector.broadcast %252 : vector<1x64xf32> to vector<64x64xf32>
      %255 = arith.mulf %253, %254 : vector<64x64xf32>
      %256 = vector.extract_strided_slice %251 {offsets = [1, 0], sizes = [1, 64], strides = [1, 1]} : vector<3x64xf32> to vector<1x64xf32>
      %257 = vector.broadcast %245 : vector<64x1xf32> to vector<64x64xf32>
      %258 = vector.broadcast %256 : vector<1x64xf32> to vector<64x64xf32>
      %259 = arith.mulf %257, %258 : vector<64x64xf32>
      %260 = arith.addf %255, %259 : vector<64x64xf32>
      %261 = vector.extract_strided_slice %251 {offsets = [2, 0], sizes = [1, 64], strides = [1, 1]} : vector<3x64xf32> to vector<1x64xf32>
      %262 = vector.broadcast %250 : vector<64x1xf32> to vector<64x64xf32>
      %263 = vector.broadcast %261 : vector<1x64xf32> to vector<64x64xf32>
      %264 = arith.mulf %262, %263 : vector<64x64xf32>
      %265 = arith.addf %260, %264 : vector<64x64xf32>
      %c0_74 = arith.constant 0 : index
      %c0_75 = arith.constant 0 : index
      %266 = vector.load %arg6[%c0_74, %c0_75] : memref<1x64xf32, #tpu.memory_space<vmem>>, vector<1x64xf32>
      %267 = vector.broadcast %266 : vector<1x64xf32> to vector<64x64xf32>
      %268 = arith.addf %265, %267 : vector<64x64xf32>
      %cst_76 = arith.constant 0.000000e+00 : f32
      %269 = vector.broadcast %cst_76 : f32 to vector<64x64xf32>
      %270 = arith.maximumf %268, %269 : vector<64x64xf32>
      %c0_77 = arith.constant 0 : index
      %c0_78 = arith.constant 0 : index
      %271 = vector.load %arg7[%c0_77, %c0_78] : memref<64x128xf32, #tpu.memory_space<vmem>>, vector<64x128xf32>
      %cst_79 = arith.constant dense<0.000000e+00> : vector<64x128xf32>
      %272 = tpu.matmul %270, %271, %cst_79 {dimension_numbers = #tpu.dot_dimension_numbers<[1], [0], [0], [1], [0, 0, 1, 1], [], []>, precision = #tpu.contract_precision<fp32>} : vector<64x64xf32>, vector<64x128xf32>, vector<64x128xf32> -> vector<64x128xf32>
      %c0_80 = arith.constant 0 : index
      %c0_81 = arith.constant 0 : index
      %273 = vector.load %arg8[%c0_80, %c0_81] : memref<1x128xf32, #tpu.memory_space<vmem>>, vector<1x128xf32>
      %274 = vector.broadcast %273 : vector<1x128xf32> to vector<64x128xf32>
      %275 = arith.addf %272, %274 : vector<64x128xf32>
      %cst_82 = arith.constant 0.000000e+00 : f32
      %276 = vector.broadcast %cst_82 : f32 to vector<64x128xf32>
      %277 = arith.maximumf %275, %276 : vector<64x128xf32>
      %278 = vector.extract_strided_slice %277 {offsets = [0, 0], sizes = [16, 128], strides = [1, 1]} : vector<64x128xf32> to vector<16x128xf32>
      %279 = vector.extract_strided_slice %277 {offsets = [16, 0], sizes = [16, 128], strides = [1, 1]} : vector<64x128xf32> to vector<16x128xf32>
      %280 = arith.maximumf %278, %279 : vector<16x128xf32>
      %281 = vector.extract_strided_slice %277 {offsets = [32, 0], sizes = [16, 128], strides = [1, 1]} : vector<64x128xf32> to vector<16x128xf32>
      %282 = arith.maximumf %280, %281 : vector<16x128xf32>
      %283 = vector.extract_strided_slice %277 {offsets = [48, 0], sizes = [16, 128], strides = [1, 1]} : vector<64x128xf32> to vector<16x128xf32>
      %284 = arith.maximumf %282, %283 : vector<16x128xf32>
      %c0_83 = arith.constant 0 : index
      %c0_84 = arith.constant 0 : index
      %285 = vector.load %arg9[%c0_83, %c0_84] : memref<128x128xf32, #tpu.memory_space<vmem>>, vector<128x128xf32>
      %cst_85 = arith.constant dense<0.000000e+00> : vector<16x128xf32>
      %286 = tpu.matmul %284, %285, %cst_85 {dimension_numbers = #tpu.dot_dimension_numbers<[1], [0], [0], [1], [0, 0, 1, 1], [], []>, precision = #tpu.contract_precision<fp32>} : vector<16x128xf32>, vector<128x128xf32>, vector<16x128xf32> -> vector<16x128xf32>
      %c0_86 = arith.constant 0 : index
      %c0_87 = arith.constant 0 : index
      %287 = vector.load %arg10[%c0_86, %c0_87] : memref<1x128xf32, #tpu.memory_space<vmem>>, vector<1x128xf32>
      %288 = vector.broadcast %287 : vector<1x128xf32> to vector<16x128xf32>
      %289 = arith.addf %286, %288 : vector<16x128xf32>
      %c0_88 = arith.constant 0 : index
      %c0_89 = arith.constant 0 : index
      %290 = vector.load %arg11[%c0_88, %c0_89] : memref<16x128xf32, #tpu.memory_space<vmem>>, vector<16x128xf32>
      tpu.vector_store %arg11[%c0_88, %c0_89], %289 {strides = array<i32>} : memref<16x128xf32, #tpu.memory_space<vmem>>, vector<16x128xf32>,
    } else {
    }
    return
  }
  func.func @transform_0(%arg0: i32, %arg1: i32) -> (i32, i32) {
    %c0_i32 = arith.constant 0 : i32
    %c0_i32_0 = arith.constant 0 : i32
    return %arg0, %c0_i32 : i32, i32
  }
  func.func @transform_1(%arg0: i32, %arg1: i32) -> (i32, i32) {
    %c0_i32 = arith.constant 0 : i32
    %c0_i32_0 = arith.constant 0 : i32
    return %arg1, %c0_i32 : i32, i32
  }
  func.func @transform_2(%arg0: i32, %arg1: i32) -> (i32, i32) {
    %c0_i32 = arith.constant 0 : i32
    %c0_i32_0 = arith.constant 0 : i32
    return %c0_i32, %arg1 : i32, i32
  }
  func.func @transform_3(%arg0: i32, %arg1: i32) -> (i32, i32) {
    %c0_i32 = arith.constant 0 : i32
    %c0_i32_0 = arith.constant 0 : i32
    %c0_i32_1 = arith.constant 0 : i32
    return %c0_i32, %c0_i32_0 : i32, i32
  }
  func.func @transform_4(%arg0: i32, %arg1: i32) -> (i32, i32) {
    %c0_i32 = arith.constant 0 : i32
    %c0_i32_0 = arith.constant 0 : i32
    %c0_i32_1 = arith.constant 0 : i32
    return %c0_i32, %c0_i32_0 : i32, i32
  }
  func.func @transform_5(%arg0: i32, %arg1: i32) -> (i32, i32) {
    %c0_i32 = arith.constant 0 : i32
    %c0_i32_0 = arith.constant 0 : i32
    %c0_i32_1 = arith.constant 0 : i32
    return %c0_i32, %c0_i32_0 : i32, i32
  }
  func.func @transform_6(%arg0: i32, %arg1: i32) -> (i32, i32) {
    %c0_i32 = arith.constant 0 : i32
    %c0_i32_0 = arith.constant 0 : i32
    %c0_i32_1 = arith.constant 0 : i32
    return %c0_i32, %c0_i32_0 : i32, i32
  }
  func.func @transform_7(%arg0: i32, %arg1: i32) -> (i32, i32) {
    %c0_i32 = arith.constant 0 : i32
    %c0_i32_0 = arith.constant 0 : i32
    %c0_i32_1 = arith.constant 0 : i32
    return %c0_i32, %c0_i32_0 : i32, i32
  }
  func.func @transform_8(%arg0: i32, %arg1: i32) -> (i32, i32) {
    %c0_i32 = arith.constant 0 : i32
    %c0_i32_0 = arith.constant 0 : i32
    %c0_i32_1 = arith.constant 0 : i32
    return %c0_i32, %c0_i32_0 : i32, i32
  }
  func.func @transform_9(%arg0: i32, %arg1: i32) -> (i32, i32) {
    %c0_i32 = arith.constant 0 : i32
    %c0_i32_0 = arith.constant 0 : i32
    return %arg0, %c0_i32 : i32, i32
  }
}

</mosaic_0001>

<llo_original>
// kernel: tpu_custom_call.1
$region0: #{tpu_custom_call.1}
  #allocation0 [shape = 'u32[]', space=smem, size = 0x4, offset = 0x4, fixed_abs, tag = 'smem constant byte address 0x4 - core index']
  #allocation1 [shape = 'u32[144,128]{1,0:T(1,128)}', space=vmem, size = 0x12000, scoped, tag = 'internal scratch']
  #allocation2 [shape = 'f32[16,16]{1,0:T(8,128)}', space=vmem, size = 0x2000, scoped, tag = 'scratch operand']
  %s0 = inlined_call_operand.vmem [shape: f32[48,3], index: 0, kind: input, shape index: {}]
  %s1 = inlined_call_operand.vmem [shape: f32[384,3], index: 1, kind: input, shape index: {}]
  %s2 = inlined_call_operand.vmem [shape: f32[3,384], index: 2, kind: input, shape index: {}]
  %s3 = inlined_call_operand.vmem [shape: f32[3,64], index: 3, kind: input, shape index: {}]
  %s4 = inlined_call_operand.vmem [shape: f32[1,64], index: 4, kind: input, shape index: {}]
  %s5 = inlined_call_operand.vmem [shape: f32[64,128], index: 5, kind: input, shape index: {}]
  %s6 = inlined_call_operand.vmem [shape: f32[1,128], index: 6, kind: input, shape index: {}]
  %s7 = inlined_call_operand.vmem [shape: f32[128,128], index: 7, kind: input, shape index: {}]
  %s8 = inlined_call_operand.vmem [shape: f32[1,128], index: 8, kind: input, shape index: {}]
  %s9 = inlined_call_operand.hbm [shape: f32[48,128], index: 9, kind: output, shape index: {}]
  %s10 = sld [smem:[#allocation0]]
  $region77: #{tpu_custom_call.1} parent=0
    _
  %s12 = ssub.s32 1, %s10
  %s13 = scalar_select 0, %s12, %s10
  $region1: #{tpu_custom_call.1} parent=0
    #allocation3 [shape = 'u8[16384]{0}', space=vmem, size = 0x4000, scoped, tag = 'output window, operand 0']
    #allocation4 [shape = 's32[2]{0}', space=sflag, size = 0x8, scoped, tag = 'scoped memory for tpu_custom_call.1']
    %14 = vsyncpa [#allocation4], 0
    %s15 = scalar_lea.sflag [#allocation4], 1
    %16 = vsyncpa %s15, 0
    loop: start=0, step=1, limit=11
    $region2: #{tpu_custom_call.1} parent=1 // loop_pre_header
      _
    $region3: #{tpu_custom_call.1} parent=1 // loop_header
      %s18 = sphi 0, %s22
      %p19 = scmp.ge.s32.totalorder %s18, 11
      %s25 = sphi 0, %s37
      %s26 = sphi 0, %s33
      %s27 = sphi 0, %s25
      %s28 = sphi 0, %s26
      %s29 = sphi 0, %s27
      %s30 = sphi 0, %s28
      %s40 = sphi 0, %s42
      %s43 = sphi 0, %s40
      %s44 = sphi 0, %s43
      %s60 = sphi 0, %s44
      %s66 = sphi 0, %s68
      %s69 = sphi 0, %s66
      %s70 = sphi 0, %s69
      %s86 = sphi 0, %s70
      %s92 = sphi 0, %s94
      %s95 = sphi 0, %s92
      %s96 = sphi 0, %s95
      %s112 = sphi 0, %s96
      %s116 = sphi 0, %s116
      %s118 = sphi 0, %s116
      %s119 = sphi 0, %s118
      %s133 = sphi 0, %s119
      %s137 = sphi 0, %s137
      %s139 = sphi 0, %s137
      %s140 = sphi 0, %s139
      %s154 = sphi 0, %s140
      %s158 = sphi 0, %s158
      %s160 = sphi 0, %s158
      %s161 = sphi 0, %s160
      %s175 = sphi 0, %s161
      %s179 = sphi 0, %s179
      %s181 = sphi 0, %s179
      %s182 = sphi 0, %s181
      %s196 = sphi 0, %s182
      %s200 = sphi 0, %s200
      %s202 = sphi 0, %s200
      %s203 = sphi 0, %s202
      %s217 = sphi 0, %s203
      %s221 = sphi 0, %s221
      %s223 = sphi 0, %s221
      %s224 = sphi 0, %s223
      %s238 = sphi 0, %s224
      %s244 = sphi 0, %s246
      %s247 = sphi 0, %s244
      %s248 = sphi 0, %s247
      %s264 = sphi 0, %s248
    $region4: #{tpu_custom_call.1} parent=1 // loop_header_branch
      %21 = sbr.rel (%p19) target = $region8
    $region5: #{tpu_custom_call.1} parent=1 // loop_body
      %s23 = ssub.s32 %s18, 1
      %s24 = ssub.s32 %s18, 2
      %s31 = sadd.s32 1, %s26
      %p32 = scmp.ge.s32.totalorder %s31, 3
      %s33 = scalar_select %p32, 0, %s31
      %s34 = sadd.s32 1, %s25
      %s35 = scalar_select %p32, %s34, %s25
      %p36 = scmp.ge.s32.totalorder %s35, 3
      %s37 = scalar_select %p36, 0, %s35
      %s38 = ssub.s32 %s25, %s37
      %p39 = scmp.eq.s32.totalorder %s38, 0
      %s41 = sadd.s32 %s40, 1
      %s42 = scalar_select %p39, %s40, %s41
      %p45 = pneg %p39
      %p46 = scmp.eq.s32.totalorder %s18, 8
      %p47 = por %p45, %p46
      %p48 = scmp.ne.s32.totalorder %s40, %s43
      %p49 = scmp.eq.s32.totalorder %s18, 0
      %p50 = por %p48, %p49
      %p51 = scmp.ne.s32.totalorder %s40, %s43
      %p52 = scmp.eq.s32.totalorder %s23, 8
      %p53 = por %p51, %p52
      %p54 = scmp.ne.s32.totalorder %s43, %s44
      %p55 = scmp.eq.s32.totalorder %s23, 0
      %p56 = por %p54, %p55
      %p57 = scmp.ne.s32.totalorder %s43, %s44
      %p58 = scmp.eq.s32.totalorder %s24, 8
      %p59 = por %p57, %p58
      %p61 = scmp.ne.s32.totalorder %s44, %s60
      %p62 = scmp.eq.s32.totalorder %s24, 0
      %p63 = por %p61, %p62
      %s64 = ssub.s32 %s26, %s33
      %p65 = scmp.eq.s32.totalorder %s64, 0
      %s67 = sadd.s32 %s66, 1
      %s68 = scalar_select %p65, %s66, %s67
      %p71 = pneg %p65
      %p72 = scmp.eq.s32.totalorder %s18, 8
      %p73 = por %p71, %p72
      %p74 = scmp.ne.s32.totalorder %s66, %s69
      %p75 = scmp.eq.s32.totalorder %s18, 0
      %p76 = por %p74, %p75
      %p77 = scmp.ne.s32.totalorder %s66, %s69
      %p78 = scmp.eq.s32.totalorder %s23, 8
      %p79 = por %p77, %p78
      %p80 = scmp.ne.s32.totalorder %s69, %s70
      %p81 = scmp.eq.s32.totalorder %s23, 0
      %p82 = por %p80, %p81
      %p83 = scmp.ne.s32.totalorder %s69, %s70
      %p84 = scmp.eq.s32.totalorder %s24, 8
      %p85 = por %p83, %p84
      %p87 = scmp.ne.s32.totalorder %s70, %s86
      %p88 = scmp.eq.s32.totalorder %s24, 0
      %p89 = por %p87, %p88
      %s90 = ssub.s32 %s26, %s33
      %p91 = scmp.eq.s32.totalorder %s90, 0
      %s93 = sadd.s32 %s92, 1
      %s94 = scalar_select %p91, %s92, %s93
      %p97 = pneg %p91
      %p98 = scmp.eq.s32.totalorder %s18, 8
      %p99 = por %p97, %p98
      %p100 = scmp.ne.s32.totalorder %s92, %s95
      %p101 = scmp.eq.s32.totalorder %s18, 0
      %p102 = por %p100, %p101
      %p103 = scmp.ne.s32.totalorder %s92, %s95
      %p104 = scmp.eq.s32.totalorder %s23, 8
      %p105 = por %p103, %p104
      %p106 = scmp.ne.s32.totalorder %s95, %s96
      %p107 = scmp.eq.s32.totalorder %s23, 0
      %p108 = por %p106, %p107
      %p109 = scmp.ne.s32.totalorder %s95, %s96
      %p110 = scmp.eq.s32.totalorder %s24, 8
      %p111 = por %p109, %p110
      %p113 = scmp.ne.s32.totalorder %s96, %s112
      %p114 = scmp.eq.s32.totalorder %s24, 0
      %p115 = por %p113, %p114
      %s117 = sadd.s32 %s116, 1
      %p120 = scmp.eq.s32.totalorder %s18, 8
      %p121 = scmp.ne.s32.totalorder %s116, %s118
      %p122 = scmp.eq.s32.totalorder %s18, 0
      %p123 = por %p121, %p122
      %p124 = scmp.ne.s32.totalorder %s116, %s118
      %p125 = scmp.eq.s32.totalorder %s23, 8
      %p126 = por %p124, %p125
      %p127 = scmp.ne.s32.totalorder %s118, %s119
      %p128 = scmp.eq.s32.totalorder %s23, 0
      %p129 = por %p127, %p128
      %p130 = scmp.ne.s32.totalorder %s118, %s119
      %p131 = scmp.eq.s32.totalorder %s24, 8
      %p132 = por %p130, %p131
      %p134 = scmp.ne.s32.totalorder %s119, %s133
      %p135 = scmp.eq.s32.totalorder %s24, 0
      %p136 = por %p134, %p135
      %s138 = sadd.s32 %s137, 1
      %p141 = scmp.eq.s32.totalorder %s18, 8
      %p142 = scmp.ne.s32.totalorder %s137, %s139
      %p143 = scmp.eq.s32.totalorder %s18, 0
      %p144 = por %p142, %p143
      %p145 = scmp.ne.s32.totalorder %s137, %s139
      %p146 = scmp.eq.s32.totalorder %s23, 8
      %p147 = por %p145, %p146
      %p148 = scmp.ne.s32.totalorder %s139, %s140
      %p149 = scmp.eq.s32.totalorder %s23, 0
      %p150 = por %p148, %p149
      %p151 = scmp.ne.s32.totalorder %s139, %s140
      %p152 = scmp.eq.s32.totalorder %s24, 8
      %p153 = por %p151, %p152
      %p155 = scmp.ne.s32.totalorder %s140, %s154
      %p156 = scmp.eq.s32.totalorder %s24, 0
      %p157 = por %p155, %p156
      %s159 = sadd.s32 %s158, 1
      %p162 = scmp.eq.s32.totalorder %s18, 8
      %p163 = scmp.ne.s32.totalorder %s158, %s160
      %p164 = scmp.eq.s32.totalorder %s18, 0
      %p165 = por %p163, %p164
      %p166 = scmp.ne.s32.totalorder %s158, %s160
      %p167 = scmp.eq.s32.totalorder %s23, 8
      %p168 = por %p166, %p167
      %p169 = scmp.ne.s32.totalorder %s160, %s161
      %p170 = scmp.eq.s32.totalorder %s23, 0
      %p171 = por %p169, %p170
      %p172 = scmp.ne.s32.totalorder %s160, %s161
      %p173 = scmp.eq.s32.totalorder %s24, 8
      %p174 = por %p172, %p173
      %p176 = scmp.ne.s32.totalorder %s161, %s175
      %p177 = scmp.eq.s32.totalorder %s24, 0
      %p178 = por %p176, %p177
      %s180 = sadd.s32 %s179, 1
      %p183 = scmp.eq.s32.totalorder %s18, 8
      %p184 = scmp.ne.s32.totalorder %s179, %s181
      %p185 = scmp.eq.s32.totalorder %s18, 0
      %p186 = por %p184, %p185
      %p187 = scmp.ne.s32.totalorder %s179, %s181
      %p188 = scmp.eq.s32.totalorder %s23, 8
      %p189 = por %p187, %p188
      %p190 = scmp.ne.s32.totalorder %s181, %s182
      %p191 = scmp.eq.s32.totalorder %s23, 0
      %p192 = por %p190, %p191
      %p193 = scmp.ne.s32.totalorder %s181, %s182
      %p194 = scmp.eq.s32.totalorder %s24, 8
      %p195 = por %p193, %p194
      %p197 = scmp.ne.s32.totalorder %s182, %s196
      %p198 = scmp.eq.s32.totalorder %s24, 0
      %p199 = por %p197, %p198
      %s201 = sadd.s32 %s200, 1
      %p204 = scmp.eq.s32.totalorder %s18, 8
      %p205 = scmp.ne.s32.totalorder %s200, %s202
      %p206 = scmp.eq.s32.totalorder %s18, 0
      %p207 = por %p205, %p206
      %p208 = scmp.ne.s32.totalorder %s200, %s202
      %p209 = scmp.eq.s32.totalorder %s23, 8
      %p210 = por %p208, %p209
      %p211 = scmp.ne.s32.totalorder %s202, %s203
      %p212 = scmp.eq.s32.totalorder %s23, 0
      %p213 = por %p211, %p212
      %p214 = scmp.ne.s32.totalorder %s202, %s203
      %p215 = scmp.eq.s32.totalorder %s24, 8
      %p216 = por %p214, %p215
      %p218 = scmp.ne.s32.totalorder %s203, %s217
      %p219 = scmp.eq.s32.totalorder %s24, 0
      %p220 = por %p218, %p219
      %s222 = sadd.s32 %s221, 1
      %p225 = scmp.eq.s32.totalorder %s18, 8
      %p226 = scmp.ne.s32.totalorder %s221, %s223
      %p227 = scmp.eq.s32.totalorder %s18, 0
      %p228 = por %p226, %p227
      %p229 = scmp.ne.s32.totalorder %s221, %s223
      %p230 = scmp.eq.s32.totalorder %s23, 8
      %p231 = por %p229, %p230
      %p232 = scmp.ne.s32.totalorder %s223, %s224
      %p233 = scmp.eq.s32.totalorder %s23, 0
      %p234 = por %p232, %p233
      %p235 = scmp.ne.s32.totalorder %s223, %s224
      %p236 = scmp.eq.s32.totalorder %s24, 8
      %p237 = por %p235, %p236
      %p239 = scmp.ne.s32.totalorder %s224, %s238
      %p240 = scmp.eq.s32.totalorder %s24, 0
      %p241 = por %p239, %p240
      %s242 = ssub.s32 %s25, %s37
      %p243 = scmp.eq.s32.totalorder %s242, 0
      %s245 = sadd.s32 %s244, 1
      %s246 = scalar_select %p243, %s244, %s245
      %p249 = pneg %p243
      %p250 = scmp.eq.s32.totalorder %s18, 8
      %p251 = por %p249, %p250
      %p252 = scmp.ne.s32.totalorder %s244, %s247
      %p253 = scmp.eq.s32.totalorder %s18, 0
      %p254 = por %p252, %p253
      %p255 = scmp.ne.s32.totalorder %s244, %s247
      %p256 = scmp.eq.s32.totalorder %s23, 8
      %p257 = por %p255, %p256
      %p258 = scmp.ne.s32.totalorder %s247, %s248
      %p259 = scmp.eq.s32.totalorder %s23, 0
      %p260 = por %p258, %p259
      %p261 = scmp.ne.s32.totalorder %s247, %s248
      %p262 = scmp.eq.s32.totalorder %s24, 8
      %p263 = por %p261, %p262
      %p265 = scmp.ne.s32.totalorder %s248, %s264
      %p266 = scmp.eq.s32.totalorder %s24, 0
      %p267 = por %p265, %p266
      %p268 = scmp.le.s32.totalorder 1, %s18
      %p269 = scmp.lt.s32.totalorder %s18, 10
      %p270 = pnand %p268, %p269
      %p271 = pneg %p270
      // Predicated region
      $region9: #{tpu_custom_call.1} parent=5 // pred_check
        _
      $region10: #{tpu_custom_call.1} parent=5 // pred_check_branch
        %273 = sbr.rel (%p270) target = $region12
      $region11: #{tpu_custom_call.1} parent=5 // pred_region
        %s274 = ssub.s32 %s18, 1
        // Predicated region
        $region13: #{tpu_custom_call.1} parent=11 // pred_check
          %p275 = pneg %p129
        $region14: #{tpu_custom_call.1} parent=11 // pred_check_branch
          %277 = sbr.rel (%p275) target = $region16
        $region15: #{tpu_custom_call.1} parent=11 // pred_region
          _
        $region16: #{tpu_custom_call.1} parent=11 // pred_fallthru
          _
        // Predicated region
        $region17: #{tpu_custom_call.1} parent=11 // pred_check
          %p278 = pneg %p150
        $region18: #{tpu_custom_call.1} parent=11 // pred_check_branch
          %280 = sbr.rel (%p278) target = $region20
        $region19: #{tpu_custom_call.1} parent=11 // pred_region
          _
        $region20: #{tpu_custom_call.1} parent=11 // pred_fallthru
          _
        // Predicated region
        $region21: #{tpu_custom_call.1} parent=11 // pred_check
          %p281 = pneg %p171
        $region22: #{tpu_custom_call.1} parent=11 // pred_check_branch
          %283 = sbr.rel (%p281) target = $region24
        $region23: #{tpu_custom_call.1} parent=11 // pred_region
          _
        $region24: #{tpu_custom_call.1} parent=11 // pred_fallthru
          _
        // Predicated region
        $region25: #{tpu_custom_call.1} parent=11 // pred_check
          %p284 = pneg %p192
        $region26: #{tpu_custom_call.1} parent=11 // pred_check_branch
          %286 = sbr.rel (%p284) target = $region28
        $region27: #{tpu_custom_call.1} parent=11 // pred_region
          _
        $region28: #{tpu_custom_call.1} parent=11 // pred_fallthru
          _
        // Predicated region
        $region29: #{tpu_custom_call.1} parent=11 // pred_check
          %p287 = pneg %p213
        $region30: #{tpu_custom_call.1} parent=11 // pred_check_branch
          %289 = sbr.rel (%p287) target = $region32
        $region31: #{tpu_custom_call.1} parent=11 // pred_region
          _
        $region32: #{tpu_custom_call.1} parent=11 // pred_fallthru
          _
        // Predicated region
        $region33: #{tpu_custom_call.1} parent=11 // pred_check
          %p290 = pneg %p234
        $region34: #{tpu_custom_call.1} parent=11 // pred_check_branch
          %292 = sbr.rel (%p290) target = $region36
        $region35: #{tpu_custom_call.1} parent=11 // pred_region
          _
        $region36: #{tpu_custom_call.1} parent=11 // pred_fallthru
          _
      $region12: #{tpu_custom_call.1} parent=5 // pred_fallthru
        _
      %p293 = scmp.lt.s32.totalorder %s18, 9
      // Predicated region
      $region37: #{tpu_custom_call.1} parent=5 // pred_check
        %p294 = pneg %p293
      $region38: #{tpu_custom_call.1} parent=5 // pred_check_branch
        %296 = sbr.rel (%p294) target = $region40
      $region39: #{tpu_custom_call.1} parent=5 // pred_region
        // Predicated region
        $region41: #{tpu_custom_call.1} parent=39 // pred_check
          %p297 = pneg %p50
        $region42: #{tpu_custom_call.1} parent=39 // pred_check_branch
          %299 = sbr.rel (%p297) target = $region44
        $region43: #{tpu_custom_call.1} parent=39 // pred_region
          %s300 = smul.u32 2, %s25
          %p301 = scmp.lt.s32.totalorder %s300, 5
          %s302 = scalar_select %p301, %s300, 5
          %s303 = smul.addr %s302, 8
          %s304 = scalar_lea.vmem %s0, %s303
          %s305 = smul.u32 2, %s25
        $region44: #{tpu_custom_call.1} parent=39 // pred_fallthru
          _
        // Predicated region
        $region45: #{tpu_custom_call.1} parent=39 // pred_check
          %p306 = pneg %p76
        $region46: #{tpu_custom_call.1} parent=39 // pred_check_branch
          %308 = sbr.rel (%p306) target = $region48
        $region47: #{tpu_custom_call.1} parent=39 // pred_region
          %s309 = smul.u32 16, %s26
          %p310 = scmp.lt.s32.totalorder %s309, 47
          %s311 = scalar_select %p310, %s309, 47
          %s312 = smul.addr %s311, 8
          %s313 = scalar_lea.vmem %s1, %s312
          %s314 = smul.u32 16, %s26
        $region48: #{tpu_custom_call.1} parent=39 // pred_fallthru
          _
        // Predicated region
        $region49: #{tpu_custom_call.1} parent=39 // pred_check
          %p315 = pneg %p102
        $region50: #{tpu_custom_call.1} parent=39 // pred_check_branch
          %317 = sbr.rel (%p315) target = $region52
        $region51: #{tpu_custom_call.1} parent=39 // pred_region
          %p318 = scmp.lt.s32.totalorder %s26, 2
          %s319 = scalar_select %p318, %s26, 2
          %s320 = smul.addr %s319, 4
          %s321 = scalar_lea.vmem %s2, %s320
        $region52: #{tpu_custom_call.1} parent=39 // pred_fallthru
          _
      $region40: #{tpu_custom_call.1} parent=5 // pred_fallthru
        _
      %p322 = scmp.le.s32.totalorder 1, %s18
      %p323 = scmp.lt.s32.totalorder %s18, 10
      %p324 = pnand %p322, %p323
      %p325 = pneg %p324
      // Predicated region
      $region53: #{tpu_custom_call.1} parent=5 // pred_check
        _
      $region54: #{tpu_custom_call.1} parent=5 // pred_check_branch
        %327 = sbr.rel (%p324) target = $region56
      $region55: #{tpu_custom_call.1} parent=5 // pred_region
        %s328 = ssub.s32 %s18, 1
        %s329 = smul.u32 2, %s27
        %p330 = scmp.lt.s32.totalorder %s329, 5
        %s331 = scalar_select %p330, %s329, 5
        %s332 = smul.addr %s331, 8
        %s333 = scalar_lea.vmem %s0, %s332
        %p334 = pneg %p56
        %p335 = pneg %p53
        %s336 = smul.u32 16, %s28
        %p337 = scmp.lt.s32.totalorder %s336, 47
        %s338 = scalar_select %p337, %s336, 47
        %s339 = smul.addr %s338, 8
        %s340 = scalar_lea.vmem %s1, %s339
        %p341 = pneg %p82
        %p342 = pneg %p79
        %p343 = scmp.lt.s32.totalorder %s28, 2
        %s344 = scalar_select %p343, %s28, 2
        %s345 = smul.addr %s344, 4
        %s346 = scalar_lea.vmem %s2, %s345
        %p347 = pneg %p108
        %p348 = pneg %p105
        %p349 = pneg %p129
        %p350 = pneg %p126
        %p351 = pneg %p150
        %p352 = pneg %p147
        %p353 = pneg %p171
        %p354 = pneg %p168
        %p355 = pneg %p192
        %p356 = pneg %p189
        %p357 = pneg %p213
        %p358 = pneg %p210
        %p359 = pneg %p234
        %p360 = pneg %p231
        %p361 = pneg %p260
        %p362 = pneg %p257
        %s363 = sand.u32 %s247, 1
        %s364 = scalar_lea.sflag [#allocation4], %s363
        %s365 = sand.u32 %s247, 1
        %s366 = smul.addr %s365, 16
        %s367 = scalar_lea.vmem [#allocation3], %s366
        %s368 = smul.u32 2, %s27
        %p369 = scmp.lt.s32.totalorder %s368, 5
        %s370 = scalar_select %p369, %s368, 5
        %s371 = smul.addr %s370, 8
        %s372 = scalar_lea.vmem %s0, %s371
        %s373 = smul.u32 2, %s27
        %s374 = smul.u32 16, %s28
        %p375 = scmp.lt.s32.totalorder %s374, 47
        %s376 = scalar_select %p375, %s374, 47
        %s377 = smul.addr %s376, 8
        %s378 = scalar_lea.vmem %s1, %s377
        %s379 = smul.u32 16, %s28
        %p380 = scmp.lt.s32.totalorder %s28, 2
        %s381 = scalar_select %p380, %s28, 2
        %s382 = smul.addr %s381, 4
        %s383 = scalar_lea.vmem %s2, %s382
        %s384 = smul.u32 2, %s27
        %p385 = scmp.eq.s32.totalorder %s28, 0
        // Predicated region
        $region57: #{tpu_custom_call.1} parent=55 // pred_check
          %p386 = pneg %p385
        $region58: #{tpu_custom_call.1} parent=55 // pred_check_branch
          %388 = sbr.rel (%p386) target = $region60
        $region59: #{tpu_custom_call.1} parent=55 // pred_region
          %vm389 = vcmask 31744
          %v390 = vsel %vm389, inf, 0.0
          %vm391 = vcmask 130048
          %392 = vst.msk [vmem:[#allocation2] sm:$0xff] %vm391, %v390
          %393 = vst.msk [vmem:[#allocation2 + $0x8] sm:$0xff] %vm391, %v390
        $region60: #{tpu_custom_call.1} parent=55 // pred_fallthru
          _
        %v394 = vld [vmem:[%s372] sm:$0xff]
        %v395 = vld [vmem:[%s372 + $0x8] sm:$0xff]
        %v396 = vld [vmem:[%s383] sm:$0x1]
        %v397 = vld [vmem:[%s383 + $0x1] sm:$0x1]
        %v398 = vld [vmem:[%s383 + $0x2] sm:$0x1]
        %400 = vset.pattern.permute.xlu0 0
        %401 = vperm.xlu0 %400, %v394
        %v402 = vpop.permute.xlu0 %401
        %405 = vset.pattern.permute.xlu0 0
        %406 = vperm.xlu0 %405, %v395
        %v407 = vpop.permute.xlu0 %406
        %v409 = vlaneseq
        %v410 = vshrl.u32 %v409, 7
        %v411 = vsub.s32 0, %v410
        %v412 = vrot.slane %v396, %v411
        %v413 = vsub.f32 %v402, %v412
        %v414 = vsub.f32 %v407, %v412
        %415 = vset.pattern.permute.xlu0 1
        %416 = vperm.xlu0 %415, %v394
        %v417 = vpop.permute.xlu0 %416
        %419 = vset.pattern.permute.xlu0 1
        %420 = vperm.xlu0 %419, %v395
        %v421 = vpop.permute.xlu0 %420
        %v423 = vlaneseq
        %v424 = vshrl.u32 %v423, 7
        %v425 = vsub.s32 0, %v424
        %v426 = vrot.slane %v397, %v425
        %v427 = vsub.f32 %v417, %v426
        %v428 = vsub.f32 %v421, %v426
        %429 = vset.pattern.permute.xlu0 2
        %430 = vperm.xlu0 %429, %v394
        %v431 = vpop.permute.xlu0 %430
        %433 = vset.pattern.permute.xlu0 2
        %434 = vperm.xlu0 %433, %v395
        %v435 = vpop.permute.xlu0 %434
        %v437 = vlaneseq
        %v438 = vshrl.u32 %v437, 7
        %v439 = vsub.s32 0, %v438
        %v440 = vrot.slane %v398, %v439
        %v441 = vsub.f32 %v431, %v440
        %v442 = vsub.f32 %v435, %v440
        %v443 = vmul.f32 %v413, %v413
        %v444 = vmul.f32 %v414, %v414
        %v445 = vmul.f32 %v427, %v427
        %v446 = vmul.f32 %v428, %v428
        %v447 = vadd.f32 %v443, %v445
        %v448 = vadd.f32 %v444, %v446
        %v449 = vmul.f32 %v441, %v441
        %v450 = vmul.f32 %v442, %v442
        %v451 = vadd.f32 %v447, %v449
        %v452 = vadd.f32 %v448, %v450
        %v453 = vlaneseq
        %v454 = vand.u32 %v453, 127
        %v455 = vld [vmem:[%s378] sm:$0xff]
        %v456 = vld [vmem:[%s378 + $0x8] sm:$0xff]
        %v457 = vld [vmem:[%s378 + $0x10] sm:$0xff]
        %v458 = vld [vmem:[%s378 + $0x18] sm:$0xff]
        %v459 = vld [vmem:[%s378 + $0x20] sm:$0xff]
        %v460 = vld [vmem:[%s378 + $0x28] sm:$0xff]
        %v461 = vld [vmem:[%s378 + $0x30] sm:$0xff]
        %v462 = vld [vmem:[%s378 + $0x38] sm:$0xff]
        %v463 = vld [vmem:[%s378 + $0x40] sm:$0xff]
        %v464 = vld [vmem:[%s378 + $0x48] sm:$0xff]
        %v465 = vld [vmem:[%s378 + $0x50] sm:$0xff]
        %v466 = vld [vmem:[%s378 + $0x58] sm:$0xff]
        %v467 = vld [vmem:[%s378 + $0x60] sm:$0xff]
        %v468 = vld [vmem:[%s378 + $0x68] sm:$0xff]
        %v469 = vld [vmem:[%s378 + $0x70] sm:$0xff]
        %v470 = vld [vmem:[%s378 + $0x78] sm:$0xff]
        %471 = vmin.xlane.f32.xlu0 %v451
        %v472 = vpop.xlane.xlu0 %471
        %473 = vmin.xlane.f32.xlu0 %v452
        %v474 = vpop.xlane.xlu0 %473
        %vm475 = vcmp.eq.f32.partialorder %v451, %v472
        %vm476 = vcmp.eq.f32.partialorder %v452, %v474
        %v477 = vsel %vm475, %v454, 128
        %v478 = vsel %vm476, %v454, 128
        %v479 = vand.u32 %v477, 65535
        %v480 = vshra.s32 %v477, 16
        %v481 = vcvt.s32.f32 %v479
        %v482 = vcvt.s32.f32 %v480
        %483 = vmin.xlane.f32.xlu0 %v482
        %v484 = vpop.xlane.xlu0 %483
        %vm485 = vcmp.eq.f32.partialorder %v482, %v484
        %v486 = vsel %vm485, %v481, inf
        %487 = vmin.xlane.f32.xlu0 %v486
        %v488 = vpop.xlane.xlu0 %487
        %v489 = vcvt.f32.s32 %v488
        %v490 = vcvt.f32.s32 %v484
        %v491 = vshll.u32 %v490, 16
        %v492 = vadd.s32 %v491, %v489
        %v493 = vand.u32 %v478, 65535
        %v494 = vshra.s32 %v478, 16
        %v495 = vcvt.s32.f32 %v493
        %v496 = vcvt.s32.f32 %v494
        %497 = vmin.xlane.f32.xlu0 %v496
        %v498 = vpop.xlane.xlu0 %497
        %vm499 = vcmp.eq.f32.partialorder %v496, %v498
        %v500 = vsel %vm499, %v495, inf
        %501 = vmin.xlane.f32.xlu0 %v500
        %v502 = vpop.xlane.xlu0 %501
        %v503 = vcvt.f32.s32 %v502
        %v504 = vcvt.f32.s32 %v498
        %v505 = vshll.u32 %v504, 16
        %v506 = vadd.s32 %v505, %v503
        %vm507 = vcmp.eq.s32.totalorder %v454, %v492
        %vm508 = vcmp.eq.s32.totalorder %v454, %v506
        %v509 = vsel %vm507, 1, 0
        %v510 = vsel %vm508, 1, 0
        %v511 = vcvt.s32.f32 %v509
        %v512 = vcvt.s32.f32 %v510
        %513 = vmatprep.subr.mxu0 0.0
        %v514 = vand.u32 %v455, 4294901760
        %515 = vmatpush1.msra.mxu0 %v514
        %516 = vmatprep.subr.mxu0 0.0
        %v517 = vand.u32 %v456, 4294901760
        %518 = vmatpush1.msra.mxu0 %v517
        %519 = vmatprep.subr.mxu0 0.0
        %v520 = vand.u32 %v457, 4294901760
        %521 = vmatpush1.msra.mxu0 %v520
        %522 = vmatprep.subr.mxu0 0.0
        %v523 = vand.u32 %v458, 4294901760
        %524 = vmatpush1.msra.mxu0 %v523
        %525 = vmatprep.subr.mxu0 0.0
        %v526 = vand.u32 %v459, 4294901760
        %527 = vmatpush1.msra.mxu0 %v526
        %528 = vmatprep.subr.mxu0 0.0
        %v529 = vand.u32 %v460, 4294901760
        %530 = vmatpush1.msra.mxu0 %v529
        %531 = vmatprep.subr.mxu0 0.0
        %v532 = vand.u32 %v461, 4294901760
        %533 = vmatpush1.msra.mxu0 %v532
        %534 = vmatprep.subr.mxu0 0.0
        %v535 = vand.u32 %v462, 4294901760
        %536 = vmatpush1.msra.mxu0 %v535
        %537 = vmatprep.subr.mxu0 0.0
        %v538 = vand.u32 %v463, 4294901760
        %539 = vmatpush1.msra.mxu0 %v538
        %540 = vmatprep.subr.mxu0 0.0
        %v541 = vand.u32 %v464, 4294901760
        %542 = vmatpush1.msra.mxu0 %v541
        %543 = vmatprep.subr.mxu0 0.0
        %v544 = vand.u32 %v465, 4294901760
        %545 = vmatpush1.msra.mxu0 %v544
        %546 = vmatprep.subr.mxu0 0.0
        %v547 = vand.u32 %v466, 4294901760
        %548 = vmatpush1.msra.mxu0 %v547
        %549 = vmatprep.subr.mxu0 0.0
        %v550 = vand.u32 %v467, 4294901760
        %551 = vmatpush1.msra.mxu0 %v550
        %552 = vmatprep.subr.mxu0 0.0
        %v553 = vand.u32 %v468, 4294901760
        %554 = vmatpush1.msra.mxu0 %v553
        %555 = vmatprep.subr.mxu0 0.0
        %v556 = vand.u32 %v469, 4294901760
        %557 = vmatpush1.msra.mxu0 %v556
        %558 = vmatprep.subr.mxu0 0.0
        %v559 = vand.u32 %v470, 4294901760
        %560 = vmatpush1.msra.mxu0 %v559
        %561 = vmatprep.subr.mxu0 0.0
        %562 = vmatpush1.msra.mxu0 0.0
        %563 = vmatprep.subr.mxu0 0.0
        %564 = vmatpush1.msra.mxu0 0.0
        %565 = vmatprep.subr.mxu0 0.0
        %566 = vmatpush1.msra.mxu0 0.0
        %567 = vmatprep.subr.mxu0 0.0
        %568 = vmatpush1.msra.mxu0 0.0
        %569 = vmatprep.subr.mxu0 0.0
        %570 = vmatpush1.msra.mxu0 0.0
        %571 = vmatprep.subr.mxu0 0.0
        %572 = vmatpush1.msra.mxu0 0.0
        %573 = vmatprep.subr.mxu0 0.0
        %574 = vmatpush1.msra.mxu0 0.0
        %575 = vmatprep.subr.mxu0 0.0
        %576 = vmatpush1.msra.mxu0 0.0
        %577 = vmatprep.subr.mxu0 0.0
        %578 = vmatpush1.msra.mxu0 0.0
        %579 = vmatprep.subr.mxu0 0.0
        %580 = vmatpush1.msra.mxu0 0.0
        %581 = vmatprep.subr.mxu0 0.0
        %582 = vmatpush1.msra.mxu0 0.0
        %583 = vmatprep.subr.mxu0 0.0
        %584 = vmatpush1.msra.mxu0 0.0
        %585 = vmatprep.subr.mxu0 0.0
        %586 = vmatpush1.msra.mxu0 0.0
        %587 = vmatprep.subr.mxu0 0.0
        %588 = vmatpush1.msra.mxu0 0.0
        %589 = vmatprep.subr.mxu0 0.0
        %590 = vmatpush1.msra.mxu0 0.0
        %591 = vmatprep.subr.mxu0 0.0
        %592 = vmatpush1.msra.mxu0 0.0
        %593 = vmatprep.mubr.f32.mxu0 0.0
        %v594 = vand.u32 %v511, 4294901760
        %v595 = vsub.f32 %v511, %v594
        %v596 = vand.u32 %v595, 4294901760
        %v597 = vsub.f32 %v595, %v596
        %v598 = vand.u32 %v597, 4294901760
        %599 = vmatmul.mubr.f32.gmra.mrb[0].mxu0 %v598
        %v600 = vpop.f32.mrb[0].mxu0
        %v601 = vadd.f32 0.0, %v600
        %v602 = vpop.f32.mrb[0].mxu0
        %603 = vmatprep.mubr.f32.mxu0 0.0
        %v604 = vand.u32 %v512, 4294901760
        %v605 = vsub.f32 %v512, %v604
        %v606 = vand.u32 %v605, 4294901760
        %v607 = vsub.f32 %v605, %v606
        %v608 = vand.u32 %v607, 4294901760
        %609 = vmatmul.mubr.f32.gmra.mrb[0].mxu0 %v608
        %v610 = vpop.f32.mrb[0].mxu0
        %v611 = vadd.f32 0.0, %v610
        %v612 = vpop.f32.mrb[0].mxu0
        %613 = vdwg.mxu0
        %614 = vmatprep.subr.mxu0 0.0
        %v615 = vand.u32 %v455, 4294901760
        %v616 = vsub.f32 %v455, %v615
        %v617 = vand.u32 %v616, 4294901760
        %v618 = vsub.f32 %v616, %v617
        %v619 = vand.u32 %v618, 4294901760
        %620 = vmatpush1.msra.mxu0 %v619
        %621 = vmatprep.subr.mxu0 0.0
        %v622 = vand.u32 %v456, 4294901760
        %v623 = vsub.f32 %v456, %v622
        %v624 = vand.u32 %v623, 4294901760
        %v625 = vsub.f32 %v623, %v624
        %v626 = vand.u32 %v625, 4294901760
        %627 = vmatpush1.msra.mxu0 %v626
        %628 = vmatprep.subr.mxu0 0.0
        %v629 = vand.u32 %v457, 4294901760
        %v630 = vsub.f32 %v457, %v629
        %v631 = vand.u32 %v630, 4294901760
        %v632 = vsub.f32 %v630, %v631
        %v633 = vand.u32 %v632, 4294901760
        %634 = vmatpush1.msra.mxu0 %v633
        %635 = vmatprep.subr.mxu0 0.0
        %v636 = vand.u32 %v458, 4294901760
        %v637 = vsub.f32 %v458, %v636
        %v638 = vand.u32 %v637, 4294901760
        %v639 = vsub.f32 %v637, %v638
        %v640 = vand.u32 %v639, 4294901760
        %641 = vmatpush1.msra.mxu0 %v640
        %642 = vmatprep.subr.mxu0 0.0
        %v643 = vand.u32 %v459, 4294901760
        %v644 = vsub.f32 %v459, %v643
        %v645 = vand.u32 %v644, 4294901760
        %v646 = vsub.f32 %v644, %v645
        %v647 = vand.u32 %v646, 4294901760
        %648 = vmatpush1.msra.mxu0 %v647
        %649 = vmatprep.subr.mxu0 0.0
        %v650 = vand.u32 %v460, 4294901760
        %v651 = vsub.f32 %v460, %v650
        %v652 = vand.u32 %v651, 4294901760
        %v653 = vsub.f32 %v651, %v652
        %v654 = vand.u32 %v653, 4294901760
        %655 = vmatpush1.msra.mxu0 %v654
        %656 = vmatprep.subr.mxu0 0.0
        %v657 = vand.u32 %v461, 4294901760
        %v658 = vsub.f32 %v461, %v657
        %v659 = vand.u32 %v658, 4294901760
        %v660 = vsub.f32 %v658, %v659
        %v661 = vand.u32 %v660, 4294901760
        %662 = vmatpush1.msra.mxu0 %v661
        %663 = vmatprep.subr.mxu0 0.0
        %v664 = vand.u32 %v462, 4294901760
        %v665 = vsub.f32 %v462, %v664
        %v666 = vand.u32 %v665, 4294901760
        %v667 = vsub.f32 %v665, %v666
        %v668 = vand.u32 %v667, 4294901760
        %669 = vmatpush1.msra.mxu0 %v668
        %670 = vmatprep.subr.mxu0 0.0
        %v671 = vand.u32 %v463, 4294901760
        %v672 = vsub.f32 %v463, %v671
        %v673 = vand.u32 %v672, 4294901760
        %v674 = vsub.f32 %v672, %v673
        %v675 = vand.u32 %v674, 4294901760
        %676 = vmatpush1.msra.mxu0 %v675
        %677 = vmatprep.subr.mxu0 0.0
        %v678 = vand.u32 %v464, 4294901760
        %v679 = vsub.f32 %v464, %v678
        %v680 = vand.u32 %v679, 4294901760
        %v681 = vsub.f32 %v679, %v680
        %v682 = vand.u32 %v681, 4294901760
        %683 = vmatpush1.msra.mxu0 %v682
        %684 = vmatprep.subr.mxu0 0.0
        %v685 = vand.u32 %v465, 4294901760
        %v686 = vsub.f32 %v465, %v685
        %v687 = vand.u32 %v686, 4294901760
        %v688 = vsub.f32 %v686, %v687
        %v689 = vand.u32 %v688, 4294901760
        %690 = vmatpush1.msra.mxu0 %v689
        %691 = vmatprep.subr.mxu0 0.0
        %v692 = vand.u32 %v466, 4294901760
        %v693 = vsub.f32 %v466, %v692
        %v694 = vand.u32 %v693, 4294901760
        %v695 = vsub.f32 %v693, %v694
        %v696 = vand.u32 %v695, 4294901760
        %697 = vmatpush1.msra.mxu0 %v696
        %698 = vmatprep.subr.mxu0 0.0
        %v699 = vand.u32 %v467, 4294901760
        %v700 = vsub.f32 %v467, %v699
        %v701 = vand.u32 %v700, 4294901760
        %v702 = vsub.f32 %v700, %v701
        %v703 = vand.u32 %v702, 4294901760
        %704 = vmatpush1.msra.mxu0 %v703
        %705 = vmatprep.subr.mxu0 0.0
        %v706 = vand.u32 %v468, 4294901760
        %v707 = vsub.f32 %v468, %v706
        %v708 = vand.u32 %v707, 4294901760
        %v709 = vsub.f32 %v707, %v708
        %v710 = vand.u32 %v709, 4294901760
        %711 = vmatpush1.msra.mxu0 %v710
        %712 = vmatprep.subr.mxu0 0.0
        %v713 = vand.u32 %v469, 4294901760
        %v714 = vsub.f32 %v469, %v713
        %v715 = vand.u32 %v714, 4294901760
        %v716 = vsub.f32 %v714, %v715
        %v717 = vand.u32 %v716, 4294901760
        %718 = vmatpush1.msra.mxu0 %v717
        %719 = vmatprep.subr.mxu0 0.0
        %v720 = vand.u32 %v470, 4294901760
        %v721 = vsub.f32 %v470, %v720
        %v722 = vand.u32 %v721, 4294901760
        %v723 = vsub.f32 %v721, %v722
        %v724 = vand.u32 %v723, 4294901760
        %725 = vmatpush1.msra.mxu0 %v724
        %726 = vmatprep.subr.mxu0 0.0
        %727 = vmatpush1.msra.mxu0 0.0
        %728 = vmatprep.subr.mxu0 0.0
        %729 = vmatpush1.msra.mxu0 0.0
        %730 = vmatprep.subr.mxu0 0.0
        %731 = vmatpush1.msra.mxu0 0.0
        %732 = vmatprep.subr.mxu0 0.0
        %733 = vmatpush1.msra.mxu0 0.0
        %734 = vmatprep.subr.mxu0 0.0
        %735 = vmatpush1.msra.mxu0 0.0
        %736 = vmatprep.subr.mxu0 0.0
        %737 = vmatpush1.msra.mxu0 0.0
        %738 = vmatprep.subr.mxu0 0.0
        %739 = vmatpush1.msra.mxu0 0.0
        %740 = vmatprep.subr.mxu0 0.0
        %741 = vmatpush1.msra.mxu0 0.0
        %742 = vmatprep.subr.mxu0 0.0
        %743 = vmatpush1.msra.mxu0 0.0
        %744 = vmatprep.subr.mxu0 0.0
        %745 = vmatpush1.msra.mxu0 0.0
        %746 = vmatprep.subr.mxu0 0.0
        %747 = vmatpush1.msra.mxu0 0.0
        %748 = vmatprep.subr.mxu0 0.0
        %749 = vmatpush1.msra.mxu0 0.0
        %750 = vmatprep.subr.mxu0 0.0
        %751 = vmatpush1.msra.mxu0 0.0
        %752 = vmatprep.subr.mxu0 0.0
        %753 = vmatpush1.msra.mxu0 0.0
        %754 = vmatprep.subr.mxu0 0.0
        %755 = vmatpush1.msra.mxu0 0.0
        %756 = vmatprep.subr.mxu0 0.0
        %757 = vmatpush1.msra.mxu0 0.0
        %758 = vmatprep.mubr.f32.mxu0 0.0
        %v759 = vand.u32 %v511, 4294901760
        %760 = vmatmul.mubr.f32.gmra.mrb[0].mxu0 %v759
        %v761 = vpop.f32.mrb[0].mxu0
        %v762 = vadd.f32 %v601, %v761
        %v763 = vpop.f32.mrb[0].mxu0
        %764 = vmatprep.mubr.f32.mxu0 0.0
        %v765 = vand.u32 %v512, 4294901760
        %766 = vmatmul.mubr.f32.gmra.mrb[0].mxu0 %v765
        %v767 = vpop.f32.mrb[0].mxu0
        %v768 = vadd.f32 %v611, %v767
        %v769 = vpop.f32.mrb[0].mxu0
        %770 = vdwg.mxu0
        %771 = vmatprep.subr.mxu0 0.0
        %v772 = vand.u32 %v455, 4294901760
        %v773 = vsub.f32 %v455, %v772
        %774 = vmatpush1.msra.mxu0 %v773
        %775 = vmatprep.subr.mxu0 0.0
        %v776 = vand.u32 %v456, 4294901760
        %v777 = vsub.f32 %v456, %v776
        %778 = vmatpush1.msra.mxu0 %v777
        %779 = vmatprep.subr.mxu0 0.0
        %v780 = vand.u32 %v457, 4294901760
        %v781 = vsub.f32 %v457, %v780
        %782 = vmatpush1.msra.mxu0 %v781
        %783 = vmatprep.subr.mxu0 0.0
        %v784 = vand.u32 %v458, 4294901760
        %v785 = vsub.f32 %v458, %v784
        %786 = vmatpush1.msra.mxu0 %v785
        %787 = vmatprep.subr.mxu0 0.0
        %v788 = vand.u32 %v459, 4294901760
        %v789 = vsub.f32 %v459, %v788
        %790 = vmatpush1.msra.mxu0 %v789
        %791 = vmatprep.subr.mxu0 0.0
        %v792 = vand.u32 %v460, 4294901760
        %v793 = vsub.f32 %v460, %v792
        %794 = vmatpush1.msra.mxu0 %v793
        %795 = vmatprep.subr.mxu0 0.0
        %v796 = vand.u32 %v461, 4294901760
        %v797 = vsub.f32 %v461, %v796
        %798 = vmatpush1.msra.mxu0 %v797
        %799 = vmatprep.subr.mxu0 0.0
        %v800 = vand.u32 %v462, 4294901760
        %v801 = vsub.f32 %v462, %v800
        %802 = vmatpush1.msra.mxu0 %v801
        %803 = vmatprep.subr.mxu0 0.0
        %v804 = vand.u32 %v463, 4294901760
        %v805 = vsub.f32 %v463, %v804
        %806 = vmatpush1.msra.mxu0 %v805
        %807 = vmatprep.subr.mxu0 0.0
        %v808 = vand.u32 %v464, 4294901760
        %v809 = vsub.f32 %v464, %v808
        %810 = vmatpush1.msra.mxu0 %v809
        %811 = vmatprep.subr.mxu0 0.0
        %v812 = vand.u32 %v465, 4294901760
        %v813 = vsub.f32 %v465, %v812
        %814 = vmatpush1.msra.mxu0 %v813
        %815 = vmatprep.subr.mxu0 0.0
        %v816 = vand.u32 %v466, 4294901760
        %v817 = vsub.f32 %v466, %v816
        %818 = vmatpush1.msra.mxu0 %v817
        %819 = vmatprep.subr.mxu0 0.0
        %v820 = vand.u32 %v467, 4294901760
        %v821 = vsub.f32 %v467, %v820
        %822 = vmatpush1.msra.mxu0 %v821
        %823 = vmatprep.subr.mxu0 0.0
        %v824 = vand.u32 %v468, 4294901760
        %v825 = vsub.f32 %v468, %v824
        %826 = vmatpush1.msra.mxu0 %v825
        %827 = vmatprep.subr.mxu0 0.0
        %v828 = vand.u32 %v469, 4294901760
        %v829 = vsub.f32 %v469, %v828
        %830 = vmatpush1.msra.mxu0 %v829
        %831 = vmatprep.subr.mxu0 0.0
        %v832 = vand.u32 %v470, 4294901760
        %v833 = vsub.f32 %v470, %v832
        %834 = vmatpush1.msra.mxu0 %v833
        %835 = vmatprep.subr.mxu0 0.0
        %836 = vmatpush1.msra.mxu0 0.0
        %837 = vmatprep.subr.mxu0 0.0
        %838 = vmatpush1.msra.mxu0 0.0
        %839 = vmatprep.subr.mxu0 0.0
        %840 = vmatpush1.msra.mxu0 0.0
        %841 = vmatprep.subr.mxu0 0.0
        %842 = vmatpush1.msra.mxu0 0.0
        %843 = vmatprep.subr.mxu0 0.0
        %844 = vmatpush1.msra.mxu0 0.0
        %845 = vmatprep.subr.mxu0 0.0
        %846 = vmatpush1.msra.mxu0 0.0
        %847 = vmatprep.subr.mxu0 0.0
        %848 = vmatpush1.msra.mxu0 0.0
        %849 = vmatprep.subr.mxu0 0.0
        %850 = vmatpush1.msra.mxu0 0.0
        %851 = vmatprep.subr.mxu0 0.0
        %852 = vmatpush1.msra.mxu0 0.0
        %853 = vmatprep.subr.mxu0 0.0
        %854 = vmatpush1.msra.mxu0 0.0
        %855 = vmatprep.subr.mxu0 0.0
        %856 = vmatpush1.msra.mxu0 0.0
        %857 = vmatprep.subr.mxu0 0.0
        %858 = vmatpush1.msra.mxu0 0.0
        %859 = vmatprep.subr.mxu0 0.0
        %860 = vmatpush1.msra.mxu0 0.0
        %861 = vmatprep.subr.mxu0 0.0
        %862 = vmatpush1.msra.mxu0 0.0
        %863 = vmatprep.subr.mxu0 0.0
        %864 = vmatpush1.msra.mxu0 0.0
        %865 = vmatprep.subr.mxu0 0.0
        %866 = vmatpush1.msra.mxu0 0.0
        %867 = vmatprep.mubr.f32.mxu0 0.0
        %v868 = vand.u32 %v511, 4294901760
        %v869 = vsub.f32 %v511, %v868
        %870 = vmatmul.mubr.f32.gmra.mrb[0].mxu0 %v869
        %v871 = vpop.f32.mrb[0].mxu0
        %v872 = vadd.f32 %v762, %v871
        %v873 = vpop.f32.mrb[0].mxu0
        %874 = vmatprep.mubr.f32.mxu0 0.0
        %v875 = vand.u32 %v512, 4294901760
        %v876 = vsub.f32 %v512, %v875
        %877 = vmatmul.mubr.f32.gmra.mrb[0].mxu0 %v876
        %v878 = vpop.f32.mrb[0].mxu0
        %v879 = vadd.f32 %v768, %v878
        %v880 = vpop.f32.mrb[0].mxu0
        %881 = vdwg.mxu0
        %882 = vmatprep.subr.mxu0 0.0
        %v883 = vand.u32 %v455, 4294901760
        %884 = vmatpush1.msra.mxu0 %v883
        %885 = vmatprep.subr.mxu0 0.0
        %v886 = vand.u32 %v456, 4294901760
        %887 = vmatpush1.msra.mxu0 %v886
        %888 = vmatprep.subr.mxu0 0.0
        %v889 = vand.u32 %v457, 4294901760
        %890 = vmatpush1.msra.mxu0 %v889
        %891 = vmatprep.subr.mxu0 0.0
        %v892 = vand.u32 %v458, 4294901760
        %893 = vmatpush1.msra.mxu0 %v892
        %894 = vmatprep.subr.mxu0 0.0
        %v895 = vand.u32 %v459, 4294901760
        %896 = vmatpush1.msra.mxu0 %v895
        %897 = vmatprep.subr.mxu0 0.0
        %v898 = vand.u32 %v460, 4294901760
        %899 = vmatpush1.msra.mxu0 %v898
        %900 = vmatprep.subr.mxu0 0.0
        %v901 = vand.u32 %v461, 4294901760
        %902 = vmatpush1.msra.mxu0 %v901
        %903 = vmatprep.subr.mxu0 0.0
        %v904 = vand.u32 %v462, 4294901760
        %905 = vmatpush1.msra.mxu0 %v904
        %906 = vmatprep.subr.mxu0 0.0
        %v907 = vand.u32 %v463, 4294901760
        %908 = vmatpush1.msra.mxu0 %v907
        %909 = vmatprep.subr.mxu0 0.0
        %v910 = vand.u32 %v464, 4294901760
        %911 = vmatpush1.msra.mxu0 %v910
        %912 = vmatprep.subr.mxu0 0.0
        %v913 = vand.u32 %v465, 4294901760
        %914 = vmatpush1.msra.mxu0 %v913
        %915 = vmatprep.subr.mxu0 0.0
        %v916 = vand.u32 %v466, 4294901760
        %917 = vmatpush1.msra.mxu0 %v916
        %918 = vmatprep.subr.mxu0 0.0
        %v919 = vand.u32 %v467, 4294901760
        %920 = vmatpush1.msra.mxu0 %v919
        %921 = vmatprep.subr.mxu0 0.0
        %v922 = vand.u32 %v468, 4294901760
        %923 = vmatpush1.msra.mxu0 %v922
        %924 = vmatprep.subr.mxu0 0.0
        %v925 = vand.u32 %v469, 4294901760
        %926 = vmatpush1.msra.mxu0 %v925
        %927 = vmatprep.subr.mxu0 0.0
        %v928 = vand.u32 %v470, 4294901760
        %929 = vmatpush1.msra.mxu0 %v928
        %930 = vmatprep.subr.mxu0 0.0
        %931 = vmatpush1.msra.mxu0 0.0
        %932 = vmatprep.subr.mxu0 0.0
        %933 = vmatpush1.msra.mxu0 0.0
        %934 = vmatprep.subr.mxu0 0.0
        %935 = vmatpush1.msra.mxu0 0.0
        %936 = vmatprep.subr.mxu0 0.0
        %937 = vmatpush1.msra.mxu0 0.0
        %938 = vmatprep.subr.mxu0 0.0
        %939 = vmatpush1.msra.mxu0 0.0
        %940 = vmatprep.subr.mxu0 0.0
        %941 = vmatpush1.msra.mxu0 0.0
        %942 = vmatprep.subr.mxu0 0.0
        %943 = vmatpush1.msra.mxu0 0.0
        %944 = vmatprep.subr.mxu0 0.0
        %945 = vmatpush1.msra.mxu0 0.0
        %946 = vmatprep.subr.mxu0 0.0
        %947 = vmatpush1.msra.mxu0 0.0
        %948 = vmatprep.subr.mxu0 0.0
        %949 = vmatpush1.msra.mxu0 0.0
        %950 = vmatprep.subr.mxu0 0.0
        %951 = vmatpush1.msra.mxu0 0.0
        %952 = vmatprep.subr.mxu0 0.0
        %953 = vmatpush1.msra.mxu0 0.0
        %954 = vmatprep.subr.mxu0 0.0
        %955 = vmatpush1.msra.mxu0 0.0
        %956 = vmatprep.subr.mxu0 0.0
        %957 = vmatpush1.msra.mxu0 0.0
        %958 = vmatprep.subr.mxu0 0.0
        %959 = vmatpush1.msra.mxu0 0.0
        %960 = vmatprep.subr.mxu0 0.0
        %961 = vmatpush1.msra.mxu0 0.0
        %962 = vmatprep.mubr.f32.mxu0 0.0
        %v963 = vand.u32 %v511, 4294901760
        %v964 = vsub.f32 %v511, %v963
        %v965 = vand.u32 %v964, 4294901760
        %966 = vmatmul.mubr.f32.gmra.mrb[0].mxu0 %v965
        %v967 = vpop.f32.mrb[0].mxu0
        %v968 = vadd.f32 %v872, %v967
        %v969 = vpop.f32.mrb[0].mxu0
        %970 = vmatprep.mubr.f32.mxu0 0.0
        %v971 = vand.u32 %v512, 4294901760
        %v972 = vsub.f32 %v512, %v971
        %v973 = vand.u32 %v972, 4294901760
        %974 = vmatmul.mubr.f32.gmra.mrb[0].mxu0 %v973
        %v975 = vpop.f32.mrb[0].mxu0
        %v976 = vadd.f32 %v879, %v975
        %v977 = vpop.f32.mrb[0].mxu0
        %978 = vdwg.mxu0
        %979 = vmatprep.subr.mxu0 0.0
        %v980 = vand.u32 %v455, 4294901760
        %v981 = vsub.f32 %v455, %v980
        %v982 = vand.u32 %v981, 4294901760
        %983 = vmatpush1.msra.mxu0 %v982
        %984 = vmatprep.subr.mxu0 0.0
        %v985 = vand.u32 %v456, 4294901760
        %v986 = vsub.f32 %v456, %v985
        %v987 = vand.u32 %v986, 4294901760
        %988 = vmatpush1.msra.mxu0 %v987
        %989 = vmatprep.subr.mxu0 0.0
        %v990 = vand.u32 %v457, 4294901760
        %v991 = vsub.f32 %v457, %v990
        %v992 = vand.u32 %v991, 4294901760
        %993 = vmatpush1.msra.mxu0 %v992
        %994 = vmatprep.subr.mxu0 0.0
        %v995 = vand.u32 %v458, 4294901760
        %v996 = vsub.f32 %v458, %v995
        %v997 = vand.u32 %v996, 4294901760
        %998 = vmatpush1.msra.mxu0 %v997
        %999 = vmatprep.subr.mxu0 0.0
        %v1000 = vand.u32 %v459, 4294901760
        %v1001 = vsub.f32 %v459, %v1000
        %v1002 = vand.u32 %v1001, 4294901760
        %1003 = vmatpush1.msra.mxu0 %v1002
        %1004 = vmatprep.subr.mxu0 0.0
        %v1005 = vand.u32 %v460, 4294901760
        %v1006 = vsub.f32 %v460, %v1005
        %v1007 = vand.u32 %v1006, 4294901760
        %1008 = vmatpush1.msra.mxu0 %v1007
        %1009 = vmatprep.subr.mxu0 0.0
        %v1010 = vand.u32 %v461, 4294901760
        %v1011 = vsub.f32 %v461, %v1010
        %v1012 = vand.u32 %v1011, 4294901760
        %1013 = vmatpush1.msra.mxu0 %v1012
        %1014 = vmatprep.subr.mxu0 0.0
        %v1015 = vand.u32 %v462, 4294901760
        %v1016 = vsub.f32 %v462, %v1015
        %v1017 = vand.u32 %v1016, 4294901760
        %1018 = vmatpush1.msra.mxu0 %v1017
        %1019 = vmatprep.subr.mxu0 0.0
        %v1020 = vand.u32 %v463, 4294901760
        %v1021 = vsub.f32 %v463, %v1020
        %v1022 = vand.u32 %v1021, 4294901760
        %1023 = vmatpush1.msra.mxu0 %v1022
        %1024 = vmatprep.subr.mxu0 0.0
        %v1025 = vand.u32 %v464, 4294901760
        %v1026 = vsub.f32 %v464, %v1025
        %v1027 = vand.u32 %v1026, 4294901760
        %1028 = vmatpush1.msra.mxu0 %v1027
        %1029 = vmatprep.subr.mxu0 0.0
        %v1030 = vand.u32 %v465, 4294901760
        %v1031 = vsub.f32 %v465, %v1030
        %v1032 = vand.u32 %v1031, 4294901760
        %1033 = vmatpush1.msra.mxu0 %v1032
        %1034 = vmatprep.subr.mxu0 0.0
        %v1035 = vand.u32 %v466, 4294901760
        %v1036 = vsub.f32 %v466, %v1035
        %v1037 = vand.u32 %v1036, 4294901760
        %1038 = vmatpush1.msra.mxu0 %v1037
        %1039 = vmatprep.subr.mxu0 0.0
        %v1040 = vand.u32 %v467, 4294901760
        %v1041 = vsub.f32 %v467, %v1040
        %v1042 = vand.u32 %v1041, 4294901760
        %1043 = vmatpush1.msra.mxu0 %v1042
        %1044 = vmatprep.subr.mxu0 0.0
        %v1045 = vand.u32 %v468, 4294901760
        %v1046 = vsub.f32 %v468, %v1045
        %v1047 = vand.u32 %v1046, 4294901760
        %1048 = vmatpush1.msra.mxu0 %v1047
        %1049 = vmatprep.subr.mxu0 0.0
        %v1050 = vand.u32 %v469, 4294901760
        %v1051 = vsub.f32 %v469, %v1050
        %v1052 = vand.u32 %v1051, 4294901760
        %1053 = vmatpush1.msra.mxu0 %v1052
        %1054 = vmatprep.subr.mxu0 0.0
        %v1055 = vand.u32 %v470, 4294901760
        %v1056 = vsub.f32 %v470, %v1055
        %v1057 = vand.u32 %v1056, 4294901760
        %1058 = vmatpush1.msra.mxu0 %v1057
        %1059 = vmatprep.subr.mxu0 0.0
        %1060 = vmatpush1.msra.mxu0 0.0
        %1061 = vmatprep.subr.mxu0 0.0
        %1062 = vmatpush1.msra.mxu0 0.0
        %1063 = vmatprep.subr.mxu0 0.0
        %1064 = vmatpush1.msra.mxu0 0.0
        %1065 = vmatprep.subr.mxu0 0.0
        %1066 = vmatpush1.msra.mxu0 0.0
        %1067 = vmatprep.subr.mxu0 0.0
        %1068 = vmatpush1.msra.mxu0 0.0
        %1069 = vmatprep.subr.mxu0 0.0
        %1070 = vmatpush1.msra.mxu0 0.0
        %1071 = vmatprep.subr.mxu0 0.0
        %1072 = vmatpush1.msra.mxu0 0.0
        %1073 = vmatprep.subr.mxu0 0.0
        %1074 = vmatpush1.msra.mxu0 0.0
        %1075 = vmatprep.subr.mxu0 0.0
        %1076 = vmatpush1.msra.mxu0 0.0
        %1077 = vmatprep.subr.mxu0 0.0
        %1078 = vmatpush1.msra.mxu0 0.0
        %1079 = vmatprep.subr.mxu0 0.0
        %1080 = vmatpush1.msra.mxu0 0.0
        %1081 = vmatprep.subr.mxu0 0.0
        %1082 = vmatpush1.msra.mxu0 0.0
        %1083 = vmatprep.subr.mxu0 0.0
        %1084 = vmatpush1.msra.mxu0 0.0
        %1085 = vmatprep.subr.mxu0 0.0
        %1086 = vmatpush1.msra.mxu0 0.0
        %1087 = vmatprep.subr.mxu0 0.0
        %1088 = vmatpush1.msra.mxu0 0.0
        %1089 = vmatprep.subr.mxu0 0.0
        %1090 = vmatpush1.msra.mxu0 0.0
        %1091 = vmatprep.mubr.f32.mxu0 0.0
        %v1092 = vand.u32 %v511, 4294901760
        %1093 = vmatmul.mubr.f32.gmra.mrb[0].mxu0 %v1092
        %v1094 = vpop.f32.mrb[0].mxu0
        %v1095 = vadd.f32 %v968, %v1094
        %v1096 = vpop.f32.mrb[0].mxu0
        %1097 = vmatprep.mubr.f32.mxu0 0.0
        %v1098 = vand.u32 %v512, 4294901760
        %1099 = vmatmul.mubr.f32.gmra.mrb[0].mxu0 %v1098
        %v1100 = vpop.f32.mrb[0].mxu0
        %v1101 = vadd.f32 %v976, %v1100
        %v1102 = vpop.f32.mrb[0].mxu0
        %1103 = vdwg.mxu0
        %1104 = vmatprep.subr.mxu0 0.0
        %v1105 = vand.u32 %v455, 4294901760
        %1106 = vmatpush1.msra.mxu0 %v1105
        %1107 = vmatprep.subr.mxu0 0.0
        %v1108 = vand.u32 %v456, 4294901760
        %1109 = vmatpush1.msra.mxu0 %v1108
        %1110 = vmatprep.subr.mxu0 0.0
        %v1111 = vand.u32 %v457, 4294901760
        %1112 = vmatpush1.msra.mxu0 %v1111
        %1113 = vmatprep.subr.mxu0 0.0
        %v1114 = vand.u32 %v458, 4294901760
        %1115 = vmatpush1.msra.mxu0 %v1114
        %1116 = vmatprep.subr.mxu0 0.0
        %v1117 = vand.u32 %v459, 4294901760
        %1118 = vmatpush1.msra.mxu0 %v1117
        %1119 = vmatprep.subr.mxu0 0.0
        %v1120 = vand.u32 %v460, 4294901760
        %1121 = vmatpush1.msra.mxu0 %v1120
        %1122 = vmatprep.subr.mxu0 0.0
        %v1123 = vand.u32 %v461, 4294901760
        %1124 = vmatpush1.msra.mxu0 %v1123
        %1125 = vmatprep.subr.mxu0 0.0
        %v1126 = vand.u32 %v462, 4294901760
        %1127 = vmatpush1.msra.mxu0 %v1126
        %1128 = vmatprep.subr.mxu0 0.0
        %v1129 = vand.u32 %v463, 4294901760
        %1130 = vmatpush1.msra.mxu0 %v1129
        %1131 = vmatprep.subr.mxu0 0.0
        %v1132 = vand.u32 %v464, 4294901760
        %1133 = vmatpush1.msra.mxu0 %v1132
        %1134 = vmatprep.subr.mxu0 0.0
        %v1135 = vand.u32 %v465, 4294901760
        %1136 = vmatpush1.msra.mxu0 %v1135
        %1137 = vmatprep.subr.mxu0 0.0
        %v1138 = vand.u32 %v466, 4294901760
        %1139 = vmatpush1.msra.mxu0 %v1138
        %1140 = vmatprep.subr.mxu0 0.0
        %v1141 = vand.u32 %v467, 4294901760
        %1142 = vmatpush1.msra.mxu0 %v1141
        %1143 = vmatprep.subr.mxu0 0.0
        %v1144 = vand.u32 %v468, 4294901760
        %1145 = vmatpush1.msra.mxu0 %v1144
        %1146 = vmatprep.subr.mxu0 0.0
        %v1147 = vand.u32 %v469, 4294901760
        %1148 = vmatpush1.msra.mxu0 %v1147
        %1149 = vmatprep.subr.mxu0 0.0
        %v1150 = vand.u32 %v470, 4294901760
        %1151 = vmatpush1.msra.mxu0 %v1150
        %1152 = vmatprep.subr.mxu0 0.0
        %1153 = vmatpush1.msra.mxu0 0.0
        %1154 = vmatprep.subr.mxu0 0.0
        %1155 = vmatpush1.msra.mxu0 0.0
        %1156 = vmatprep.subr.mxu0 0.0
        %1157 = vmatpush1.msra.mxu0 0.0
        %1158 = vmatprep.subr.mxu0 0.0
        %1159 = vmatpush1.msra.mxu0 0.0
        %1160 = vmatprep.subr.mxu0 0.0
        %1161 = vmatpush1.msra.mxu0 0.0
        %1162 = vmatprep.subr.mxu0 0.0
        %1163 = vmatpush1.msra.mxu0 0.0
        %1164 = vmatprep.subr.mxu0 0.0
        %1165 = vmatpush1.msra.mxu0 0.0
        %1166 = vmatprep.subr.mxu0 0.0
        %1167 = vmatpush1.msra.mxu0 0.0
        %1168 = vmatprep.subr.mxu0 0.0
        %1169 = vmatpush1.msra.mxu0 0.0
        %1170 = vmatprep.subr.mxu0 0.0
        %1171 = vmatpush1.msra.mxu0 0.0
        %1172 = vmatprep.subr.mxu0 0.0
        %1173 = vmatpush1.msra.mxu0 0.0
        %1174 = vmatprep.subr.mxu0 0.0
        %1175 = vmatpush1.msra.mxu0 0.0
        %1176 = vmatprep.subr.mxu0 0.0
        %1177 = vmatpush1.msra.mxu0 0.0
        %1178 = vmatprep.subr.mxu0 0.0
        %1179 = vmatpush1.msra.mxu0 0.0
        %1180 = vmatprep.subr.mxu0 0.0
        %1181 = vmatpush1.msra.mxu0 0.0
        %1182 = vmatprep.subr.mxu0 0.0
        %1183 = vmatpush1.msra.mxu0 0.0
        %1184 = vmatprep.mubr.f32.mxu0 0.0
        %v1185 = vand.u32 %v511, 4294901760
        %1186 = vmatmul.mubr.f32.gmra.mrb[0].mxu0 %v1185
        %v1187 = vpop.f32.mrb[0].mxu0
        %v1188 = vadd.f32 %v1095, %v1187
        %v1189 = vpop.f32.mrb[0].mxu0
        %1190 = vmatprep.mubr.f32.mxu0 0.0
        %v1191 = vand.u32 %v512, 4294901760
        %1192 = vmatmul.mubr.f32.gmra.mrb[0].mxu0 %v1191
        %v1193 = vpop.f32.mrb[0].mxu0
        %v1194 = vadd.f32 %v1101, %v1193
        %v1195 = vpop.f32.mrb[0].mxu0
        %1196 = vdwg.mxu0
        %v1197 = vsel %vm507, inf, %v451
        %v1198 = vsel %vm508, inf, %v452
        %1199 = vmin.xlane.f32.xlu0 %v1197
        %v1200 = vpop.xlane.xlu0 %1199
        %1201 = vmin.xlane.f32.xlu0 %v1198
        %v1202 = vpop.xlane.xlu0 %1201
        %vm1203 = vcmp.eq.f32.partialorder %v1197, %v1200
        %vm1204 = vcmp.eq.f32.partialorder %v1198, %v1202
        %v1205 = vsel %vm1203, %v454, 128
        %v1206 = vsel %vm1204, %v454, 128
        %v1207 = vand.u32 %v1205, 65535
        %v1208 = vshra.s32 %v1205, 16
        %v1209 = vcvt.s32.f32 %v1207
        %v1210 = vcvt.s32.f32 %v1208
        %1211 = vmin.xlane.f32.xlu0 %v1210
        %v1212 = vpop.xlane.xlu0 %1211
        %vm1213 = vcmp.eq.f32.partialorder %v1210, %v1212
        %v1214 = vsel %vm1213, %v1209, inf
        %1215 = vmin.xlane.f32.xlu0 %v1214
        %v1216 = vpop.xlane.xlu0 %1215
        %v1217 = vcvt.f32.s32 %v1216
        %v1218 = vcvt.f32.s32 %v1212
        %v1219 = vshll.u32 %v1218, 16
        %v1220 = vadd.s32 %v1219, %v1217
        %v1221 = vand.u32 %v1206, 65535
        %v1222 = vshra.s32 %v1206, 16
        %v1223 = vcvt.s32.f32 %v1221
        %v1224 = vcvt.s32.f32 %v1222
        %1225 = vmin.xlane.f32.xlu0 %v1224
        %v1226 = vpop.xlane.xlu0 %1225
        %vm1227 = vcmp.eq.f32.partialorder %v1224, %v1226
        %v1228 = vsel %vm1227, %v1223, inf
        %1229 = vmin.xlane.f32.xlu0 %v1228
        %v1230 = vpop.xlane.xlu0 %1229
        %v1231 = vcvt.f32.s32 %v1230
        %v1232 = vcvt.f32.s32 %v1226
        %v1233 = vshll.u32 %v1232, 16
        %v1234 = vadd.s32 %v1233, %v1231
        %vm1235 = vcmp.eq.s32.totalorder %v454, %v1220
        %vm1236 = vcmp.eq.s32.totalorder %v454, %v1234
        %v1237 = vsel %vm1235, 1, 0
        %v1238 = vsel %vm1236, 1, 0
        %v1239 = vcvt.s32.f32 %v1237
        %v1240 = vcvt.s32.f32 %v1238
        %1241 = vmatprep.subr.mxu0 0.0
        %v1242 = vand.u32 %v455, 4294901760
        %1243 = vmatpush1.msra.mxu0 %v1242
        %1244 = vmatprep.subr.mxu0 0.0
        %v1245 = vand.u32 %v456, 4294901760
        %1246 = vmatpush1.msra.mxu0 %v1245
        %1247 = vmatprep.subr.mxu0 0.0
        %v1248 = vand.u32 %v457, 4294901760
        %1249 = vmatpush1.msra.mxu0 %v1248
        %1250 = vmatprep.subr.mxu0 0.0
        %v1251 = vand.u32 %v458, 4294901760
        %1252 = vmatpush1.msra.mxu0 %v1251
        %1253 = vmatprep.subr.mxu0 0.0
        %v1254 = vand.u32 %v459, 4294901760
        %1255 = vmatpush1.msra.mxu0 %v1254
        %1256 = vmatprep.subr.mxu0 0.0
        %v1257 = vand.u32 %v460, 4294901760
        %1258 = vmatpush1.msra.mxu0 %v1257
        %1259 = vmatprep.subr.mxu0 0.0
        %v1260 = vand.u32 %v461, 4294901760
        %1261 = vmatpush1.msra.mxu0 %v1260
        %1262 = vmatprep.subr.mxu0 0.0
        %v1263 = vand.u32 %v462, 4294901760
        %1264 = vmatpush1.msra.mxu0 %v1263
        %1265 = vmatprep.subr.mxu0 0.0
        %v1266 = vand.u32 %v463, 4294901760
        %1267 = vmatpush1.msra.mxu0 %v1266
        %1268 = vmatprep.subr.mxu0 0.0
        %v1269 = vand.u32 %v464, 4294901760
        %1270 = vmatpush1.msra.mxu0 %v1269
        %1271 = vmatprep.subr.mxu0 0.0
        %v1272 = vand.u32 %v465, 4294901760
        %1273 = vmatpush1.msra.mxu0 %v1272
        %1274 = vmatprep.subr.mxu0 0.0
        %v1275 = vand.u32 %v466, 4294901760
        %1276 = vmatpush1.msra.mxu0 %v1275
        %1277 = vmatprep.subr.mxu0 0.0
        %v1278 = vand.u32 %v467, 4294901760
        %1279 = vmatpush1.msra.mxu0 %v1278
        %1280 = vmatprep.subr.mxu0 0.0
        %v1281 = vand.u32 %v468, 4294901760
        %1282 = vmatpush1.msra.mxu0 %v1281
        %1283 = vmatprep.subr.mxu0 0.0
        %v1284 = vand.u32 %v469, 4294901760
        %1285 = vmatpush1.msra.mxu0 %v1284
        %1286 = vmatprep.subr.mxu0 0.0
        %v1287 = vand.u32 %v470, 4294901760
        %1288 = vmatpush1.msra.mxu0 %v1287
        %1289 = vmatprep.subr.mxu0 0.0
        %1290 = vmatpush1.msra.mxu0 0.0
        %1291 = vmatprep.subr.mxu0 0.0
        %1292 = vmatpush1.msra.mxu0 0.0
        %1293 = vmatprep.subr.mxu0 0.0
        %1294 = vmatpush1.msra.mxu0 0.0
        %1295 = vmatprep.subr.mxu0 0.0
        %1296 = vmatpush1.msra.mxu0 0.0
        %1297 = vmatprep.subr.mxu0 0.0
        %1298 = vmatpush1.msra.mxu0 0.0
        %1299 = vmatprep.subr.mxu0 0.0
        %1300 = vmatpush1.msra.mxu0 0.0
        %1301 = vmatprep.subr.mxu0 0.0
        %1302 = vmatpush1.msra.mxu0 0.0
        %1303 = vmatprep.subr.mxu0 0.0
        %1304 = vmatpush1.msra.mxu0 0.0
        %1305 = vmatprep.subr.mxu0 0.0
        %1306 = vmatpush1.msra.mxu0 0.0
        %1307 = vmatprep.subr.mxu0 0.0
        %1308 = vmatpush1.msra.mxu0 0.0
        %1309 = vmatprep.subr.mxu0 0.0
        %1310 = vmatpush1.msra.mxu0 0.0
        %1311 = vmatprep.subr.mxu0 0.0
        %1312 = vmatpush1.msra.mxu0 0.0
        %1313 = vmatprep.subr.mxu0 0.0
        %1314 = vmatpush1.msra.mxu0 0.0
        %1315 = vmatprep.subr.mxu0 0.0
        %1316 = vmatpush1.msra.mxu0 0.0
        %1317 = vmatprep.subr.mxu0 0.0
        %1318 = vmatpush1.msra.mxu0 0.0
        %1319 = vmatprep.subr.mxu0 0.0
        %1320 = vmatpush1.msra.mxu0 0.0
        %1321 = vmatprep.mubr.f32.mxu0 0.0
        %v1322 = vand.u32 %v1239, 4294901760
        %v1323 = vsub.f32 %v1239, %v1322
        %v1324 = vand.u32 %v1323, 4294901760
        %v1325 = vsub.f32 %v1323, %v1324
        %v1326 = vand.u32 %v1325, 4294901760
        %1327 = vmatmul.mubr.f32.gmra.mrb[0].mxu0 %v1326
        %v1328 = vpop.f32.mrb[0].mxu0
        %v1329 = vadd.f32 0.0, %v1328
        %v1330 = vpop.f32.mrb[0].mxu0
        %1331 = vmatprep.mubr.f32.mxu0 0.0
        %v1332 = vand.u32 %v1240, 4294901760
        %v1333 = vsub.f32 %v1240, %v1332
        %v1334 = vand.u32 %v1333, 4294901760
        %v1335 = vsub.f32 %v1333, %v1334
        %v1336 = vand.u32 %v1335, 4294901760
        %1337 = vmatmul.mubr.f32.gmra.mrb[0].mxu0 %v1336
        %v1338 = vpop.f32.mrb[0].mxu0
        %v1339 = vadd.f32 0.0, %v1338
        %v1340 = vpop.f32.mrb[0].mxu0
        %1341 = vdwg.mxu0
        %1342 = vmatprep.subr.mxu0 0.0
        %v1343 = vand.u32 %v455, 4294901760
        %v1344 = vsub.f32 %v455, %v1343
        %v1345 = vand.u32 %v1344, 4294901760
        %v1346 = vsub.f32 %v1344, %v1345
        %v1347 = vand.u32 %v1346, 4294901760
        %1348 = vmatpush1.msra.mxu0 %v1347
        %1349 = vmatprep.subr.mxu0 0.0
        %v1350 = vand.u32 %v456, 4294901760
        %v1351 = vsub.f32 %v456, %v1350
        %v1352 = vand.u32 %v1351, 4294901760
        %v1353 = vsub.f32 %v1351, %v1352
        %v1354 = vand.u32 %v1353, 4294901760
        %1355 = vmatpush1.msra.mxu0 %v1354
        %1356 = vmatprep.subr.mxu0 0.0
        %v1357 = vand.u32 %v457, 4294901760
        %v1358 = vsub.f32 %v457, %v1357
        %v1359 = vand.u32 %v1358, 4294901760
        %v1360 = vsub.f32 %v1358, %v1359
        %v1361 = vand.u32 %v1360, 4294901760
        %1362 = vmatpush1.msra.mxu0 %v1361
        %1363 = vmatprep.subr.mxu0 0.0
        %v1364 = vand.u32 %v458, 4294901760
        %v1365 = vsub.f32 %v458, %v1364
        %v1366 = vand.u32 %v1365, 4294901760
        %v1367 = vsub.f32 %v1365, %v1366
        %v1368 = vand.u32 %v1367, 4294901760
        %1369 = vmatpush1.msra.mxu0 %v1368
        %1370 = vmatprep.subr.mxu0 0.0
        %v1371 = vand.u32 %v459, 4294901760
        %v1372 = vsub.f32 %v459, %v1371
        %v1373 = vand.u32 %v1372, 4294901760
        %v1374 = vsub.f32 %v1372, %v1373
        %v1375 = vand.u32 %v1374, 4294901760
        %1376 = vmatpush1.msra.mxu0 %v1375
        %1377 = vmatprep.subr.mxu0 0.0
        %v1378 = vand.u32 %v460, 4294901760
        %v1379 = vsub.f32 %v460, %v1378
        %v1380 = vand.u32 %v1379, 4294901760
        %v1381 = vsub.f32 %v1379, %v1380
        %v1382 = vand.u32 %v1381, 4294901760
        %1383 = vmatpush1.msra.mxu0 %v1382
        %1384 = vmatprep.subr.mxu0 0.0
        %v1385 = vand.u32 %v461, 4294901760
        %v1386 = vsub.f32 %v461, %v1385
        %v1387 = vand.u32 %v1386, 4294901760
        %v1388 = vsub.f32 %v1386, %v1387
        %v1389 = vand.u32 %v1388, 4294901760
        %1390 = vmatpush1.msra.mxu0 %v1389
        %1391 = vmatprep.subr.mxu0 0.0
        %v1392 = vand.u32 %v462, 4294901760
        %v1393 = vsub.f32 %v462, %v1392
        %v1394 = vand.u32 %v1393, 4294901760
        %v1395 = vsub.f32 %v1393, %v1394
        %v1396 = vand.u32 %v1395, 4294901760
        %1397 = vmatpush1.msra.mxu0 %v1396
        %1398 = vmatprep.subr.mxu0 0.0
        %v1399 = vand.u32 %v463, 4294901760
        %v1400 = vsub.f32 %v463, %v1399
        %v1401 = vand.u32 %v1400, 4294901760
        %v1402 = vsub.f32 %v1400, %v1401
        %v1403 = vand.u32 %v1402, 4294901760
        %1404 = vmatpush1.msra.mxu0 %v1403
        %1405 = vmatprep.subr.mxu0 0.0
        %v1406 = vand.u32 %v464, 4294901760
        %v1407 = vsub.f32 %v464, %v1406
        %v1408 = vand.u32 %v1407, 4294901760
        %v1409 = vsub.f32 %v1407, %v1408
        %v1410 = vand.u32 %v1409, 4294901760
        %1411 = vmatpush1.msra.mxu0 %v1410
        %1412 = vmatprep.subr.mxu0 0.0
        %v1413 = vand.u32 %v465, 4294901760
        %v1414 = vsub.f32 %v465, %v1413
        %v1415 = vand.u32 %v1414, 4294901760
        %v1416 = vsub.f32 %v1414, %v1415
        %v1417 = vand.u32 %v1416, 4294901760
        %1418 = vmatpush1.msra.mxu0 %v1417
        %1419 = vmatprep.subr.mxu0 0.0
        %v1420 = vand.u32 %v466, 4294901760
        %v1421 = vsub.f32 %v466, %v1420
        %v1422 = vand.u32 %v1421, 4294901760
        %v1423 = vsub.f32 %v1421, %v1422
        %v1424 = vand.u32 %v1423, 4294901760
        %1425 = vmatpush1.msra.mxu0 %v1424
        %1426 = vmatprep.subr.mxu0 0.0
        %v1427 = vand.u32 %v467, 4294901760
        %v1428 = vsub.f32 %v467, %v1427
        %v1429 = vand.u32 %v1428, 4294901760
        %v1430 = vsub.f32 %v1428, %v1429
        %v1431 = vand.u32 %v1430, 4294901760
        %1432 = vmatpush1.msra.mxu0 %v1431
        %1433 = vmatprep.subr.mxu0 0.0
        %v1434 = vand.u32 %v468, 4294901760
        %v1435 = vsub.f32 %v468, %v1434
        %v1436 = vand.u32 %v1435, 4294901760
        %v1437 = vsub.f32 %v1435, %v1436
        %v1438 = vand.u32 %v1437, 4294901760
        %1439 = vmatpush1.msra.mxu0 %v1438
        %1440 = vmatprep.subr.mxu0 0.0
        %v1441 = vand.u32 %v469, 4294901760
        %v1442 = vsub.f32 %v469, %v1441
        %v1443 = vand.u32 %v1442, 4294901760
        %v1444 = vsub.f32 %v1442, %v1443
        %v1445 = vand.u32 %v1444, 4294901760
        %1446 = vmatpush1.msra.mxu0 %v1445
        %1447 = vmatprep.subr.mxu0 0.0
        %v1448 = vand.u32 %v470, 4294901760
        %v1449 = vsub.f32 %v470, %v1448
        %v1450 = vand.u32 %v1449, 4294901760
        %v1451 = vsub.f32 %v1449, %v1450
        %v1452 = vand.u32 %v1451, 4294901760
        %1453 = vmatpush1.msra.mxu0 %v1452
        %1454 = vmatprep.subr.mxu0 0.0
        %1455 = vmatpush1.msra.mxu0 0.0
        %1456 = vmatprep.subr.mxu0 0.0
        %1457 = vmatpush1.msra.mxu0 0.0
        %1458 = vmatprep.subr.mxu0 0.0
        %1459 = vmatpush1.msra.mxu0 0.0
        %1460 = vmatprep.subr.mxu0 0.0
        %1461 = vmatpush1.msra.mxu0 0.0
        %1462 = vmatprep.subr.mxu0 0.0
        %1463 = vmatpush1.msra.mxu0 0.0
        %1464 = vmatprep.subr.mxu0 0.0
        %1465 = vmatpush1.msra.mxu0 0.0
        %1466 = vmatprep.subr.mxu0 0.0
        %1467 = vmatpush1.msra.mxu0 0.0
        %1468 = vmatprep.subr.mxu0 0.0
        %1469 = vmatpush1.msra.mxu0 0.0
        %1470 = vmatprep.subr.mxu0 0.0
        %1471 = vmatpush1.msra.mxu0 0.0
        %1472 = vmatprep.subr.mxu0 0.0
        %1473 = vmatpush1.msra.mxu0 0.0
        %1474 = vmatprep.subr.mxu0 0.0
        %1475 = vmatpush1.msra.mxu0 0.0
        %1476 = vmatprep.subr.mxu0 0.0
        %1477 = vmatpush1.msra.mxu0 0.0
        %1478 = vmatprep.subr.mxu0 0.0
        %1479 = vmatpush1.msra.mxu0 0.0
        %1480 = vmatprep.subr.mxu0 0.0
        %1481 = vmatpush1.msra.mxu0 0.0
        %1482 = vmatprep.subr.mxu0 0.0
        %1483 = vmatpush1.msra.mxu0 0.0
        %1484 = vmatprep.subr.mxu0 0.0
        %1485 = vmatpush1.msra.mxu0 0.0
        %1486 = vmatprep.mubr.f32.mxu0 0.0
        %v1487 = vand.u32 %v1239, 4294901760
        %1488 = vmatmul.mubr.f32.gmra.mrb[0].mxu0 %v1487
        %v1489 = vpop.f32.mrb[0].mxu0
        %v1490 = vadd.f32 %v1329, %v1489
        %v1491 = vpop.f32.mrb[0].mxu0
        %1492 = vmatprep.mubr.f32.mxu0 0.0
        %v1493 = vand.u32 %v1240, 4294901760
        %1494 = vmatmul.mubr.f32.gmra.mrb[0].mxu0 %v1493
        %v1495 = vpop.f32.mrb[0].mxu0
        %v1496 = vadd.f32 %v1339, %v1495
        %v1497 = vpop.f32.mrb[0].mxu0
        %1498 = vdwg.mxu0
        %1499 = vmatprep.subr.mxu0 0.0
        %v1500 = vand.u32 %v455, 4294901760
        %v1501 = vsub.f32 %v455, %v1500
        %1502 = vmatpush1.msra.mxu0 %v1501
        %1503 = vmatprep.subr.mxu0 0.0
        %v1504 = vand.u32 %v456, 4294901760
        %v1505 = vsub.f32 %v456, %v1504
        %1506 = vmatpush1.msra.mxu0 %v1505
        %1507 = vmatprep.subr.mxu0 0.0
        %v1508 = vand.u32 %v457, 4294901760
        %v1509 = vsub.f32 %v457, %v1508
        %1510 = vmatpush1.msra.mxu0 %v1509
        %1511 = vmatprep.subr.mxu0 0.0
        %v1512 = vand.u32 %v458, 4294901760
        %v1513 = vsub.f32 %v458, %v1512
        %1514 = vmatpush1.msra.mxu0 %v1513
        %1515 = vmatprep.subr.mxu0 0.0
        %v1516 = vand.u32 %v459, 4294901760
        %v1517 = vsub.f32 %v459, %v1516
        %1518 = vmatpush1.msra.mxu0 %v1517
        %1519 = vmatprep.subr.mxu0 0.0
        %v1520 = vand.u32 %v460, 4294901760
        %v1521 = vsub.f32 %v460, %v1520
        %1522 = vmatpush1.msra.mxu0 %v1521
        %1523 = vmatprep.subr.mxu0 0.0
        %v1524 = vand.u32 %v461, 4294901760
        %v1525 = vsub.f32 %v461, %v1524
        %1526 = vmatpush1.msra.mxu0 %v1525
        %1527 = vmatprep.subr.mxu0 0.0
        %v1528 = vand.u32 %v462, 4294901760
        %v1529 = vsub.f32 %v462, %v1528
        %1530 = vmatpush1.msra.mxu0 %v1529
        %1531 = vmatprep.subr.mxu0 0.0
        %v1532 = vand.u32 %v463, 4294901760
        %v1533 = vsub.f32 %v463, %v1532
        %1534 = vmatpush1.msra.mxu0 %v1533
        %1535 = vmatprep.subr.mxu0 0.0
        %v1536 = vand.u32 %v464, 4294901760
        %v1537 = vsub.f32 %v464, %v1536
        %1538 = vmatpush1.msra.mxu0 %v1537
        %1539 = vmatprep.subr.mxu0 0.0
        %v1540 = vand.u32 %v465, 4294901760
        %v1541 = vsub.f32 %v465, %v1540
        %1542 = vmatpush1.msra.mxu0 %v1541
        %1543 = vmatprep.subr.mxu0 0.0
        %v1544 = vand.u32 %v466, 4294901760
        %v1545 = vsub.f32 %v466, %v1544
        %1546 = vmatpush1.msra.mxu0 %v1545
        %1547 = vmatprep.subr.mxu0 0.0
        %v1548 = vand.u32 %v467, 4294901760
        %v1549 = vsub.f32 %v467, %v1548
        %1550 = vmatpush1.msra.mxu0 %v1549
        %1551 = vmatprep.subr.mxu0 0.0
        %v1552 = vand.u32 %v468, 4294901760
        %v1553 = vsub.f32 %v468, %v1552
        %1554 = vmatpush1.msra.mxu0 %v1553
        %1555 = vmatprep.subr.mxu0 0.0
        %v1556 = vand.u32 %v469, 4294901760
        %v1557 = vsub.f32 %v469, %v1556
        %1558 = vmatpush1.msra.mxu0 %v1557
        %1559 = vmatprep.subr.mxu0 0.0
        %v1560 = vand.u32 %v470, 4294901760
        %v1561 = vsub.f32 %v470, %v1560
        %1562 = vmatpush1.msra.mxu0 %v1561
        %1563 = vmatprep.subr.mxu0 0.0
        %1564 = vmatpush1.msra.mxu0 0.0
        %1565 = vmatprep.subr.mxu0 0.0
        %1566 = vmatpush1.msra.mxu0 0.0
        %1567 = vmatprep.subr.mxu0 0.0
        %1568 = vmatpush1.msra.mxu0 0.0
        %1569 = vmatprep.subr.mxu0 0.0
        %1570 = vmatpush1.msra.mxu0 0.0
        %1571 = vmatprep.subr.mxu0 0.0
        %1572 = vmatpush1.msra.mxu0 0.0
        %1573 = vmatprep.subr.mxu0 0.0
        %1574 = vmatpush1.msra.mxu0 0.0
        %1575 = vmatprep.subr.mxu0 0.0
        %1576 = vmatpush1.msra.mxu0 0.0
        %1577 = vmatprep.subr.mxu0 0.0
        %1578 = vmatpush1.msra.mxu0 0.0
        %1579 = vmatprep.subr.mxu0 0.0
        %1580 = vmatpush1.msra.mxu0 0.0
        %1581 = vmatprep.subr.mxu0 0.0
        %1582 = vmatpush1.msra.mxu0 0.0
        %1583 = vmatprep.subr.mxu0 0.0
        %1584 = vmatpush1.msra.mxu0 0.0
        %1585 = vmatprep.subr.mxu0 0.0
        %1586 = vmatpush1.msra.mxu0 0.0
        %1587 = vmatprep.subr.mxu0 0.0
        %1588 = vmatpush1.msra.mxu0 0.0
        %1589 = vmatprep.subr.mxu0 0.0
        %1590 = vmatpush1.msra.mxu0 0.0
        %1591 = vmatprep.subr.mxu0 0.0
        %1592 = vmatpush1.msra.mxu0 0.0
        %1593 = vmatprep.subr.mxu0 0.0
        %1594 = vmatpush1.msra.mxu0 0.0
        %1595 = vmatprep.mubr.f32.mxu0 0.0
        %v1596 = vand.u32 %v1239, 4294901760
        %v1597 = vsub.f32 %v1239, %v1596
        %1598 = vmatmul.mubr.f32.gmra.mrb[0].mxu0 %v1597
        %v1599 = vpop.f32.mrb[0].mxu0
        %v1600 = vadd.f32 %v1490, %v1599
        %v1601 = vpop.f32.mrb[0].mxu0
        %1602 = vmatprep.mubr.f32.mxu0 0.0
        %v1603 = vand.u32 %v1240, 4294901760
        %v1604 = vsub.f32 %v1240, %v1603
        %1605 = vmatmul.mubr.f32.gmra.mrb[0].mxu0 %v1604
        %v1606 = vpop.f32.mrb[0].mxu0
        %v1607 = vadd.f32 %v1496, %v1606
        %v1608 = vpop.f32.mrb[0].mxu0
        %1609 = vdwg.mxu0
        %1610 = vmatprep.subr.mxu0 0.0
        %v1611 = vand.u32 %v455, 4294901760
        %1612 = vmatpush1.msra.mxu0 %v1611
        %1613 = vmatprep.subr.mxu0 0.0
        %v1614 = vand.u32 %v456, 4294901760
        %1615 = vmatpush1.msra.mxu0 %v1614
        %1616 = vmatprep.subr.mxu0 0.0
        %v1617 = vand.u32 %v457, 4294901760
        %1618 = vmatpush1.msra.mxu0 %v1617
        %1619 = vmatprep.subr.mxu0 0.0
        %v1620 = vand.u32 %v458, 4294901760
        %1621 = vmatpush1.msra.mxu0 %v1620
        %1622 = vmatprep.subr.mxu0 0.0
        %v1623 = vand.u32 %v459, 4294901760
        %1624 = vmatpush1.msra.mxu0 %v1623
        %1625 = vmatprep.subr.mxu0 0.0
        %v1626 = vand.u32 %v460, 4294901760
        %1627 = vmatpush1.msra.mxu0 %v1626
        %1628 = vmatprep.subr.mxu0 0.0
        %v1629 = vand.u32 %v461, 4294901760
        %1630 = vmatpush1.msra.mxu0 %v1629
        %1631 = vmatprep.subr.mxu0 0.0
        %v1632 = vand.u32 %v462, 4294901760
        %1633 = vmatpush1.msra.mxu0 %v1632
        %1634 = vmatprep.subr.mxu0 0.0
        %v1635 = vand.u32 %v463, 4294901760
        %1636 = vmatpush1.msra.mxu0 %v1635
        %1637 = vmatprep.subr.mxu0 0.0
        %v1638 = vand.u32 %v464, 4294901760
        %1639 = vmatpush1.msra.mxu0 %v1638
        %1640 = vmatprep.subr.mxu0 0.0
        %v1641 = vand.u32 %v465, 4294901760
        %1642 = vmatpush1.msra.mxu0 %v1641
        %1643 = vmatprep.subr.mxu0 0.0
        %v1644 = vand.u32 %v466, 4294901760
        %1645 = vmatpush1.msra.mxu0 %v1644
        %1646 = vmatprep.subr.mxu0 0.0
        %v1647 = vand.u32 %v467, 4294901760
        %1648 = vmatpush1.msra.mxu0 %v1647
        %1649 = vmatprep.subr.mxu0 0.0
        %v1650 = vand.u32 %v468, 4294901760
        %1651 = vmatpush1.msra.mxu0 %v1650
        %1652 = vmatprep.subr.mxu0 0.0
        %v1653 = vand.u32 %v469, 4294901760
        %1654 = vmatpush1.msra.mxu0 %v1653
        %1655 = vmatprep.subr.mxu0 0.0
        %v1656 = vand.u32 %v470, 4294901760
        %1657 = vmatpush1.msra.mxu0 %v1656
        %1658 = vmatprep.subr.mxu0 0.0
        %1659 = vmatpush1.msra.mxu0 0.0
        %1660 = vmatprep.subr.mxu0 0.0
        %1661 = vmatpush1.msra.mxu0 0.0
        %1662 = vmatprep.subr.mxu0 0.0
        %1663 = vmatpush1.msra.mxu0 0.0
        %1664 = vmatprep.subr.mxu0 0.0
        %1665 = vmatpush1.msra.mxu0 0.0
        %1666 = vmatprep.subr.mxu0 0.0
        %1667 = vmatpush1.msra.mxu0 0.0
        %1668 = vmatprep.subr.mxu0 0.0
        %1669 = vmatpush1.msra.mxu0 0.0
        %1670 = vmatprep.subr.mxu0 0.0
        %1671 = vmatpush1.msra.mxu0 0.0
        %1672 = vmatprep.subr.mxu0 0.0
        %1673 = vmatpush1.msra.mxu0 0.0
        %1674 = vmatprep.subr.mxu0 0.0
        %1675 = vmatpush1.msra.mxu0 0.0
        %1676 = vmatprep.subr.mxu0 0.0
        %1677 = vmatpush1.msra.mxu0 0.0
        %1678 = vmatprep.subr.mxu0 0.0
        %1679 = vmatpush1.msra.mxu0 0.0
        %1680 = vmatprep.subr.mxu0 0.0
        %1681 = vmatpush1.msra.mxu0 0.0
        %1682 = vmatprep.subr.mxu0 0.0
        %1683 = vmatpush1.msra.mxu0 0.0
        %1684 = vmatprep.subr.mxu0 0.0
        %1685 = vmatpush1.msra.mxu0 0.0
        %1686 = vmatprep.subr.mxu0 0.0
        %1687 = vmatpush1.msra.mxu0 0.0
        %1688 = vmatprep.subr.mxu0 0.0
        %1689 = vmatpush1.msra.mxu0 0.0
        %1690 = vmatprep.mubr.f32.mxu0 0.0
        %v1691 = vand.u32 %v1239, 4294901760
        %v1692 = vsub.f32 %v1239, %v1691
        %v1693 = vand.u32 %v1692, 4294901760
        %1694 = vmatmul.mubr.f32.gmra.mrb[0].mxu0 %v1693
        %v1695 = vpop.f32.mrb[0].mxu0
        %v1696 = vadd.f32 %v1600, %v1695
        %v1697 = vpop.f32.mrb[0].mxu0
        %1698 = vmatprep.mubr.f32.mxu0 0.0
        %v1699 = vand.u32 %v1240, 4294901760
        %v1700 = vsub.f32 %v1240, %v1699
        %v1701 = vand.u32 %v1700, 4294901760
        %1702 = vmatmul.mubr.f32.gmra.mrb[0].mxu0 %v1701
        %v1703 = vpop.f32.mrb[0].mxu0
        %v1704 = vadd.f32 %v1607, %v1703
        %v1705 = vpop.f32.mrb[0].mxu0
        %1706 = vdwg.mxu0
        %1707 = vmatprep.subr.mxu0 0.0
        %v1708 = vand.u32 %v455, 4294901760
        %v1709 = vsub.f32 %v455, %v1708
        %v1710 = vand.u32 %v1709, 4294901760
        %1711 = vmatpush1.msra.mxu0 %v1710
        %1712 = vmatprep.subr.mxu0 0.0
        %v1713 = vand.u32 %v456, 4294901760
        %v1714 = vsub.f32 %v456, %v1713
        %v1715 = vand.u32 %v1714, 4294901760
        %1716 = vmatpush1.msra.mxu0 %v1715
        %1717 = vmatprep.subr.mxu0 0.0
        %v1718 = vand.u32 %v457, 4294901760
        %v1719 = vsub.f32 %v457, %v1718
        %v1720 = vand.u32 %v1719, 4294901760
        %1721 = vmatpush1.msra.mxu0 %v1720
        %1722 = vmatprep.subr.mxu0 0.0
        %v1723 = vand.u32 %v458, 4294901760
        %v1724 = vsub.f32 %v458, %v1723
        %v1725 = vand.u32 %v1724, 4294901760
        %1726 = vmatpush1.msra.mxu0 %v1725
        %1727 = vmatprep.subr.mxu0 0.0
        %v1728 = vand.u32 %v459, 4294901760
        %v1729 = vsub.f32 %v459, %v1728
        %v1730 = vand.u32 %v1729, 4294901760
        %1731 = vmatpush1.msra.mxu0 %v1730
        %1732 = vmatprep.subr.mxu0 0.0
        %v1733 = vand.u32 %v460, 4294901760
        %v1734 = vsub.f32 %v460, %v1733
        %v1735 = vand.u32 %v1734, 4294901760
        %1736 = vmatpush1.msra.mxu0 %v1735
        %1737 = vmatprep.subr.mxu0 0.0
        %v1738 = vand.u32 %v461, 4294901760
        %v1739 = vsub.f32 %v461, %v1738
        %v1740 = vand.u32 %v1739, 4294901760
        %1741 = vmatpush1.msra.mxu0 %v1740
        %1742 = vmatprep.subr.mxu0 0.0
        %v1743 = vand.u32 %v462, 4294901760
        %v1744 = vsub.f32 %v462, %v1743
        %v1745 = vand.u32 %v1744, 4294901760
        %1746 = vmatpush1.msra.mxu0 %v1745
        %1747 = vmatprep.subr.mxu0 0.0
        %v1748 = vand.u32 %v463, 4294901760
        %v1749 = vsub.f32 %v463, %v1748
        %v1750 = vand.u32 %v1749, 4294901760
        %1751 = vmatpush1.msra.mxu0 %v1750
        %1752 = vmatprep.subr.mxu0 0.0
        %v1753 = vand.u32 %v464, 4294901760
        %v1754 = vsub.f32 %v464, %v1753
        %v1755 = vand.u32 %v1754, 4294901760
        %1756 = vmatpush1.msra.mxu0 %v1755
        %1757 = vmatprep.subr.mxu0 0.0
        %v1758 = vand.u32 %v465, 4294901760
        %v1759 = vsub.f32 %v465, %v1758
        %v1760 = vand.u32 %v1759, 4294901760
        %1761 = vmatpush1.msra.mxu0 %v1760
        %1762 = vmatprep.subr.mxu0 0.0
        %v1763 = vand.u32 %v466, 4294901760
        %v1764 = vsub.f32 %v466, %v1763
        %v1765 = vand.u32 %v1764, 4294901760
        %1766 = vmatpush1.msra.mxu0 %v1765
        %1767 = vmatprep.subr.mxu0 0.0
        %v1768 = vand.u32 %v467, 4294901760
        %v1769 = vsub.f32 %v467, %v1768
        %v1770 = vand.u32 %v1769, 4294901760
        %1771 = vmatpush1.msra.mxu0 %v1770
        %1772 = vmatprep.subr.mxu0 0.0
        %v1773 = vand.u32 %v468, 4294901760
        %v1774 = vsub.f32 %v468, %v1773
        %v1775 = vand.u32 %v1774, 4294901760
        %1776 = vmatpush1.msra.mxu0 %v1775
        %1777 = vmatprep.subr.mxu0 0.0
        %v1778 = vand.u32 %v469, 4294901760
        %v1779 = vsub.f32 %v469, %v1778
        %v1780 = vand.u32 %v1779, 4294901760
        %1781 = vmatpush1.msra.mxu0 %v1780
        %1782 = vmatprep.subr.mxu0 0.0
        %v1783 = vand.u32 %v470, 4294901760
        %v1784 = vsub.f32 %v470, %v1783
        %v1785 = vand.u32 %v1784, 4294901760
        %1786 = vmatpush1.msra.mxu0 %v1785
        %1787 = vmatprep.subr.mxu0 0.0
        %1788 = vmatpush1.msra.mxu0 0.0
        %1789 = vmatprep.subr.mxu0 0.0
        %1790 = vmatpush1.msra.mxu0 0.0
        %1791 = vmatprep.subr.mxu0 0.0
        %1792 = vmatpush1.msra.mxu0 0.0
        %1793 = vmatprep.subr.mxu0 0.0
        %1794 = vmatpush1.msra.mxu0 0.0
        %1795 = vmatprep.subr.mxu0 0.0
        %1796 = vmatpush1.msra.mxu0 0.0
        %1797 = vmatprep.subr.mxu0 0.0
        %1798 = vmatpush1.msra.mxu0 0.0
        %1799 = vmatprep.subr.mxu0 0.0
        %1800 = vmatpush1.msra.mxu0 0.0
        %1801 = vmatprep.subr.mxu0 0.0
        %1802 = vmatpush1.msra.mxu0 0.0
        %1803 = vmatprep.subr.mxu0 0.0
        %1804 = vmatpush1.msra.mxu0 0.0
        %1805 = vmatprep.subr.mxu0 0.0
        %1806 = vmatpush1.msra.mxu0 0.0
        %1807 = vmatprep.subr.mxu0 0.0
        %1808 = vmatpush1.msra.mxu0 0.0
        %1809 = vmatprep.subr.mxu0 0.0
        %1810 = vmatpush1.msra.mxu0 0.0
        %1811 = vmatprep.subr.mxu0 0.0
        %1812 = vmatpush1.msra.mxu0 0.0
        %1813 = vmatprep.subr.mxu0 0.0
        %1814 = vmatpush1.msra.mxu0 0.0
        %1815 = vmatprep.subr.mxu0 0.0
        %1816 = vmatpush1.msra.mxu0 0.0
        %1817 = vmatprep.subr.mxu0 0.0
        %1818 = vmatpush1.msra.mxu0 0.0
        %1819 = vmatprep.mubr.f32.mxu0 0.0
        %v1820 = vand.u32 %v1239, 4294901760
        %1821 = vmatmul.mubr.f32.gmra.mrb[0].mxu0 %v1820
        %v1822 = vpop.f32.mrb[0].mxu0
        %v1823 = vadd.f32 %v1696, %v1822
        %v1824 = vpop.f32.mrb[0].mxu0
        %1825 = vmatprep.mubr.f32.mxu0 0.0
        %v1826 = vand.u32 %v1240, 4294901760
        %1827 = vmatmul.mubr.f32.gmra.mrb[0].mxu0 %v1826
        %v1828 = vpop.f32.mrb[0].mxu0
        %v1829 = vadd.f32 %v1704, %v1828
        %v1830 = vpop.f32.mrb[0].mxu0
        %1831 = vdwg.mxu0
        %1832 = vmatprep.subr.mxu0 0.0
        %v1833 = vand.u32 %v455, 4294901760
        %1834 = vmatpush1.msra.mxu0 %v1833
        %1835 = vmatprep.subr.mxu0 0.0
        %v1836 = vand.u32 %v456, 4294901760
        %1837 = vmatpush1.msra.mxu0 %v1836
        %1838 = vmatprep.subr.mxu0 0.0
        %v1839 = vand.u32 %v457, 4294901760
        %1840 = vmatpush1.msra.mxu0 %v1839
        %1841 = vmatprep.subr.mxu0 0.0
        %v1842 = vand.u32 %v458, 4294901760
        %1843 = vmatpush1.msra.mxu0 %v1842
        %1844 = vmatprep.subr.mxu0 0.0
        %v1845 = vand.u32 %v459, 4294901760
        %1846 = vmatpush1.msra.mxu0 %v1845
        %1847 = vmatprep.subr.mxu0 0.0
        %v1848 = vand.u32 %v460, 4294901760
        %1849 = vmatpush1.msra.mxu0 %v1848
        %1850 = vmatprep.subr.mxu0 0.0
        %v1851 = vand.u32 %v461, 4294901760
        %1852 = vmatpush1.msra.mxu0 %v1851
        %1853 = vmatprep.subr.mxu0 0.0
        %v1854 = vand.u32 %v462, 4294901760
        %1855 = vmatpush1.msra.mxu0 %v1854
        %1856 = vmatprep.subr.mxu0 0.0
        %v1857 = vand.u32 %v463, 4294901760
        %1858 = vmatpush1.msra.mxu0 %v1857
        %1859 = vmatprep.subr.mxu0 0.0
        %v1860 = vand.u32 %v464, 4294901760
        %1861 = vmatpush1.msra.mxu0 %v1860
        %1862 = vmatprep.subr.mxu0 0.0
        %v1863 = vand.u32 %v465, 4294901760
        %1864 = vmatpush1.msra.mxu0 %v1863
        %1865 = vmatprep.subr.mxu0 0.0
        %v1866 = vand.u32 %v466, 4294901760
        %1867 = vmatpush1.msra.mxu0 %v1866
        %1868 = vmatprep.subr.mxu0 0.0
        %v1869 = vand.u32 %v467, 4294901760
        %1870 = vmatpush1.msra.mxu0 %v1869
        %1871 = vmatprep.subr.mxu0 0.0
        %v1872 = vand.u32 %v468, 4294901760
        %1873 = vmatpush1.msra.mxu0 %v1872
        %1874 = vmatprep.subr.mxu0 0.0
        %v1875 = vand.u32 %v469, 4294901760
        %1876 = vmatpush1.msra.mxu0 %v1875
        %1877 = vmatprep.subr.mxu0 0.0
        %v1878 = vand.u32 %v470, 4294901760
        %1879 = vmatpush1.msra.mxu0 %v1878
        %1880 = vmatprep.subr.mxu0 0.0
        %1881 = vmatpush1.msra.mxu0 0.0
        %1882 = vmatprep.subr.mxu0 0.0
        %1883 = vmatpush1.msra.mxu0 0.0
        %1884 = vmatprep.subr.mxu0 0.0
        %1885 = vmatpush1.msra.mxu0 0.0
        %1886 = vmatprep.subr.mxu0 0.0
        %1887 = vmatpush1.msra.mxu0 0.0
        %1888 = vmatprep.subr.mxu0 0.0
        %1889 = vmatpush1.msra.mxu0 0.0
        %1890 = vmatprep.subr.mxu0 0.0
        %1891 = vmatpush1.msra.mxu0 0.0
        %1892 = vmatprep.subr.mxu0 0.0
        %1893 = vmatpush1.msra.mxu0 0.0
        %1894 = vmatprep.subr.mxu0 0.0
        %1895 = vmatpush1.msra.mxu0 0.0
        %1896 = vmatprep.subr.mxu0 0.0
        %1897 = vmatpush1.msra.mxu0 0.0
        %1898 = vmatprep.subr.mxu0 0.0
        %1899 = vmatpush1.msra.mxu0 0.0
        %1900 = vmatprep.subr.mxu0 0.0
        %1901 = vmatpush1.msra.mxu0 0.0
        %1902 = vmatprep.subr.mxu0 0.0
        %1903 = vmatpush1.msra.mxu0 0.0
        %1904 = vmatprep.subr.mxu0 0.0
        %1905 = vmatpush1.msra.mxu0 0.0
        %1906 = vmatprep.subr.mxu0 0.0
        %1907 = vmatpush1.msra.mxu0 0.0
        %1908 = vmatprep.subr.mxu0 0.0
        %1909 = vmatpush1.msra.mxu0 0.0
        %1910 = vmatprep.subr.mxu0 0.0
        %1911 = vmatpush1.msra.mxu0 0.0
        %1912 = vmatprep.mubr.f32.mxu0 0.0
        %v1913 = vand.u32 %v1239, 4294901760
        %1914 = vmatmul.mubr.f32.gmra.mrb[0].mxu0 %v1913
        %v1915 = vpop.f32.mrb[0].mxu0
        %v1916 = vadd.f32 %v1823, %v1915
        %v1917 = vpop.f32.mrb[0].mxu0
        %1918 = vmatprep.mubr.f32.mxu0 0.0
        %v1919 = vand.u32 %v1240, 4294901760
        %1920 = vmatmul.mubr.f32.gmra.mrb[0].mxu0 %v1919
        %v1921 = vpop.f32.mrb[0].mxu0
        %v1922 = vadd.f32 %v1829, %v1921
        %v1923 = vpop.f32.mrb[0].mxu0
        %1924 = vdwg.mxu0
        %v1925 = vsel %vm1235, inf, %v1197
        %v1926 = vsel %vm1236, inf, %v1198
        %1927 = vmin.xlane.f32.xlu0 %v1925
        %v1928 = vpop.xlane.xlu0 %1927
        %1929 = vmin.xlane.f32.xlu0 %v1926
        %v1930 = vpop.xlane.xlu0 %1929
        %vm1931 = vcmp.eq.f32.partialorder %v1925, %v1928
        %vm1932 = vcmp.eq.f32.partialorder %v1926, %v1930
        %v1933 = vsel %vm1931, %v454, 128
        %v1934 = vsel %vm1932, %v454, 128
        %v1935 = vand.u32 %v1933, 65535
        %v1936 = vshra.s32 %v1933, 16
        %v1937 = vcvt.s32.f32 %v1935
        %v1938 = vcvt.s32.f32 %v1936
        %1939 = vmin.xlane.f32.xlu0 %v1938
        %v1940 = vpop.xlane.xlu0 %1939
        %vm1941 = vcmp.eq.f32.partialorder %v1938, %v1940
        %v1942 = vsel %vm1941, %v1937, inf
        %1943 = vmin.xlane.f32.xlu0 %v1942
        %v1944 = vpop.xlane.xlu0 %1943
        %v1945 = vcvt.f32.s32 %v1944
        %v1946 = vcvt.f32.s32 %v1940
        %v1947 = vshll.u32 %v1946, 16
        %v1948 = vadd.s32 %v1947, %v1945
        %v1949 = vand.u32 %v1934, 65535
        %v1950 = vshra.s32 %v1934, 16
        %v1951 = vcvt.s32.f32 %v1949
        %v1952 = vcvt.s32.f32 %v1950
        %1953 = vmin.xlane.f32.xlu0 %v1952
        %v1954 = vpop.xlane.xlu0 %1953
        %vm1955 = vcmp.eq.f32.partialorder %v1952, %v1954
        %v1956 = vsel %vm1955, %v1951, inf
        %1957 = vmin.xlane.f32.xlu0 %v1956
        %v1958 = vpop.xlane.xlu0 %1957
        %v1959 = vcvt.f32.s32 %v1958
        %v1960 = vcvt.f32.s32 %v1954
        %v1961 = vshll.u32 %v1960, 16
        %v1962 = vadd.s32 %v1961, %v1959
        %vm1963 = vcmp.eq.s32.totalorder %v454, %v1948
        %vm1964 = vcmp.eq.s32.totalorder %v454, %v1962
        %v1965 = vsel %vm1963, 1, 0
        %v1966 = vsel %vm1964, 1, 0
        %v1967 = vcvt.s32.f32 %v1965
        %v1968 = vcvt.s32.f32 %v1966
        %1969 = vmatprep.subr.mxu0 0.0
        %v1970 = vand.u32 %v455, 4294901760
        %1971 = vmatpush1.msra.mxu0 %v1970
        %1972 = vmatprep.subr.mxu0 0.0
        %v1973 = vand.u32 %v456, 4294901760
        %1974 = vmatpush1.msra.mxu0 %v1973
        %1975 = vmatprep.subr.mxu0 0.0
        %v1976 = vand.u32 %v457, 4294901760
        %1977 = vmatpush1.msra.mxu0 %v1976
        %1978 = vmatprep.subr.mxu0 0.0
        %v1979 = vand.u32 %v458, 4294901760
        %1980 = vmatpush1.msra.mxu0 %v1979
        %1981 = vmatprep.subr.mxu0 0.0
        %v1982 = vand.u32 %v459, 4294901760
        %1983 = vmatpush1.msra.mxu0 %v1982
        %1984 = vmatprep.subr.mxu0 0.0
        %v1985 = vand.u32 %v460, 4294901760
        %1986 = vmatpush1.msra.mxu0 %v1985
        %1987 = vmatprep.subr.mxu0 0.0
        %v1988 = vand.u32 %v461, 4294901760
        %1989 = vmatpush1.msra.mxu0 %v1988
        %1990 = vmatprep.subr.mxu0 0.0
        %v1991 = vand.u32 %v462, 4294901760
        %1992 = vmatpush1.msra.mxu0 %v1991
        %1993 = vmatprep.subr.mxu0 0.0
        %v1994 = vand.u32 %v463, 4294901760
        %1995 = vmatpush1.msra.mxu0 %v1994
        %1996 = vmatprep.subr.mxu0 0.0
        %v1997 = vand.u32 %v464, 4294901760
        %1998 = vmatpush1.msra.mxu0 %v1997
        %1999 = vmatprep.subr.mxu0 0.0
        %v2000 = vand.u32 %v465, 4294901760
        %2001 = vmatpush1.msra.mxu0 %v2000
        %2002 = vmatprep.subr.mxu0 0.0
        %v2003 = vand.u32 %v466, 4294901760
        %2004 = vmatpush1.msra.mxu0 %v2003
        %2005 = vmatprep.subr.mxu0 0.0
        %v2006 = vand.u32 %v467, 4294901760
        %2007 = vmatpush1.msra.mxu0 %v2006
        %2008 = vmatprep.subr.mxu0 0.0
        %v2009 = vand.u32 %v468, 4294901760
        %2010 = vmatpush1.msra.mxu0 %v2009
        %2011 = vmatprep.subr.mxu0 0.0
        %v2012 = vand.u32 %v469, 4294901760
        %2013 = vmatpush1.msra.mxu0 %v2012
        %2014 = vmatprep.subr.mxu0 0.0
        %v2015 = vand.u32 %v470, 4294901760
        %2016 = vmatpush1.msra.mxu0 %v2015
        %2017 = vmatprep.subr.mxu0 0.0
        %2018 = vmatpush1.msra.mxu0 0.0
        %2019 = vmatprep.subr.mxu0 0.0
        %2020 = vmatpush1.msra.mxu0 0.0
        %2021 = vmatprep.subr.mxu0 0.0
        %2022 = vmatpush1.msra.mxu0 0.0
        %2023 = vmatprep.subr.mxu0 0.0
        %2024 = vmatpush1.msra.mxu0 0.0
        %2025 = vmatprep.subr.mxu0 0.0
        %2026 = vmatpush1.msra.mxu0 0.0
        %2027 = vmatprep.subr.mxu0 0.0
        %2028 = vmatpush1.msra.mxu0 0.0
        %2029 = vmatprep.subr.mxu0 0.0
        %2030 = vmatpush1.msra.mxu0 0.0
        %2031 = vmatprep.subr.mxu0 0.0
        %2032 = vmatpush1.msra.mxu0 0.0
        %2033 = vmatprep.subr.mxu0 0.0
        %2034 = vmatpush1.msra.mxu0 0.0
        %2035 = vmatprep.subr.mxu0 0.0
        %2036 = vmatpush1.msra.mxu0 0.0
        %2037 = vmatprep.subr.mxu0 0.0
        %2038 = vmatpush1.msra.mxu0 0.0
        %2039 = vmatprep.subr.mxu0 0.0
        %2040 = vmatpush1.msra.mxu0 0.0
        %2041 = vmatprep.subr.mxu0 0.0
        %2042 = vmatpush1.msra.mxu0 0.0
        %2043 = vmatprep.subr.mxu0 0.0
        %2044 = vmatpush1.msra.mxu0 0.0
        %2045 = vmatprep.subr.mxu0 0.0
        %2046 = vmatpush1.msra.mxu0 0.0
        %2047 = vmatprep.subr.mxu0 0.0
        %2048 = vmatpush1.msra.mxu0 0.0
        %2049 = vmatprep.mubr.f32.mxu0 0.0
        %v2050 = vand.u32 %v1967, 4294901760
        %v2051 = vsub.f32 %v1967, %v2050
        %v2052 = vand.u32 %v2051, 4294901760
        %v2053 = vsub.f32 %v2051, %v2052
        %v2054 = vand.u32 %v2053, 4294901760
        %2055 = vmatmul.mubr.f32.gmra.mrb[0].mxu0 %v2054
        %v2056 = vpop.f32.mrb[0].mxu0
        %v2057 = vadd.f32 0.0, %v2056
        %v2058 = vpop.f32.mrb[0].mxu0
        %2059 = vmatprep.mubr.f32.mxu0 0.0
        %v2060 = vand.u32 %v1968, 4294901760
        %v2061 = vsub.f32 %v1968, %v2060
        %v2062 = vand.u32 %v2061, 4294901760
        %v2063 = vsub.f32 %v2061, %v2062
        %v2064 = vand.u32 %v2063, 4294901760
        %2065 = vmatmul.mubr.f32.gmra.mrb[0].mxu0 %v2064
        %v2066 = vpop.f32.mrb[0].mxu0
        %v2067 = vadd.f32 0.0, %v2066
        %v2068 = vpop.f32.mrb[0].mxu0
        %2069 = vdwg.mxu0
        %2070 = vmatprep.subr.mxu0 0.0
        %v2071 = vand.u32 %v455, 4294901760
        %v2072 = vsub.f32 %v455, %v2071
        %v2073 = vand.u32 %v2072, 4294901760
        %v2074 = vsub.f32 %v2072, %v2073
        %v2075 = vand.u32 %v2074, 4294901760
        %2076 = vmatpush1.msra.mxu0 %v2075
        %2077 = vmatprep.subr.mxu0 0.0
        %v2078 = vand.u32 %v456, 4294901760
        %v2079 = vsub.f32 %v456, %v2078
        %v2080 = vand.u32 %v2079, 4294901760
        %v2081 = vsub.f32 %v2079, %v2080
        %v2082 = vand.u32 %v2081, 4294901760
        %2083 = vmatpush1.msra.mxu0 %v2082
        %2084 = vmatprep.subr.mxu0 0.0
        %v2085 = vand.u32 %v457, 4294901760
        %v2086 = vsub.f32 %v457, %v2085
        %v2087 = vand.u32 %v2086, 4294901760
        %v2088 = vsub.f32 %v2086, %v2087
        %v2089 = vand.u32 %v2088, 4294901760
        %2090 = vmatpush1.msra.mxu0 %v2089
        %2091 = vmatprep.subr.mxu0 0.0
        %v2092 = vand.u32 %v458, 4294901760
        %v2093 = vsub.f32 %v458, %v2092
        %v2094 = vand.u32 %v2093, 4294901760
        %v2095 = vsub.f32 %v2093, %v2094
        %v2096 = vand.u32 %v2095, 4294901760
        %2097 = vmatpush1.msra.mxu0 %v2096
        %2098 = vmatprep.subr.mxu0 0.0
        %v2099 = vand.u32 %v459, 4294901760
        %v2100 = vsub.f32 %v459, %v2099
        %v2101 = vand.u32 %v2100, 4294901760
        %v2102 = vsub.f32 %v2100, %v2101
        %v2103 = vand.u32 %v2102, 4294901760
        %2104 = vmatpush1.msra.mxu0 %v2103
        %2105 = vmatprep.subr.mxu0 0.0
        %v2106 = vand.u32 %v460, 4294901760
        %v2107 = vsub.f32 %v460, %v2106
        %v2108 = vand.u32 %v2107, 4294901760
        %v2109 = vsub.f32 %v2107, %v2108
        %v2110 = vand.u32 %v2109, 4294901760
        %2111 = vmatpush1.msra.mxu0 %v2110
        %2112 = vmatprep.subr.mxu0 0.0
        %v2113 = vand.u32 %v461, 4294901760
        %v2114 = vsub.f32 %v461, %v2113
        %v2115 = vand.u32 %v2114, 4294901760
        %v2116 = vsub.f32 %v2114, %v2115
        %v2117 = vand.u32 %v2116, 4294901760
        %2118 = vmatpush1.msra.mxu0 %v2117
        %2119 = vmatprep.subr.mxu0 0.0
        %v2120 = vand.u32 %v462, 4294901760
        %v2121 = vsub.f32 %v462, %v2120
        %v2122 = vand.u32 %v2121, 4294901760
        %v2123 = vsub.f32 %v2121, %v2122
        %v2124 = vand.u32 %v2123, 4294901760
        %2125 = vmatpush1.msra.mxu0 %v2124
        %2126 = vmatprep.subr.mxu0 0.0
        %v2127 = vand.u32 %v463, 4294901760
        %v2128 = vsub.f32 %v463, %v2127
        %v2129 = vand.u32 %v2128, 4294901760
        %v2130 = vsub.f32 %v2128, %v2129
        %v2131 = vand.u32 %v2130, 4294901760
        %2132 = vmatpush1.msra.mxu0 %v2131
        %2133 = vmatprep.subr.mxu0 0.0
        %v2134 = vand.u32 %v464, 4294901760
        %v2135 = vsub.f32 %v464, %v2134
        %v2136 = vand.u32 %v2135, 4294901760
        %v2137 = vsub.f32 %v2135, %v2136
        %v2138 = vand.u32 %v2137, 4294901760
        %2139 = vmatpush1.msra.mxu0 %v2138
        %2140 = vmatprep.subr.mxu0 0.0
        %v2141 = vand.u32 %v465, 4294901760
        %v2142 = vsub.f32 %v465, %v2141
        %v2143 = vand.u32 %v2142, 4294901760
        %v2144 = vsub.f32 %v2142, %v2143
        %v2145 = vand.u32 %v2144, 4294901760
        %2146 = vmatpush1.msra.mxu0 %v2145
        %2147 = vmatprep.subr.mxu0 0.0
        %v2148 = vand.u32 %v466, 4294901760
        %v2149 = vsub.f32 %v466, %v2148
        %v2150 = vand.u32 %v2149, 4294901760
        %v2151 = vsub.f32 %v2149, %v2150
        %v2152 = vand.u32 %v2151, 4294901760
        %2153 = vmatpush1.msra.mxu0 %v2152
        %2154 = vmatprep.subr.mxu0 0.0
        %v2155 = vand.u32 %v467, 4294901760
        %v2156 = vsub.f32 %v467, %v2155
        %v2157 = vand.u32 %v2156, 4294901760
        %v2158 = vsub.f32 %v2156, %v2157
        %v2159 = vand.u32 %v2158, 4294901760
        %2160 = vmatpush1.msra.mxu0 %v2159
        %2161 = vmatprep.subr.mxu0 0.0
        %v2162 = vand.u32 %v468, 4294901760
        %v2163 = vsub.f32 %v468, %v2162
        %v2164 = vand.u32 %v2163, 4294901760
        %v2165 = vsub.f32 %v2163, %v2164
        %v2166 = vand.u32 %v2165, 4294901760
        %2167 = vmatpush1.msra.mxu0 %v2166
        %2168 = vmatprep.subr.mxu0 0.0
        %v2169 = vand.u32 %v469, 4294901760
        %v2170 = vsub.f32 %v469, %v2169
        %v2171 = vand.u32 %v2170, 4294901760
        %v2172 = vsub.f32 %v2170, %v2171
        %v2173 = vand.u32 %v2172, 4294901760
        %2174 = vmatpush1.msra.mxu0 %v2173
        %2175 = vmatprep.subr.mxu0 0.0
        %v2176 = vand.u32 %v470, 4294901760
        %v2177 = vsub.f32 %v470, %v2176
        %v2178 = vand.u32 %v2177, 4294901760
        %v2179 = vsub.f32 %v2177, %v2178
        %v2180 = vand.u32 %v2179, 4294901760
        %2181 = vmatpush1.msra.mxu0 %v2180
        %2182 = vmatprep.subr.mxu0 0.0
        %2183 = vmatpush1.msra.mxu0 0.0
        %2184 = vmatprep.subr.mxu0 0.0
        %2185 = vmatpush1.msra.mxu0 0.0
        %2186 = vmatprep.subr.mxu0 0.0
        %2187 = vmatpush1.msra.mxu0 0.0
        %2188 = vmatprep.subr.mxu0 0.0
        %2189 = vmatpush1.msra.mxu0 0.0
        %2190 = vmatprep.subr.mxu0 0.0
        %2191 = vmatpush1.msra.mxu0 0.0
        %2192 = vmatprep.subr.mxu0 0.0
        %2193 = vmatpush1.msra.mxu0 0.0
        %2194 = vmatprep.subr.mxu0 0.0
        %2195 = vmatpush1.msra.mxu0 0.0
        %2196 = vmatprep.subr.mxu0 0.0
        %2197 = vmatpush1.msra.mxu0 0.0
        %2198 = vmatprep.subr.mxu0 0.0
        %2199 = vmatpush1.msra.mxu0 0.0
        %2200 = vmatprep.subr.mxu0 0.0
        %2201 = vmatpush1.msra.mxu0 0.0
        %2202 = vmatprep.subr.mxu0 0.0
        %2203 = vmatpush1.msra.mxu0 0.0
        %2204 = vmatprep.subr.mxu0 0.0
        %2205 = vmatpush1.msra.mxu0 0.0
        %2206 = vmatprep.subr.mxu0 0.0
        %2207 = vmatpush1.msra.mxu0 0.0
        %2208 = vmatprep.subr.mxu0 0.0
        %2209 = vmatpush1.msra.mxu0 0.0
        %2210 = vmatprep.subr.mxu0 0.0
        %2211 = vmatpush1.msra.mxu0 0.0
        %2212 = vmatprep.subr.mxu0 0.0
        %2213 = vmatpush1.msra.mxu0 0.0
        %2214 = vmatprep.mubr.f32.mxu0 0.0
        %v2215 = vand.u32 %v1967, 4294901760
        %2216 = vmatmul.mubr.f32.gmra.mrb[0].mxu0 %v2215
        %v2217 = vpop.f32.mrb[0].mxu0
        %v2218 = vadd.f32 %v2057, %v2217
        %v2219 = vpop.f32.mrb[0].mxu0
        %2220 = vmatprep.mubr.f32.mxu0 0.0
        %v2221 = vand.u32 %v1968, 4294901760
        %2222 = vmatmul.mubr.f32.gmra.mrb[0].mxu0 %v2221
        %v2223 = vpop.f32.mrb[0].mxu0
        %v2224 = vadd.f32 %v2067, %v2223
        %v2225 = vpop.f32.mrb[0].mxu0
        %2226 = vdwg.mxu0
        %2227 = vmatprep.subr.mxu0 0.0
        %v2228 = vand.u32 %v455, 4294901760
        %v2229 = vsub.f32 %v455, %v2228
        %2230 = vmatpush1.msra.mxu0 %v2229
        %2231 = vmatprep.subr.mxu0 0.0
        %v2232 = vand.u32 %v456, 4294901760
        %v2233 = vsub.f32 %v456, %v2232
        %2234 = vmatpush1.msra.mxu0 %v2233
        %2235 = vmatprep.subr.mxu0 0.0
        %v2236 = vand.u32 %v457, 4294901760
        %v2237 = vsub.f32 %v457, %v2236
        %2238 = vmatpush1.msra.mxu0 %v2237
        %2239 = vmatprep.subr.mxu0 0.0
        %v2240 = vand.u32 %v458, 4294901760
        %v2241 = vsub.f32 %v458, %v2240
        %2242 = vmatpush1.msra.mxu0 %v2241
        %2243 = vmatprep.subr.mxu0 0.0
        %v2244 = vand.u32 %v459, 4294901760
        %v2245 = vsub.f32 %v459, %v2244
        %2246 = vmatpush1.msra.mxu0 %v2245
        %2247 = vmatprep.subr.mxu0 0.0
        %v2248 = vand.u32 %v460, 4294901760
        %v2249 = vsub.f32 %v460, %v2248
        %2250 = vmatpush1.msra.mxu0 %v2249
        %2251 = vmatprep.subr.mxu0 0.0
        %v2252 = vand.u32 %v461, 4294901760
        %v2253 = vsub.f32 %v461, %v2252
        %2254 = vmatpush1.msra.mxu0 %v2253
        %2255 = vmatprep.subr.mxu0 0.0
        %v2256 = vand.u32 %v462, 4294901760
        %v2257 = vsub.f32 %v462, %v2256
        %2258 = vmatpush1.msra.mxu0 %v2257
        %2259 = vmatprep.subr.mxu0 0.0
        %v2260 = vand.u32 %v463, 4294901760
        %v2261 = vsub.f32 %v463, %v2260
        %2262 = vmatpush1.msra.mxu0 %v2261
        %2263 = vmatprep.subr.mxu0 0.0
        %v2264 = vand.u32 %v464, 4294901760
        %v2265 = vsub.f32 %v464, %v2264
        %2266 = vmatpush1.msra.mxu0 %v2265
        %2267 = vmatprep.subr.mxu0 0.0
        %v2268 = vand.u32 %v465, 4294901760
        %v2269 = vsub.f32 %v465, %v2268
        %2270 = vmatpush1.msra.mxu0 %v2269
        %2271 = vmatprep.subr.mxu0 0.0
        %v2272 = vand.u32 %v466, 4294901760
        %v2273 = vsub.f32 %v466, %v2272
        %2274 = vmatpush1.msra.mxu0 %v2273
        %2275 = vmatprep.subr.mxu0 0.0
        %v2276 = vand.u32 %v467, 4294901760
        %v2277 = vsub.f32 %v467, %v2276
        %2278 = vmatpush1.msra.mxu0 %v2277
        %2279 = vmatprep.subr.mxu0 0.0
        %v2280 = vand.u32 %v468, 4294901760
        %v2281 = vsub.f32 %v468, %v2280
        %2282 = vmatpush1.msra.mxu0 %v2281
        %2283 = vmatprep.subr.mxu0 0.0
        %v2284 = vand.u32 %v469, 4294901760
        %v2285 = vsub.f32 %v469, %v2284
        %2286 = vmatpush1.msra.mxu0 %v2285
        %2287 = vmatprep.subr.mxu0 0.0
        %v2288 = vand.u32 %v470, 4294901760
        %v2289 = vsub.f32 %v470, %v2288
        %2290 = vmatpush1.msra.mxu0 %v2289
        %2291 = vmatprep.subr.mxu0 0.0
        %2292 = vmatpush1.msra.mxu0 0.0
        %2293 = vmatprep.subr.mxu0 0.0
        %2294 = vmatpush1.msra.mxu0 0.0
        %2295 = vmatprep.subr.mxu0 0.0
        %2296 = vmatpush1.msra.mxu0 0.0
        %2297 = vmatprep.subr.mxu0 0.0
        %2298 = vmatpush1.msra.mxu0 0.0
        %2299 = vmatprep.subr.mxu0 0.0
        %2300 = vmatpush1.msra.mxu0 0.0
        %2301 = vmatprep.subr.mxu0 0.0
        %2302 = vmatpush1.msra.mxu0 0.0
        %2303 = vmatprep.subr.mxu0 0.0
        %2304 = vmatpush1.msra.mxu0 0.0
        %2305 = vmatprep.subr.mxu0 0.0
        %2306 = vmatpush1.msra.mxu0 0.0
        %2307 = vmatprep.subr.mxu0 0.0
        %2308 = vmatpush1.msra.mxu0 0.0
        %2309 = vmatprep.subr.mxu0 0.0
        %2310 = vmatpush1.msra.mxu0 0.0
        %2311 = vmatprep.subr.mxu0 0.0
        %2312 = vmatpush1.msra.mxu0 0.0
        %2313 = vmatprep.subr.mxu0 0.0
        %2314 = vmatpush1.msra.mxu0 0.0
        %2315 = vmatprep.subr.mxu0 0.0
        %2316 = vmatpush1.msra.mxu0 0.0
        %2317 = vmatprep.subr.mxu0 0.0
        %2318 = vmatpush1.msra.mxu0 0.0
        %2319 = vmatprep.subr.mxu0 0.0
        %2320 = vmatpush1.msra.mxu0 0.0
        %2321 = vmatprep.subr.mxu0 0.0
        %2322 = vmatpush1.msra.mxu0 0.0
        %2323 = vmatprep.mubr.f32.mxu0 0.0
        %v2324 = vand.u32 %v1967, 4294901760
        %v2325 = vsub.f32 %v1967, %v2324
        %2326 = vmatmul.mubr.f32.gmra.mrb[0].mxu0 %v2325
        %v2327 = vpop.f32.mrb[0].mxu0
        %v2328 = vadd.f32 %v2218, %v2327
        %v2329 = vpop.f32.mrb[0].mxu0
        %2330 = vmatprep.mubr.f32.mxu0 0.0
        %v2331 = vand.u32 %v1968, 4294901760
        %v2332 = vsub.f32 %v1968, %v2331
        %2333 = vmatmul.mubr.f32.gmra.mrb[0].mxu0 %v2332
        %v2334 = vpop.f32.mrb[0].mxu0
        %v2335 = vadd.f32 %v2224, %v2334
        %v2336 = vpop.f32.mrb[0].mxu0
        %2337 = vdwg.mxu0
        %2338 = vmatprep.subr.mxu0 0.0
        %v2339 = vand.u32 %v455, 4294901760
        %2340 = vmatpush1.msra.mxu0 %v2339
        %2341 = vmatprep.subr.mxu0 0.0
        %v2342 = vand.u32 %v456, 4294901760
        %2343 = vmatpush1.msra.mxu0 %v2342
        %2344 = vmatprep.subr.mxu0 0.0
        %v2345 = vand.u32 %v457, 4294901760
        %2346 = vmatpush1.msra.mxu0 %v2345
        %2347 = vmatprep.subr.mxu0 0.0
        %v2348 = vand.u32 %v458, 4294901760
        %2349 = vmatpush1.msra.mxu0 %v2348
        %2350 = vmatprep.subr.mxu0 0.0
        %v2351 = vand.u32 %v459, 4294901760
        %2352 = vmatpush1.msra.mxu0 %v2351
        %2353 = vmatprep.subr.mxu0 0.0
        %v2354 = vand.u32 %v460, 4294901760
        %2355 = vmatpush1.msra.mxu0 %v2354
        %2356 = vmatprep.subr.mxu0 0.0
        %v2357 = vand.u32 %v461, 4294901760
        %2358 = vmatpush1.msra.mxu0 %v2357
        %2359 = vmatprep.subr.mxu0 0.0
        %v2360 = vand.u32 %v462, 4294901760
        %2361 = vmatpush1.msra.mxu0 %v2360
        %2362 = vmatprep.subr.mxu0 0.0
        %v2363 = vand.u32 %v463, 4294901760
        %2364 = vmatpush1.msra.mxu0 %v2363
        %2365 = vmatprep.subr.mxu0 0.0
        %v2366 = vand.u32 %v464, 4294901760
        %2367 = vmatpush1.msra.mxu0 %v2366
        %2368 = vmatprep.subr.mxu0 0.0
        %v2369 = vand.u32 %v465, 4294901760
        %2370 = vmatpush1.msra.mxu0 %v2369
        %2371 = vmatprep.subr.mxu0 0.0
        %v2372 = vand.u32 %v466, 4294901760
        %2373 = vmatpush1.msra.mxu0 %v2372
        %2374 = vmatprep.subr.mxu0 0.0
        %v2375 = vand.u32 %v467, 4294901760
        %2376 = vmatpush1.msra.mxu0 %v2375
        %2377 = vmatprep.subr.mxu0 0.0
        %v2378 = vand.u32 %v468, 4294901760
        %2379 = vmatpush1.msra.mxu0 %v2378
        %2380 = vmatprep.subr.mxu0 0.0
        %v2381 = vand.u32 %v469, 4294901760
        %2382 = vmatpush1.msra.mxu0 %v2381
        %2383 = vmatprep.subr.mxu0 0.0
        %v2384 = vand.u32 %v470, 4294901760
        %2385 = vmatpush1.msra.mxu0 %v2384
        %2386 = vmatprep.subr.mxu0 0.0
        %2387 = vmatpush1.msra.mxu0 0.0
        %2388 = vmatprep.subr.mxu0 0.0
        %2389 = vmatpush1.msra.mxu0 0.0
        %2390 = vmatprep.subr.mxu0 0.0
        %2391 = vmatpush1.msra.mxu0 0.0
        %2392 = vmatprep.subr.mxu0 0.0
        %2393 = vmatpush1.msra.mxu0 0.0
        %2394 = vmatprep.subr.mxu0 0.0
        %2395 = vmatpush1.msra.mxu0 0.0
        %2396 = vmatprep.subr.mxu0 0.0
        %2397 = vmatpush1.msra.mxu0 0.0
        %2398 = vmatprep.subr.mxu0 0.0
        %2399 = vmatpush1.msra.mxu0 0.0
        %2400 = vmatprep.subr.mxu0 0.0
        %2401 = vmatpush1.msra.mxu0 0.0
        %2402 = vmatprep.subr.mxu0 0.0
        %2403 = vmatpush1.msra.mxu0 0.0
        %2404 = vmatprep.subr.mxu0 0.0
        %2405 = vmatpush1.msra.mxu0 0.0
        %2406 = vmatprep.subr.mxu0 0.0
        %2407 = vmatpush1.msra.mxu0 0.0
        %2408 = vmatprep.subr.mxu0 0.0
        %2409 = vmatpush1.msra.mxu0 0.0
        %2410 = vmatprep.subr.mxu0 0.0
        %2411 = vmatpush1.msra.mxu0 0.0
        %2412 = vmatprep.subr.mxu0 0.0
        %2413 = vmatpush1.msra.mxu0 0.0
        %2414 = vmatprep.subr.mxu0 0.0
        %2415 = vmatpush1.msra.mxu0 0.0
        %2416 = vmatprep.subr.mxu0 0.0
        %2417 = vmatpush1.msra.mxu0 0.0
        %2418 = vmatprep.mubr.f32.mxu0 0.0
        %v2419 = vand.u32 %v1967, 4294901760
        %v2420 = vsub.f32 %v1967, %v2419
        %v2421 = vand.u32 %v2420, 4294901760
        %2422 = vmatmul.mubr.f32.gmra.mrb[0].mxu0 %v2421
        %v2423 = vpop.f32.mrb[0].mxu0
        %v2424 = vadd.f32 %v2328, %v2423
        %v2425 = vpop.f32.mrb[0].mxu0
        %2426 = vmatprep.mubr.f32.mxu0 0.0
        %v2427 = vand.u32 %v1968, 4294901760
        %v2428 = vsub.f32 %v1968, %v2427
        %v2429 = vand.u32 %v2428, 4294901760
        %2430 = vmatmul.mubr.f32.gmra.mrb[0].mxu0 %v2429
        %v2431 = vpop.f32.mrb[0].mxu0
        %v2432 = vadd.f32 %v2335, %v2431
        %v2433 = vpop.f32.mrb[0].mxu0
        %2434 = vdwg.mxu0
        %2435 = vmatprep.subr.mxu0 0.0
        %v2436 = vand.u32 %v455, 4294901760
        %v2437 = vsub.f32 %v455, %v2436
        %v2438 = vand.u32 %v2437, 4294901760
        %2439 = vmatpush1.msra.mxu0 %v2438
        %2440 = vmatprep.subr.mxu0 0.0
        %v2441 = vand.u32 %v456, 4294901760
        %v2442 = vsub.f32 %v456, %v2441
        %v2443 = vand.u32 %v2442, 4294901760
        %2444 = vmatpush1.msra.mxu0 %v2443
        %2445 = vmatprep.subr.mxu0 0.0
        %v2446 = vand.u32 %v457, 4294901760
        %v2447 = vsub.f32 %v457, %v2446
        %v2448 = vand.u32 %v2447, 4294901760
        %2449 = vmatpush1.msra.mxu0 %v2448
        %2450 = vmatprep.subr.mxu0 0.0
        %v2451 = vand.u32 %v458, 4294901760
        %v2452 = vsub.f32 %v458, %v2451
        %v2453 = vand.u32 %v2452, 4294901760
        %2454 = vmatpush1.msra.mxu0 %v2453
        %2455 = vmatprep.subr.mxu0 0.0
        %v2456 = vand.u32 %v459, 4294901760
        %v2457 = vsub.f32 %v459, %v2456
        %v2458 = vand.u32 %v2457, 4294901760
        %2459 = vmatpush1.msra.mxu0 %v2458
        %2460 = vmatprep.subr.mxu0 0.0
        %v2461 = vand.u32 %v460, 4294901760
        %v2462 = vsub.f32 %v460, %v2461
        %v2463 = vand.u32 %v2462, 4294901760
        %2464 = vmatpush1.msra.mxu0 %v2463
        %2465 = vmatprep.subr.mxu0 0.0
        %v2466 = vand.u32 %v461, 4294901760
        %v2467 = vsub.f32 %v461, %v2466
        %v2468 = vand.u32 %v2467, 4294901760
        %2469 = vmatpush1.msra.mxu0 %v2468
        %2470 = vmatprep.subr.mxu0 0.0
        %v2471 = vand.u32 %v462, 4294901760
        %v2472 = vsub.f32 %v462, %v2471
        %v2473 = vand.u32 %v2472, 4294901760
        %2474 = vmatpush1.msra.mxu0 %v2473
        %2475 = vmatprep.subr.mxu0 0.0
        %v2476 = vand.u32 %v463, 4294901760
        %v2477 = vsub.f32 %v463, %v2476
        %v2478 = vand.u32 %v2477, 4294901760
        %2479 = vmatpush1.msra.mxu0 %v2478
        %2480 = vmatprep.subr.mxu0 0.0
        %v2481 = vand.u32 %v464, 4294901760
        %v2482 = vsub.f32 %v464, %v2481
        %v2483 = vand.u32 %v2482, 4294901760
        %2484 = vmatpush1.msra.mxu0 %v2483
        %2485 = vmatprep.subr.mxu0 0.0
        %v2486 = vand.u32 %v465, 4294901760
        %v2487 = vsub.f32 %v465, %v2486
        %v2488 = vand.u32 %v2487, 4294901760
        %2489 = vmatpush1.msra.mxu0 %v2488
        %2490 = vmatprep.subr.mxu0 0.0
        %v2491 = vand.u32 %v466, 4294901760
        %v2492 = vsub.f32 %v466, %v2491
        %v2493 = vand.u32 %v2492, 4294901760
        %2494 = vmatpush1.msra.mxu0 %v2493
        %2495 = vmatprep.subr.mxu0 0.0
        %v2496 = vand.u32 %v467, 4294901760
        %v2497 = vsub.f32 %v467, %v2496
        %v2498 = vand.u32 %v2497, 4294901760
        %2499 = vmatpush1.msra.mxu0 %v2498
        %2500 = vmatprep.subr.mxu0 0.0
        %v2501 = vand.u32 %v468, 4294901760
        %v2502 = vsub.f32 %v468, %v2501
        %v2503 = vand.u32 %v2502, 4294901760
        %2504 = vmatpush1.msra.mxu0 %v2503
        %2505 = vmatprep.subr.mxu0 0.0
        %v2506 = vand.u32 %v469, 4294901760
        %v2507 = vsub.f32 %v469, %v2506
        %v2508 = vand.u32 %v2507, 4294901760
        %2509 = vmatpush1.msra.mxu0 %v2508
        %2510 = vmatprep.subr.mxu0 0.0
        %v2511 = vand.u32 %v470, 4294901760
        %v2512 = vsub.f32 %v470, %v2511
        %v2513 = vand.u32 %v2512, 4294901760
        %2514 = vmatpush1.msra.mxu0 %v2513
        %2515 = vmatprep.subr.mxu0 0.0
        %2516 = vmatpush1.msra.mxu0 0.0
        %2517 = vmatprep.subr.mxu0 0.0
        %2518 = vmatpush1.msra.mxu0 0.0
        %2519 = vmatprep.subr.mxu0 0.0
        %2520 = vmatpush1.msra.mxu0 0.0
        %2521 = vmatprep.subr.mxu0 0.0
        %2522 = vmatpush1.msra.mxu0 0.0
        %2523 = vmatprep.subr.mxu0 0.0
        %2524 = vmatpush1.msra.mxu0 0.0
        %2525 = vmatprep.subr.mxu0 0.0
        %2526 = vmatpush1.msra.mxu0 0.0
        %2527 = vmatprep.subr.mxu0 0.0
        %2528 = vmatpush1.msra.mxu0 0.0
        %2529 = vmatprep.subr.mxu0 0.0
        %2530 = vmatpush1.msra.mxu0 0.0
        %2531 = vmatprep.subr.mxu0 0.0
        %2532 = vmatpush1.msra.mxu0 0.0
        %2533 = vmatprep.subr.mxu0 0.0
        %2534 = vmatpush1.msra.mxu0 0.0
        %2535 = vmatprep.subr.mxu0 0.0
        %2536 = vmatpush1.msra.mxu0 0.0
        %2537 = vmatprep.subr.mxu0 0.0
        %2538 = vmatpush1.msra.mxu0 0.0
        %2539 = vmatprep.subr.mxu0 0.0
        %2540 = vmatpush1.msra.mxu0 0.0
        %2541 = vmatprep.subr.mxu0 0.0
        %2542 = vmatpush1.msra.mxu0 0.0
        %2543 = vmatprep.subr.mxu0 0.0
        %2544 = vmatpush1.msra.mxu0 0.0
        %2545 = vmatprep.subr.mxu0 0.0
        %2546 = vmatpush1.msra.mxu0 0.0
        %2547 = vmatprep.mubr.f32.mxu0 0.0
        %v2548 = vand.u32 %v1967, 4294901760
        %2549 = vmatmul.mubr.f32.gmra.mrb[0].mxu0 %v2548
        %v2550 = vpop.f32.mrb[0].mxu0
        %v2551 = vadd.f32 %v2424, %v2550
        %v2552 = vpop.f32.mrb[0].mxu0
        %2553 = vmatprep.mubr.f32.mxu0 0.0
        %v2554 = vand.u32 %v1968, 4294901760
        %2555 = vmatmul.mubr.f32.gmra.mrb[0].mxu0 %v2554
        %v2556 = vpop.f32.mrb[0].mxu0
        %v2557 = vadd.f32 %v2432, %v2556
        %v2558 = vpop.f32.mrb[0].mxu0
        %2559 = vdwg.mxu0
        %2560 = vmatprep.subr.mxu0 0.0
        %v2561 = vand.u32 %v455, 4294901760
        %2562 = vmatpush1.msra.mxu0 %v2561
        %2563 = vmatprep.subr.mxu0 0.0
        %v2564 = vand.u32 %v456, 4294901760
        %2565 = vmatpush1.msra.mxu0 %v2564
        %2566 = vmatprep.subr.mxu0 0.0
        %v2567 = vand.u32 %v457, 4294901760
        %2568 = vmatpush1.msra.mxu0 %v2567
        %2569 = vmatprep.subr.mxu0 0.0
        %v2570 = vand.u32 %v458, 4294901760
        %2571 = vmatpush1.msra.mxu0 %v2570
        %2572 = vmatprep.subr.mxu0 0.0
        %v2573 = vand.u32 %v459, 4294901760
        %2574 = vmatpush1.msra.mxu0 %v2573
        %2575 = vmatprep.subr.mxu0 0.0
        %v2576 = vand.u32 %v460, 4294901760
        %2577 = vmatpush1.msra.mxu0 %v2576
        %2578 = vmatprep.subr.mxu0 0.0
        %v2579 = vand.u32 %v461, 4294901760
        %2580 = vmatpush1.msra.mxu0 %v2579
        %2581 = vmatprep.subr.mxu0 0.0
        %v2582 = vand.u32 %v462, 4294901760
        %2583 = vmatpush1.msra.mxu0 %v2582
        %2584 = vmatprep.subr.mxu0 0.0
        %v2585 = vand.u32 %v463, 4294901760
        %2586 = vmatpush1.msra.mxu0 %v2585
        %2587 = vmatprep.subr.mxu0 0.0
        %v2588 = vand.u32 %v464, 4294901760
        %2589 = vmatpush1.msra.mxu0 %v2588
        %2590 = vmatprep.subr.mxu0 0.0
        %v2591 = vand.u32 %v465, 4294901760
        %2592 = vmatpush1.msra.mxu0 %v2591
        %2593 = vmatprep.subr.mxu0 0.0
        %v2594 = vand.u32 %v466, 4294901760
        %2595 = vmatpush1.msra.mxu0 %v2594
        %2596 = vmatprep.subr.mxu0 0.0
        %v2597 = vand.u32 %v467, 4294901760
        %2598 = vmatpush1.msra.mxu0 %v2597
        %2599 = vmatprep.subr.mxu0 0.0
        %v2600 = vand.u32 %v468, 4294901760
        %2601 = vmatpush1.msra.mxu0 %v2600
        %2602 = vmatprep.subr.mxu0 0.0
        %v2603 = vand.u32 %v469, 4294901760
        %2604 = vmatpush1.msra.mxu0 %v2603
        %2605 = vmatprep.subr.mxu0 0.0
        %v2606 = vand.u32 %v470, 4294901760
        %2607 = vmatpush1.msra.mxu0 %v2606
        %2608 = vmatprep.subr.mxu0 0.0
        %2609 = vmatpush1.msra.mxu0 0.0
        %2610 = vmatprep.subr.mxu0 0.0
        %2611 = vmatpush1.msra.mxu0 0.0
        %2612 = vmatprep.subr.mxu0 0.0
        %2613 = vmatpush1.msra.mxu0 0.0
        %2614 = vmatprep.subr.mxu0 0.0
        %2615 = vmatpush1.msra.mxu0 0.0
        %2616 = vmatprep.subr.mxu0 0.0
        %2617 = vmatpush1.msra.mxu0 0.0
        %2618 = vmatprep.subr.mxu0 0.0
        %2619 = vmatpush1.msra.mxu0 0.0
        %2620 = vmatprep.subr.mxu0 0.0
        %2621 = vmatpush1.msra.mxu0 0.0
        %2622 = vmatprep.subr.mxu0 0.0
        %2623 = vmatpush1.msra.mxu0 0.0
        %2624 = vmatprep.subr.mxu0 0.0
        %2625 = vmatpush1.msra.mxu0 0.0
        %2626 = vmatprep.subr.mxu0 0.0
        %2627 = vmatpush1.msra.mxu0 0.0
        %2628 = vmatprep.subr.mxu0 0.0
        %2629 = vmatpush1.msra.mxu0 0.0
        %2630 = vmatprep.subr.mxu0 0.0
        %2631 = vmatpush1.msra.mxu0 0.0
        %2632 = vmatprep.subr.mxu0 0.0
        %2633 = vmatpush1.msra.mxu0 0.0
        %2634 = vmatprep.subr.mxu0 0.0
        %2635 = vmatpush1.msra.mxu0 0.0
        %2636 = vmatprep.subr.mxu0 0.0
        %2637 = vmatpush1.msra.mxu0 0.0
        %2638 = vmatprep.subr.mxu0 0.0
        %2639 = vmatpush1.msra.mxu0 0.0
        %2640 = vmatprep.mubr.f32.mxu0 0.0
        %v2641 = vand.u32 %v1967, 4294901760
        %2642 = vmatmul.mubr.f32.gmra.mrb[0].mxu0 %v2641
        %v2643 = vpop.f32.mrb[0].mxu0
        %v2644 = vadd.f32 %v2551, %v2643
        %v2645 = vpop.f32.mrb[0].mxu0
        %2646 = vmatprep.mubr.f32.mxu0 0.0
        %v2647 = vand.u32 %v1968, 4294901760
        %2648 = vmatmul.mubr.f32.gmra.mrb[0].mxu0 %v2647
        %v2649 = vpop.f32.mrb[0].mxu0
        %v2650 = vadd.f32 %v2557, %v2649
        %v2651 = vpop.f32.mrb[0].mxu0
        %2652 = vdwg.mxu0
        %v2653 = vsel %vm1963, inf, %v1925
        %v2654 = vsel %vm1964, inf, %v1926
        %2655 = vmin.xlane.f32.xlu0 %v2653
        %v2656 = vpop.xlane.xlu0 %2655
        %2657 = vmin.xlane.f32.xlu0 %v2654
        %v2658 = vpop.xlane.xlu0 %2657
        %vm2659 = vcmp.eq.f32.partialorder %v2653, %v2656
        %vm2660 = vcmp.eq.f32.partialorder %v2654, %v2658
        %v2661 = vsel %vm2659, %v454, 128
        %v2662 = vsel %vm2660, %v454, 128
        %v2663 = vand.u32 %v2661, 65535
        %v2664 = vshra.s32 %v2661, 16
        %v2665 = vcvt.s32.f32 %v2663
        %v2666 = vcvt.s32.f32 %v2664
        %2667 = vmin.xlane.f32.xlu0 %v2666
        %v2668 = vpop.xlane.xlu0 %2667
        %vm2669 = vcmp.eq.f32.partialorder %v2666, %v2668
        %v2670 = vsel %vm2669, %v2665, inf
        %2671 = vmin.xlane.f32.xlu0 %v2670
        %v2672 = vpop.xlane.xlu0 %2671
        %v2673 = vcvt.f32.s32 %v2672
        %v2674 = vcvt.f32.s32 %v2668
        %v2675 = vshll.u32 %v2674, 16
        %v2676 = vadd.s32 %v2675, %v2673
        %v2677 = vand.u32 %v2662, 65535
        %v2678 = vshra.s32 %v2662, 16
        %v2679 = vcvt.s32.f32 %v2677
        %v2680 = vcvt.s32.f32 %v2678
        %2681 = vmin.xlane.f32.xlu0 %v2680
        %v2682 = vpop.xlane.xlu0 %2681
        %vm2683 = vcmp.eq.f32.partialorder %v2680, %v2682
        %v2684 = vsel %vm2683, %v2679, inf
        %2685 = vmin.xlane.f32.xlu0 %v2684
        %v2686 = vpop.xlane.xlu0 %2685
        %v2687 = vcvt.f32.s32 %v2686
        %v2688 = vcvt.f32.s32 %v2682
        %v2689 = vshll.u32 %v2688, 16
        %v2690 = vadd.s32 %v2689, %v2687
        %vm2691 = vcmp.eq.s32.totalorder %v454, %v2676
        %vm2692 = vcmp.eq.s32.totalorder %v454, %v2690
        %v2693 = vsel %vm2691, 1, 0
        %v2694 = vsel %vm2692, 1, 0
        %v2695 = vcvt.s32.f32 %v2693
        %v2696 = vcvt.s32.f32 %v2694
        %2697 = vmatprep.subr.mxu0 0.0
        %v2698 = vand.u32 %v455, 4294901760
        %2699 = vmatpush1.msra.mxu0 %v2698
        %2700 = vmatprep.subr.mxu0 0.0
        %v2701 = vand.u32 %v456, 4294901760
        %2702 = vmatpush1.msra.mxu0 %v2701
        %2703 = vmatprep.subr.mxu0 0.0
        %v2704 = vand.u32 %v457, 4294901760
        %2705 = vmatpush1.msra.mxu0 %v2704
        %2706 = vmatprep.subr.mxu0 0.0
        %v2707 = vand.u32 %v458, 4294901760
        %2708 = vmatpush1.msra.mxu0 %v2707
        %2709 = vmatprep.subr.mxu0 0.0
        %v2710 = vand.u32 %v459, 4294901760
        %2711 = vmatpush1.msra.mxu0 %v2710
        %2712 = vmatprep.subr.mxu0 0.0
        %v2713 = vand.u32 %v460, 4294901760
        %2714 = vmatpush1.msra.mxu0 %v2713
        %2715 = vmatprep.subr.mxu0 0.0
        %v2716 = vand.u32 %v461, 4294901760
        %2717 = vmatpush1.msra.mxu0 %v2716
        %2718 = vmatprep.subr.mxu0 0.0
        %v2719 = vand.u32 %v462, 4294901760
        %2720 = vmatpush1.msra.mxu0 %v2719
        %2721 = vmatprep.subr.mxu0 0.0
        %v2722 = vand.u32 %v463, 4294901760
        %2723 = vmatpush1.msra.mxu0 %v2722
        %2724 = vmatprep.subr.mxu0 0.0
        %v2725 = vand.u32 %v464, 4294901760
        %2726 = vmatpush1.msra.mxu0 %v2725
        %2727 = vmatprep.subr.mxu0 0.0
        %v2728 = vand.u32 %v465, 4294901760
        %2729 = vmatpush1.msra.mxu0 %v2728
        %2730 = vmatprep.subr.mxu0 0.0
        %v2731 = vand.u32 %v466, 4294901760
        %2732 = vmatpush1.msra.mxu0 %v2731
        %2733 = vmatprep.subr.mxu0 0.0
        %v2734 = vand.u32 %v467, 4294901760
        %2735 = vmatpush1.msra.mxu0 %v2734
        %2736 = vmatprep.subr.mxu0 0.0
        %v2737 = vand.u32 %v468, 4294901760
        %2738 = vmatpush1.msra.mxu0 %v2737
        %2739 = vmatprep.subr.mxu0 0.0
        %v2740 = vand.u32 %v469, 4294901760
        %2741 = vmatpush1.msra.mxu0 %v2740
        %2742 = vmatprep.subr.mxu0 0.0
        %v2743 = vand.u32 %v470, 4294901760
        %2744 = vmatpush1.msra.mxu0 %v2743
        %2745 = vmatprep.subr.mxu0 0.0
        %2746 = vmatpush1.msra.mxu0 0.0
        %2747 = vmatprep.subr.mxu0 0.0
        %2748 = vmatpush1.msra.mxu0 0.0
        %2749 = vmatprep.subr.mxu0 0.0
        %2750 = vmatpush1.msra.mxu0 0.0
        %2751 = vmatprep.subr.mxu0 0.0
        %2752 = vmatpush1.msra.mxu0 0.0
        %2753 = vmatprep.subr.mxu0 0.0
        %2754 = vmatpush1.msra.mxu0 0.0
        %2755 = vmatprep.subr.mxu0 0.0
        %2756 = vmatpush1.msra.mxu0 0.0
        %2757 = vmatprep.subr.mxu0 0.0
        %2758 = vmatpush1.msra.mxu0 0.0
        %2759 = vmatprep.subr.mxu0 0.0
        %2760 = vmatpush1.msra.mxu0 0.0
        %2761 = vmatprep.subr.mxu0 0.0
        %2762 = vmatpush1.msra.mxu0 0.0
        %2763 = vmatprep.subr.mxu0 0.0
        %2764 = vmatpush1.msra.mxu0 0.0
        %2765 = vmatprep.subr.mxu0 0.0
        %2766 = vmatpush1.msra.mxu0 0.0
        %2767 = vmatprep.subr.mxu0 0.0
        %2768 = vmatpush1.msra.mxu0 0.0
        %2769 = vmatprep.subr.mxu0 0.0
        %2770 = vmatpush1.msra.mxu0 0.0
        %2771 = vmatprep.subr.mxu0 0.0
        %2772 = vmatpush1.msra.mxu0 0.0
        %2773 = vmatprep.subr.mxu0 0.0
        %2774 = vmatpush1.msra.mxu0 0.0
        %2775 = vmatprep.subr.mxu0 0.0
        %2776 = vmatpush1.msra.mxu0 0.0
        %2777 = vmatprep.mubr.f32.mxu0 0.0
        %v2778 = vand.u32 %v2695, 4294901760
        %v2779 = vsub.f32 %v2695, %v2778
        %v2780 = vand.u32 %v2779, 4294901760
        %v2781 = vsub.f32 %v2779, %v2780
        %v2782 = vand.u32 %v2781, 4294901760
        %2783 = vmatmul.mubr.f32.gmra.mrb[0].mxu0 %v2782
        %v2784 = vpop.f32.mrb[0].mxu0
        %v2785 = vadd.f32 0.0, %v2784
        %v2786 = vpop.f32.mrb[0].mxu0
        %2787 = vmatprep.mubr.f32.mxu0 0.0
        %v2788 = vand.u32 %v2696, 4294901760
        %v2789 = vsub.f32 %v2696, %v2788
        %v2790 = vand.u32 %v2789, 4294901760
        %v2791 = vsub.f32 %v2789, %v2790
        %v2792 = vand.u32 %v2791, 4294901760
        %2793 = vmatmul.mubr.f32.gmra.mrb[0].mxu0 %v2792
        %v2794 = vpop.f32.mrb[0].mxu0
        %v2795 = vadd.f32 0.0, %v2794
        %v2796 = vpop.f32.mrb[0].mxu0
        %2797 = vdwg.mxu0
        %2798 = vmatprep.subr.mxu0 0.0
        %v2799 = vand.u32 %v455, 4294901760
        %v2800 = vsub.f32 %v455, %v2799
        %v2801 = vand.u32 %v2800, 4294901760
        %v2802 = vsub.f32 %v2800, %v2801
        %v2803 = vand.u32 %v2802, 4294901760
        %2804 = vmatpush1.msra.mxu0 %v2803
        %2805 = vmatprep.subr.mxu0 0.0
        %v2806 = vand.u32 %v456, 4294901760
        %v2807 = vsub.f32 %v456, %v2806
        %v2808 = vand.u32 %v2807, 4294901760
        %v2809 = vsub.f32 %v2807, %v2808
        %v2810 = vand.u32 %v2809, 4294901760
        %2811 = vmatpush1.msra.mxu0 %v2810
        %2812 = vmatprep.subr.mxu0 0.0
        %v2813 = vand.u32 %v457, 4294901760
        %v2814 = vsub.f32 %v457, %v2813
        %v2815 = vand.u32 %v2814, 4294901760
        %v2816 = vsub.f32 %v2814, %v2815
        %v2817 = vand.u32 %v2816, 4294901760
        %2818 = vmatpush1.msra.mxu0 %v2817
        %2819 = vmatprep.subr.mxu0 0.0
        %v2820 = vand.u32 %v458, 4294901760
        %v2821 = vsub.f32 %v458, %v2820
        %v2822 = vand.u32 %v2821, 4294901760
        %v2823 = vsub.f32 %v2821, %v2822
        %v2824 = vand.u32 %v2823, 4294901760
        %2825 = vmatpush1.msra.mxu0 %v2824
        %2826 = vmatprep.subr.mxu0 0.0
        %v2827 = vand.u32 %v459, 4294901760
        %v2828 = vsub.f32 %v459, %v2827
        %v2829 = vand.u32 %v2828, 4294901760
        %v2830 = vsub.f32 %v2828, %v2829
        %v2831 = vand.u32 %v2830, 4294901760
        %2832 = vmatpush1.msra.mxu0 %v2831
        %2833 = vmatprep.subr.mxu0 0.0
        %v2834 = vand.u32 %v460, 4294901760
        %v2835 = vsub.f32 %v460, %v2834
        %v2836 = vand.u32 %v2835, 4294901760
        %v2837 = vsub.f32 %v2835, %v2836
        %v2838 = vand.u32 %v2837, 4294901760
        %2839 = vmatpush1.msra.mxu0 %v2838
        %2840 = vmatprep.subr.mxu0 0.0
        %v2841 = vand.u32 %v461, 4294901760
        %v2842 = vsub.f32 %v461, %v2841
        %v2843 = vand.u32 %v2842, 4294901760
        %v2844 = vsub.f32 %v2842, %v2843
        %v2845 = vand.u32 %v2844, 4294901760
        %2846 = vmatpush1.msra.mxu0 %v2845
        %2847 = vmatprep.subr.mxu0 0.0
        %v2848 = vand.u32 %v462, 4294901760
        %v2849 = vsub.f32 %v462, %v2848
        %v2850 = vand.u32 %v2849, 4294901760
        %v2851 = vsub.f32 %v2849, %v2850
        %v2852 = vand.u32 %v2851, 4294901760
        %2853 = vmatpush1.msra.mxu0 %v2852
        %2854 = vmatprep.subr.mxu0 0.0
        %v2855 = vand.u32 %v463, 4294901760
        %v2856 = vsub.f32 %v463, %v2855
        %v2857 = vand.u32 %v2856, 4294901760
        %v2858 = vsub.f32 %v2856, %v2857
        %v2859 = vand.u32 %v2858, 4294901760
        %2860 = vmatpush1.msra.mxu0 %v2859
        %2861 = vmatprep.subr.mxu0 0.0
        %v2862 = vand.u32 %v464, 4294901760
        %v2863 = vsub.f32 %v464, %v2862
        %v2864 = vand.u32 %v2863, 4294901760
        %v2865 = vsub.f32 %v2863, %v2864
        %v2866 = vand.u32 %v2865, 4294901760
        %2867 = vmatpush1.msra.mxu0 %v2866
        %2868 = vmatprep.subr.mxu0 0.0
        %v2869 = vand.u32 %v465, 4294901760
        %v2870 = vsub.f32 %v465, %v2869
        %v2871 = vand.u32 %v2870, 4294901760
        %v2872 = vsub.f32 %v2870, %v2871
        %v2873 = vand.u32 %v2872, 4294901760
        %2874 = vmatpush1.msra.mxu0 %v2873
        %2875 = vmatprep.subr.mxu0 0.0
        %v2876 = vand.u32 %v466, 4294901760
        %v2877 = vsub.f32 %v466, %v2876
        %v2878 = vand.u32 %v2877, 4294901760
        %v2879 = vsub.f32 %v2877, %v2878
        %v2880 = vand.u32 %v2879, 4294901760
        %2881 = vmatpush1.msra.mxu0 %v2880
        %2882 = vmatprep.subr.mxu0 0.0
        %v2883 = vand.u32 %v467, 4294901760
        %v2884 = vsub.f32 %v467, %v2883
        %v2885 = vand.u32 %v2884, 4294901760
        %v2886 = vsub.f32 %v2884, %v2885
        %v2887 = vand.u32 %v2886, 4294901760
        %2888 = vmatpush1.msra.mxu0 %v2887
        %2889 = vmatprep.subr.mxu0 0.0
        %v2890 = vand.u32 %v468, 4294901760
        %v2891 = vsub.f32 %v468, %v2890
        %v2892 = vand.u32 %v2891, 4294901760
        %v2893 = vsub.f32 %v2891, %v2892
        %v2894 = vand.u32 %v2893, 4294901760
        %2895 = vmatpush1.msra.mxu0 %v2894
        %2896 = vmatprep.subr.mxu0 0.0
        %v2897 = vand.u32 %v469, 4294901760
        %v2898 = vsub.f32 %v469, %v2897
        %v2899 = vand.u32 %v2898, 4294901760
        %v2900 = vsub.f32 %v2898, %v2899
        %v2901 = vand.u32 %v2900, 4294901760
        %2902 = vmatpush1.msra.mxu0 %v2901
        %2903 = vmatprep.subr.mxu0 0.0
        %v2904 = vand.u32 %v470, 4294901760
        %v2905 = vsub.f32 %v470, %v2904
        %v2906 = vand.u32 %v2905, 4294901760
        %v2907 = vsub.f32 %v2905, %v2906
        %v2908 = vand.u32 %v2907, 4294901760
        %2909 = vmatpush1.msra.mxu0 %v2908
        %2910 = vmatprep.subr.mxu0 0.0
        %2911 = vmatpush1.msra.mxu0 0.0
        %2912 = vmatprep.subr.mxu0 0.0
        %2913 = vmatpush1.msra.mxu0 0.0
        %2914 = vmatprep.subr.mxu0 0.0
        %2915 = vmatpush1.msra.mxu0 0.0
        %2916 = vmatprep.subr.mxu0 0.0
        %2917 = vmatpush1.msra.mxu0 0.0
        %2918 = vmatprep.subr.mxu0 0.0
        %2919 = vmatpush1.msra.mxu0 0.0
        %2920 = vmatprep.subr.mxu0 0.0
        %2921 = vmatpush1.msra.mxu0 0.0
        %2922 = vmatprep.subr.mxu0 0.0
        %2923 = vmatpush1.msra.mxu0 0.0
        %2924 = vmatprep.subr.mxu0 0.0
        %2925 = vmatpush1.msra.mxu0 0.0
        %2926 = vmatprep.subr.mxu0 0.0
        %2927 = vmatpush1.msra.mxu0 0.0
        %2928 = vmatprep.subr.mxu0 0.0
        %2929 = vmatpush1.msra.mxu0 0.0
        %2930 = vmatprep.subr.mxu0 0.0
        %2931 = vmatpush1.msra.mxu0 0.0
        %2932 = vmatprep.subr.mxu0 0.0
        %2933 = vmatpush1.msra.mxu0 0.0
        %2934 = vmatprep.subr.mxu0 0.0
        %2935 = vmatpush1.msra.mxu0 0.0
        %2936 = vmatprep.subr.mxu0 0.0
        %2937 = vmatpush1.msra.mxu0 0.0
        %2938 = vmatprep.subr.mxu0 0.0
        %2939 = vmatpush1.msra.mxu0 0.0
        %2940 = vmatprep.subr.mxu0 0.0
        %2941 = vmatpush1.msra.mxu0 0.0
        %2942 = vmatprep.mubr.f32.mxu0 0.0
        %v2943 = vand.u32 %v2695, 4294901760
        %2944 = vmatmul.mubr.f32.gmra.mrb[0].mxu0 %v2943
        %v2945 = vpop.f32.mrb[0].mxu0
        %v2946 = vadd.f32 %v2785, %v2945
        %v2947 = vpop.f32.mrb[0].mxu0
        %2948 = vmatprep.mubr.f32.mxu0 0.0
        %v2949 = vand.u32 %v2696, 4294901760
        %2950 = vmatmul.mubr.f32.gmra.mrb[0].mxu0 %v2949
        %v2951 = vpop.f32.mrb[0].mxu0
        %v2952 = vadd.f32 %v2795, %v2951
        %v2953 = vpop.f32.mrb[0].mxu0
        %2954 = vdwg.mxu0
        %2955 = vmatprep.subr.mxu0 0.0
        %v2956 = vand.u32 %v455, 4294901760
        %v2957 = vsub.f32 %v455, %v2956
        %2958 = vmatpush1.msra.mxu0 %v2957
        %2959 = vmatprep.subr.mxu0 0.0
        %v2960 = vand.u32 %v456, 4294901760
        %v2961 = vsub.f32 %v456, %v2960
        %2962 = vmatpush1.msra.mxu0 %v2961
        %2963 = vmatprep.subr.mxu0 0.0
        %v2964 = vand.u32 %v457, 4294901760
        %v2965 = vsub.f32 %v457, %v2964
        %2966 = vmatpush1.msra.mxu0 %v2965
        %2967 = vmatprep.subr.mxu0 0.0
        %v2968 = vand.u32 %v458, 4294901760
        %v2969 = vsub.f32 %v458, %v2968
        %2970 = vmatpush1.msra.mxu0 %v2969
        %2971 = vmatprep.subr.mxu0 0.0
        %v2972 = vand.u32 %v459, 4294901760
        %v2973 = vsub.f32 %v459, %v2972
        %2974 = vmatpush1.msra.mxu0 %v2973
        %2975 = vmatprep.subr.mxu0 0.0
        %v2976 = vand.u32 %v460, 4294901760
        %v2977 = vsub.f32 %v460, %v2976
        %2978 = vmatpush1.msra.mxu0 %v2977
        %2979 = vmatprep.subr.mxu0 0.0
        %v2980 = vand.u32 %v461, 4294901760
        %v2981 = vsub.f32 %v461, %v2980
        %2982 = vmatpush1.msra.mxu0 %v2981
        %2983 = vmatprep.subr.mxu0 0.0
        %v2984 = vand.u32 %v462, 4294901760
        %v2985 = vsub.f32 %v462, %v2984
        %2986 = vmatpush1.msra.mxu0 %v2985
        %2987 = vmatprep.subr.mxu0 0.0
        %v2988 = vand.u32 %v463, 4294901760
        %v2989 = vsub.f32 %v463, %v2988
        %2990 = vmatpush1.msra.mxu0 %v2989
        %2991 = vmatprep.subr.mxu0 0.0
        %v2992 = vand.u32 %v464, 4294901760
        %v2993 = vsub.f32 %v464, %v2992
        %2994 = vmatpush1.msra.mxu0 %v2993
        %2995 = vmatprep.subr.mxu0 0.0
        %v2996 = vand.u32 %v465, 4294901760
        %v2997 = vsub.f32 %v465, %v2996
        %2998 = vmatpush1.msra.mxu0 %v2997
        %2999 = vmatprep.subr.mxu0 0.0
        %v3000 = vand.u32 %v466, 4294901760
        %v3001 = vsub.f32 %v466, %v3000
        %3002 = vmatpush1.msra.mxu0 %v3001
        %3003 = vmatprep.subr.mxu0 0.0
        %v3004 = vand.u32 %v467, 4294901760
        %v3005 = vsub.f32 %v467, %v3004
        %3006 = vmatpush1.msra.mxu0 %v3005
        %3007 = vmatprep.subr.mxu0 0.0
        %v3008 = vand.u32 %v468, 4294901760
        %v3009 = vsub.f32 %v468, %v3008
        %3010 = vmatpush1.msra.mxu0 %v3009
        %3011 = vmatprep.subr.mxu0 0.0
        %v3012 = vand.u32 %v469, 4294901760
        %v3013 = vsub.f32 %v469, %v3012
        %3014 = vmatpush1.msra.mxu0 %v3013
        %3015 = vmatprep.subr.mxu0 0.0
        %v3016 = vand.u32 %v470, 4294901760
        %v3017 = vsub.f32 %v470, %v3016
        %3018 = vmatpush1.msra.mxu0 %v3017
        %3019 = vmatprep.subr.mxu0 0.0
        %3020 = vmatpush1.msra.mxu0 0.0
        %3021 = vmatprep.subr.mxu0 0.0
        %3022 = vmatpush1.msra.mxu0 0.0
        %3023 = vmatprep.subr.mxu0 0.0
        %3024 = vmatpush1.msra.mxu0 0.0
        %3025 = vmatprep.subr.mxu0 0.0
        %3026 = vmatpush1.msra.mxu0 0.0
        %3027 = vmatprep.subr.mxu0 0.0
        %3028 = vmatpush1.msra.mxu0 0.0
        %3029 = vmatprep.subr.mxu0 0.0
        %3030 = vmatpush1.msra.mxu0 0.0
        %3031 = vmatprep.subr.mxu0 0.0
        %3032 = vmatpush1.msra.mxu0 0.0
        %3033 = vmatprep.subr.mxu0 0.0
        %3034 = vmatpush1.msra.mxu0 0.0
        %3035 = vmatprep.subr.mxu0 0.0
        %3036 = vmatpush1.msra.mxu0 0.0
        %3037 = vmatprep.subr.mxu0 0.0
        %3038 = vmatpush1.msra.mxu0 0.0
        %3039 = vmatprep.subr.mxu0 0.0
        %3040 = vmatpush1.msra.mxu0 0.0
        %3041 = vmatprep.subr.mxu0 0.0
        %3042 = vmatpush1.msra.mxu0 0.0
        %3043 = vmatprep.subr.mxu0 0.0
        %3044 = vmatpush1.msra.mxu0 0.0
        %3045 = vmatprep.subr.mxu0 0.0
        %3046 = vmatpush1.msra.mxu0 0.0
        %3047 = vmatprep.subr.mxu0 0.0
        %3048 = vmatpush1.msra.mxu0 0.0
        %3049 = vmatprep.subr.mxu0 0.0
        %3050 = vmatpush1.msra.mxu0 0.0
        %3051 = vmatprep.mubr.f32.mxu0 0.0
        %v3052 = vand.u32 %v2695, 4294901760
        %v3053 = vsub.f32 %v2695, %v3052
        %3054 = vmatmul.mubr.f32.gmra.mrb[0].mxu0 %v3053
        %v3055 = vpop.f32.mrb[0].mxu0
        %v3056 = vadd.f32 %v2946, %v3055
        %v3057 = vpop.f32.mrb[0].mxu0
        %3058 = vmatprep.mubr.f32.mxu0 0.0
        %v3059 = vand.u32 %v2696, 4294901760
        %v3060 = vsub.f32 %v2696, %v3059
        %3061 = vmatmul.mubr.f32.gmra.mrb[0].mxu0 %v3060
        %v3062 = vpop.f32.mrb[0].mxu0
        %v3063 = vadd.f32 %v2952, %v3062
        %v3064 = vpop.f32.mrb[0].mxu0
        %3065 = vdwg.mxu0
        %3066 = vmatprep.subr.mxu0 0.0
        %v3067 = vand.u32 %v455, 4294901760
        %3068 = vmatpush1.msra.mxu0 %v3067
        %3069 = vmatprep.subr.mxu0 0.0
        %v3070 = vand.u32 %v456, 4294901760
        %3071 = vmatpush1.msra.mxu0 %v3070
        %3072 = vmatprep.subr.mxu0 0.0
        %v3073 = vand.u32 %v457, 4294901760
        %3074 = vmatpush1.msra.mxu0 %v3073
        %3075 = vmatprep.subr.mxu0 0.0
        %v3076 = vand.u32 %v458, 4294901760
        %3077 = vmatpush1.msra.mxu0 %v3076
        %3078 = vmatprep.subr.mxu0 0.0
        %v3079 = vand.u32 %v459, 4294901760
        %3080 = vmatpush1.msra.mxu0 %v3079
        %3081 = vmatprep.subr.mxu0 0.0
        %v3082 = vand.u32 %v460, 4294901760
        %3083 = vmatpush1.msra.mxu0 %v3082
        %3084 = vmatprep.subr.mxu0 0.0
        %v3085 = vand.u32 %v461, 4294901760
        %3086 = vmatpush1.msra.mxu0 %v3085
        %3087 = vmatprep.subr.mxu0 0.0
        %v3088 = vand.u32 %v462, 4294901760
        %3089 = vmatpush1.msra.mxu0 %v3088
        %3090 = vmatprep.subr.mxu0 0.0
        %v3091 = vand.u32 %v463, 4294901760
        %3092 = vmatpush1.msra.mxu0 %v3091
        %3093 = vmatprep.subr.mxu0 0.0
        %v3094 = vand.u32 %v464, 4294901760
        %3095 = vmatpush1.msra.mxu0 %v3094
        %3096 = vmatprep.subr.mxu0 0.0
        %v3097 = vand.u32 %v465, 4294901760
        %3098 = vmatpush1.msra.mxu0 %v3097
        %3099 = vmatprep.subr.mxu0 0.0
        %v3100 = vand.u32 %v466, 4294901760
        %3101 = vmatpush1.msra.mxu0 %v3100
        %3102 = vmatprep.subr.mxu0 0.0
        %v3103 = vand.u32 %v467, 4294901760
        %3104 = vmatpush1.msra.mxu0 %v3103
        %3105 = vmatprep.subr.mxu0 0.0
        %v3106 = vand.u32 %v468, 4294901760
        %3107 = vmatpush1.msra.mxu0 %v3106
        %3108 = vmatprep.subr.mxu0 0.0
        %v3109 = vand.u32 %v469, 4294901760
        %3110 = vmatpush1.msra.mxu0 %v3109
        %3111 = vmatprep.subr.mxu0 0.0
        %v3112 = vand.u32 %v470, 4294901760
        %3113 = vmatpush1.msra.mxu0 %v3112
        %3114 = vmatprep.subr.mxu0 0.0
        %3115 = vmatpush1.msra.mxu0 0.0
        %3116 = vmatprep.subr.mxu0 0.0
        %3117 = vmatpush1.msra.mxu0 0.0
        %3118 = vmatprep.subr.mxu0 0.0
        %3119 = vmatpush1.msra.mxu0 0.0
        %3120 = vmatprep.subr.mxu0 0.0
        %3121 = vmatpush1.msra.mxu0 0.0
        %3122 = vmatprep.subr.mxu0 0.0
        %3123 = vmatpush1.msra.mxu0 0.0
        %3124 = vmatprep.subr.mxu0 0.0
        %3125 = vmatpush1.msra.mxu0 0.0
        %3126 = vmatprep.subr.mxu0 0.0
        %3127 = vmatpush1.msra.mxu0 0.0
        %3128 = vmatprep.subr.mxu0 0.0
        %3129 = vmatpush1.msra.mxu0 0.0
        %3130 = vmatprep.subr.mxu0 0.0
        %3131 = vmatpush1.msra.mxu0 0.0
        %3132 = vmatprep.subr.mxu0 0.0
        %3133 = vmatpush1.msra.mxu0 0.0
        %3134 = vmatprep.subr.mxu0 0.0
        %3135 = vmatpush1.msra.mxu0 0.0
        %3136 = vmatprep.subr.mxu0 0.0
        %3137 = vmatpush1.msra.mxu0 0.0
        %3138 = vmatprep.subr.mxu0 0.0
        %3139 = vmatpush1.msra.mxu0 0.0
        %3140 = vmatprep.subr.mxu0 0.0
        %3141 = vmatpush1.msra.mxu0 0.0
        %3142 = vmatprep.subr.mxu0 0.0
        %3143 = vmatpush1.msra.mxu0 0.0
        %3144 = vmatprep.subr.mxu0 0.0
        %3145 = vmatpush1.msra.mxu0 0.0
        %3146 = vmatprep.mubr.f32.mxu0 0.0
        %v3147 = vand.u32 %v2695, 4294901760
        %v3148 = vsub.f32 %v2695, %v3147
        %v3149 = vand.u32 %v3148, 4294901760
        %3150 = vmatmul.mubr.f32.gmra.mrb[0].mxu0 %v3149
        %v3151 = vpop.f32.mrb[0].mxu0
        %v3152 = vadd.f32 %v3056, %v3151
        %v3153 = vpop.f32.mrb[0].mxu0
        %3154 = vmatprep.mubr.f32.mxu0 0.0
        %v3155 = vand.u32 %v2696, 4294901760
        %v3156 = vsub.f32 %v2696, %v3155
        %v3157 = vand.u32 %v3156, 4294901760
        %3158 = vmatmul.mubr.f32.gmra.mrb[0].mxu0 %v3157
        %v3159 = vpop.f32.mrb[0].mxu0
        %v3160 = vadd.f32 %v3063, %v3159
        %v3161 = vpop.f32.mrb[0].mxu0
        %3162 = vdwg.mxu0
        %3163 = vmatprep.subr.mxu0 0.0
        %v3164 = vand.u32 %v455, 4294901760
        %v3165 = vsub.f32 %v455, %v3164
        %v3166 = vand.u32 %v3165, 4294901760
        %3167 = vmatpush1.msra.mxu0 %v3166
        %3168 = vmatprep.subr.mxu0 0.0
        %v3169 = vand.u32 %v456, 4294901760
        %v3170 = vsub.f32 %v456, %v3169
        %v3171 = vand.u32 %v3170, 4294901760
        %3172 = vmatpush1.msra.mxu0 %v3171
        %3173 = vmatprep.subr.mxu0 0.0
        %v3174 = vand.u32 %v457, 4294901760
        %v3175 = vsub.f32 %v457, %v3174
        %v3176 = vand.u32 %v3175, 4294901760
        %3177 = vmatpush1.msra.mxu0 %v3176
        %3178 = vmatprep.subr.mxu0 0.0
        %v3179 = vand.u32 %v458, 4294901760
        %v3180 = vsub.f32 %v458, %v3179
        %v3181 = vand.u32 %v3180, 4294901760
        %3182 = vmatpush1.msra.mxu0 %v3181
        %3183 = vmatprep.subr.mxu0 0.0
        %v3184 = vand.u32 %v459, 4294901760
        %v3185 = vsub.f32 %v459, %v3184
        %v3186 = vand.u32 %v3185, 4294901760
        %3187 = vmatpush1.msra.mxu0 %v3186
        %3188 = vmatprep.subr.mxu0 0.0
        %v3189 = vand.u32 %v460, 4294901760
        %v3190 = vsub.f32 %v460, %v3189
        %v3191 = vand.u32 %v3190, 4294901760
        %3192 = vmatpush1.msra.mxu0 %v3191
        %3193 = vmatprep.subr.mxu0 0.0
        %v3194 = vand.u32 %v461, 4294901760
        %v3195 = vsub.f32 %v461, %v3194
        %v3196 = vand.u32 %v3195, 4294901760
        %3197 = vmatpush1.msra.mxu0 %v3196
        %3198 = vmatprep.subr.mxu0 0.0
        %v3199 = vand.u32 %v462, 4294901760
        %v3200 = vsub.f32 %v462, %v3199
        %v3201 = vand.u32 %v3200, 4294901760
        %3202 = vmatpush1.msra.mxu0 %v3201
        %3203 = vmatprep.subr.mxu0 0.0
        %v3204 = vand.u32 %v463, 4294901760
        %v3205 = vsub.f32 %v463, %v3204
        %v3206 = vand.u32 %v3205, 4294901760
        %3207 = vmatpush1.msra.mxu0 %v3206
        %3208 = vmatprep.subr.mxu0 0.0
        %v3209 = vand.u32 %v464, 4294901760
        %v3210 = vsub.f32 %v464, %v3209
        %v3211 = vand.u32 %v3210, 4294901760
        %3212 = vmatpush1.msra.mxu0 %v3211
        %3213 = vmatprep.subr.mxu0 0.0
        %v3214 = vand.u32 %v465, 4294901760
        %v3215 = vsub.f32 %v465, %v3214
        %v3216 = vand.u32 %v3215, 4294901760
        %3217 = vmatpush1.msra.mxu0 %v3216
        %3218 = vmatprep.subr.mxu0 0.0
        %v3219 = vand.u32 %v466, 4294901760
        %v3220 = vsub.f32 %v466, %v3219
        %v3221 = vand.u32 %v3220, 4294901760
        %3222 = vmatpush1.msra.mxu0 %v3221
        %3223 = vmatprep.subr.mxu0 0.0
        %v3224 = vand.u32 %v467, 4294901760
        %v3225 = vsub.f32 %v467, %v3224
        %v3226 = vand.u32 %v3225, 4294901760
        %3227 = vmatpush1.msra.mxu0 %v3226
        %3228 = vmatprep.subr.mxu0 0.0
        %v3229 = vand.u32 %v468, 4294901760
        %v3230 = vsub.f32 %v468, %v3229
        %v3231 = vand.u32 %v3230, 4294901760
        %3232 = vmatpush1.msra.mxu0 %v3231
        %3233 = vmatprep.subr.mxu0 0.0
        %v3234 = vand.u32 %v469, 4294901760
        %v3235 = vsub.f32 %v469, %v3234
        %v3236 = vand.u32 %v3235, 4294901760
        %3237 = vmatpush1.msra.mxu0 %v3236
        %3238 = vmatprep.subr.mxu0 0.0
        %v3239 = vand.u32 %v470, 4294901760
        %v3240 = vsub.f32 %v470, %v3239
        %v3241 = vand.u32 %v3240, 4294901760
        %3242 = vmatpush1.msra.mxu0 %v3241
        %3243 = vmatprep.subr.mxu0 0.0
        %3244 = vmatpush1.msra.mxu0 0.0
        %3245 = vmatprep.subr.mxu0 0.0
        %3246 = vmatpush1.msra.mxu0 0.0
        %3247 = vmatprep.subr.mxu0 0.0
        %3248 = vmatpush1.msra.mxu0 0.0
        %3249 = vmatprep.subr.mxu0 0.0
        %3250 = vmatpush1.msra.mxu0 0.0
        %3251 = vmatprep.subr.mxu0 0.0
        %3252 = vmatpush1.msra.mxu0 0.0
        %3253 = vmatprep.subr.mxu0 0.0
        %3254 = vmatpush1.msra.mxu0 0.0
        %3255 = vmatprep.subr.mxu0 0.0
        %3256 = vmatpush1.msra.mxu0 0.0
        %3257 = vmatprep.subr.mxu0 0.0
        %3258 = vmatpush1.msra.mxu0 0.0
        %3259 = vmatprep.subr.mxu0 0.0
        %3260 = vmatpush1.msra.mxu0 0.0
        %3261 = vmatprep.subr.mxu0 0.0
        %3262 = vmatpush1.msra.mxu0 0.0
        %3263 = vmatprep.subr.mxu0 0.0
        %3264 = vmatpush1.msra.mxu0 0.0
        %3265 = vmatprep.subr.mxu0 0.0
        %3266 = vmatpush1.msra.mxu0 0.0
        %3267 = vmatprep.subr.mxu0 0.0
        %3268 = vmatpush1.msra.mxu0 0.0
        %3269 = vmatprep.subr.mxu0 0.0
        %3270 = vmatpush1.msra.mxu0 0.0
        %3271 = vmatprep.subr.mxu0 0.0
        %3272 = vmatpush1.msra.mxu0 0.0
        %3273 = vmatprep.subr.mxu0 0.0
        %3274 = vmatpush1.msra.mxu0 0.0
        %3275 = vmatprep.mubr.f32.mxu0 0.0
        %v3276 = vand.u32 %v2695, 4294901760
        %3277 = vmatmul.mubr.f32.gmra.mrb[0].mxu0 %v3276
        %v3278 = vpop.f32.mrb[0].mxu0
        %v3279 = vadd.f32 %v3152, %v3278
        %v3280 = vpop.f32.mrb[0].mxu0
        %3281 = vmatprep.mubr.f32.mxu0 0.0
        %v3282 = vand.u32 %v2696, 4294901760
        %3283 = vmatmul.mubr.f32.gmra.mrb[0].mxu0 %v3282
        %v3284 = vpop.f32.mrb[0].mxu0
        %v3285 = vadd.f32 %v3160, %v3284
        %v3286 = vpop.f32.mrb[0].mxu0
        %3287 = vdwg.mxu0
        %3288 = vmatprep.subr.mxu0 0.0
        %v3289 = vand.u32 %v455, 4294901760
        %3290 = vmatpush1.msra.mxu0 %v3289
        %3291 = vmatprep.subr.mxu0 0.0
        %v3292 = vand.u32 %v456, 4294901760
        %3293 = vmatpush1.msra.mxu0 %v3292
        %3294 = vmatprep.subr.mxu0 0.0
        %v3295 = vand.u32 %v457, 4294901760
        %3296 = vmatpush1.msra.mxu0 %v3295
        %3297 = vmatprep.subr.mxu0 0.0
        %v3298 = vand.u32 %v458, 4294901760
        %3299 = vmatpush1.msra.mxu0 %v3298
        %3300 = vmatprep.subr.mxu0 0.0
        %v3301 = vand.u32 %v459, 4294901760
        %3302 = vmatpush1.msra.mxu0 %v3301
        %3303 = vmatprep.subr.mxu0 0.0
        %v3304 = vand.u32 %v460, 4294901760
        %3305 = vmatpush1.msra.mxu0 %v3304
        %3306 = vmatprep.subr.mxu0 0.0
        %v3307 = vand.u32 %v461, 4294901760
        %3308 = vmatpush1.msra.mxu0 %v3307
        %3309 = vmatprep.subr.mxu0 0.0
        %v3310 = vand.u32 %v462, 4294901760
        %3311 = vmatpush1.msra.mxu0 %v3310
        %3312 = vmatprep.subr.mxu0 0.0
        %v3313 = vand.u32 %v463, 4294901760
        %3314 = vmatpush1.msra.mxu0 %v3313
        %3315 = vmatprep.subr.mxu0 0.0
        %v3316 = vand.u32 %v464, 4294901760
        %3317 = vmatpush1.msra.mxu0 %v3316
        %3318 = vmatprep.subr.mxu0 0.0
        %v3319 = vand.u32 %v465, 4294901760
        %3320 = vmatpush1.msra.mxu0 %v3319
        %3321 = vmatprep.subr.mxu0 0.0
        %v3322 = vand.u32 %v466, 4294901760
        %3323 = vmatpush1.msra.mxu0 %v3322
        %3324 = vmatprep.subr.mxu0 0.0
        %v3325 = vand.u32 %v467, 4294901760
        %3326 = vmatpush1.msra.mxu0 %v3325
        %3327 = vmatprep.subr.mxu0 0.0
        %v3328 = vand.u32 %v468, 4294901760
        %3329 = vmatpush1.msra.mxu0 %v3328
        %3330 = vmatprep.subr.mxu0 0.0
        %v3331 = vand.u32 %v469, 4294901760
        %3332 = vmatpush1.msra.mxu0 %v3331
        %3333 = vmatprep.subr.mxu0 0.0
        %v3334 = vand.u32 %v470, 4294901760
        %3335 = vmatpush1.msra.mxu0 %v3334
        %3336 = vmatprep.subr.mxu0 0.0
        %3337 = vmatpush1.msra.mxu0 0.0
        %3338 = vmatprep.subr.mxu0 0.0
        %3339 = vmatpush1.msra.mxu0 0.0
        %3340 = vmatprep.subr.mxu0 0.0
        %3341 = vmatpush1.msra.mxu0 0.0
        %3342 = vmatprep.subr.mxu0 0.0
        %3343 = vmatpush1.msra.mxu0 0.0
        %3344 = vmatprep.subr.mxu0 0.0
        %3345 = vmatpush1.msra.mxu0 0.0
        %3346 = vmatprep.subr.mxu0 0.0
        %3347 = vmatpush1.msra.mxu0 0.0
        %3348 = vmatprep.subr.mxu0 0.0
        %3349 = vmatpush1.msra.mxu0 0.0
        %3350 = vmatprep.subr.mxu0 0.0
        %3351 = vmatpush1.msra.mxu0 0.0
        %3352 = vmatprep.subr.mxu0 0.0
        %3353 = vmatpush1.msra.mxu0 0.0
        %3354 = vmatprep.subr.mxu0 0.0
        %3355 = vmatpush1.msra.mxu0 0.0
        %3356 = vmatprep.subr.mxu0 0.0
        %3357 = vmatpush1.msra.mxu0 0.0
        %3358 = vmatprep.subr.mxu0 0.0
        %3359 = vmatpush1.msra.mxu0 0.0
        %3360 = vmatprep.subr.mxu0 0.0
        %3361 = vmatpush1.msra.mxu0 0.0
        %3362 = vmatprep.subr.mxu0 0.0
        %3363 = vmatpush1.msra.mxu0 0.0
        %3364 = vmatprep.subr.mxu0 0.0
        %3365 = vmatpush1.msra.mxu0 0.0
        %3366 = vmatprep.subr.mxu0 0.0
        %3367 = vmatpush1.msra.mxu0 0.0
        %3368 = vmatprep.mubr.f32.mxu0 0.0
        %v3369 = vand.u32 %v2695, 4294901760
        %3370 = vmatmul.mubr.f32.gmra.mrb[0].mxu0 %v3369
        %v3371 = vpop.f32.mrb[0].mxu0
        %v3372 = vadd.f32 %v3279, %v3371
        %v3373 = vpop.f32.mrb[0].mxu0
        %3374 = vmatprep.mubr.f32.mxu0 0.0
        %v3375 = vand.u32 %v2696, 4294901760
        %3376 = vmatmul.mubr.f32.gmra.mrb[0].mxu0 %v3375
        %v3377 = vpop.f32.mrb[0].mxu0
        %v3378 = vadd.f32 %v3285, %v3377
        %v3379 = vpop.f32.mrb[0].mxu0
        %3380 = vdwg.mxu0
        %v3381 = vld [vmem:[#allocation2] sm:$0xff]
        %v3382 = vld [vmem:[#allocation2 + $0x8] sm:$0xff]
        %vm3383 = vcmask 31744
        %v3384 = vsel %vm3383, %v3381, %v472
        %v3385 = vsel %vm3383, %v3382, %v474
        %vm3386 = vcmask 39936
        %v3387 = vsel %vm3386, %v3384, %v1200
        %v3388 = vsel %vm3386, %v3385, %v1202
        %vm3389 = vcmask 48128
        %v3390 = vsel %vm3389, %v3387, %v1928
        %v3391 = vsel %vm3389, %v3388, %v1930
        %vm3392 = vcmask 56320
        %v3393 = vsel %vm3392, %v3390, %v2656
        %v3394 = vsel %vm3392, %v3391, %v2658
        %3397 = vrot.lane.b32.xlu0 %v3381, 124
        %v3398 = vpop.permute.xlu0 %3397
        %3399 = vrot.lane.b32.xlu0 %v3382, 124
        %v3400 = vpop.permute.xlu0 %3399
        %3405 = vrot.lane.b32.xlu0 %v1188, 4
        %v3406 = vpop.permute.xlu0 %3405
        %3407 = vrot.lane.b32.xlu0 %v1194, 4
        %v3408 = vpop.permute.xlu0 %3407
        %3413 = vrot.lane.b32.xlu0 %v1916, 5
        %v3414 = vpop.permute.xlu0 %3413
        %3415 = vrot.lane.b32.xlu0 %v1922, 5
        %v3416 = vpop.permute.xlu0 %3415
        %3421 = vrot.lane.b32.xlu0 %v2644, 6
        %v3422 = vpop.permute.xlu0 %3421
        %3423 = vrot.lane.b32.xlu0 %v2650, 6
        %v3424 = vpop.permute.xlu0 %3423
        %3429 = vrot.lane.b32.xlu0 %v3372, 7
        %v3430 = vpop.permute.xlu0 %3429
        %3431 = vrot.lane.b32.xlu0 %v3378, 7
        %v3432 = vpop.permute.xlu0 %3431
        %v3435 = vsel %vm3383, %v3398, %v3406
        %v3436 = vsel %vm3383, %v3400, %v3408
        %v3437 = vsel %vm3386, %v3435, %v3414
        %v3438 = vsel %vm3386, %v3436, %v3416
        %v3439 = vsel %vm3389, %v3437, %v3422
        %v3440 = vsel %vm3389, %v3438, %v3424
        %v3441 = vsel %vm3392, %v3439, %v3430
        %v3442 = vsel %vm3392, %v3440, %v3432
        %3443 = vrot.lane.b32.xlu0 %v3381, 120
        %v3444 = vpop.permute.xlu0 %3443
        %3445 = vrot.lane.b32.xlu0 %v3382, 120
        %v3446 = vpop.permute.xlu0 %3445
        %3449 = vrot.lane.b32.xlu0 %v1188, 3
        %v3450 = vpop.permute.xlu0 %3449
        %3451 = vrot.lane.b32.xlu0 %v1194, 3
        %v3452 = vpop.permute.xlu0 %3451
        %3455 = vrot.lane.b32.xlu0 %v1916, 4
        %v3456 = vpop.permute.xlu0 %3455
        %3457 = vrot.lane.b32.xlu0 %v1922, 4
        %v3458 = vpop.permute.xlu0 %3457
        %3461 = vrot.lane.b32.xlu0 %v2644, 5
        %v3462 = vpop.permute.xlu0 %3461
        %3463 = vrot.lane.b32.xlu0 %v2650, 5
        %v3464 = vpop.permute.xlu0 %3463
        %3467 = vrot.lane.b32.xlu0 %v3372, 6
        %v3468 = vpop.permute.xlu0 %3467
        %3469 = vrot.lane.b32.xlu0 %v3378, 6
        %v3470 = vpop.permute.xlu0 %3469
        %v3473 = vsel %vm3383, %v3444, %v3450
        %v3474 = vsel %vm3383, %v3446, %v3452
        %v3475 = vsel %vm3386, %v3473, %v3456
        %v3476 = vsel %vm3386, %v3474, %v3458
        %v3477 = vsel %vm3389, %v3475, %v3462
        %v3478 = vsel %vm3389, %v3476, %v3464
        %v3479 = vsel %vm3392, %v3477, %v3468
        %v3480 = vsel %vm3392, %v3478, %v3470
        %3481 = vrot.lane.b32.xlu0 %v3381, 116
        %v3482 = vpop.permute.xlu0 %3481
        %3483 = vrot.lane.b32.xlu0 %v3382, 116
        %v3484 = vpop.permute.xlu0 %3483
        %3487 = vrot.lane.b32.xlu0 %v1188, 2
        %v3488 = vpop.permute.xlu0 %3487
        %3489 = vrot.lane.b32.xlu0 %v1194, 2
        %v3490 = vpop.permute.xlu0 %3489
        %3493 = vrot.lane.b32.xlu0 %v1916, 3
        %v3494 = vpop.permute.xlu0 %3493
        %3495 = vrot.lane.b32.xlu0 %v1922, 3
        %v3496 = vpop.permute.xlu0 %3495
        %3499 = vrot.lane.b32.xlu0 %v2644, 4
        %v3500 = vpop.permute.xlu0 %3499
        %3501 = vrot.lane.b32.xlu0 %v2650, 4
        %v3502 = vpop.permute.xlu0 %3501
        %3505 = vrot.lane.b32.xlu0 %v3372, 5
        %v3506 = vpop.permute.xlu0 %3505
        %3507 = vrot.lane.b32.xlu0 %v3378, 5
        %v3508 = vpop.permute.xlu0 %3507
        %v3511 = vsel %vm3383, %v3482, %v3488
        %v3512 = vsel %vm3383, %v3484, %v3490
        %v3513 = vsel %vm3386, %v3511, %v3494
        %v3514 = vsel %vm3386, %v3512, %v3496
        %v3515 = vsel %vm3389, %v3513, %v3500
        %v3516 = vsel %vm3389, %v3514, %v3502
        %v3517 = vsel %vm3392, %v3515, %v3506
        %v3518 = vsel %vm3392, %v3516, %v3508
        %vm3519 = vcmask 64512
        %v3520 = vsel %vm3519, %v3393, inf
        %3521 = vmin.xlane.f32.xlu0 %v3520
        %v3522 = vpop.xlane.xlu0 %3521
        %v3523 = vsel %vm3519, %v3394, inf
        %3524 = vmin.xlane.f32.xlu0 %v3523
        %v3525 = vpop.xlane.xlu0 %3524
        %vm3526 = vcmp.eq.f32.partialorder %v3393, %v3522
        %vm3527 = vcmp.eq.f32.partialorder %v3394, %v3525
        %v3528 = vsel %vm3526, %v454, 8
        %v3529 = vsel %vm3527, %v454, 8
        %v3530 = vsel %vm3519, %v3528, 2147483647
        %v3531 = vand.u32 %v3530, 65535
        %v3532 = vshra.s32 %v3530, 16
        %v3533 = vcvt.s32.f32 %v3531
        %v3534 = vcvt.s32.f32 %v3532
        %3535 = vmin.xlane.f32.xlu0 %v3534
        %v3536 = vpop.xlane.xlu0 %3535
        %vm3537 = vcmp.eq.f32.partialorder %v3534, %v3536
        %v3538 = vsel %vm3537, %v3533, inf
        %3539 = vmin.xlane.f32.xlu0 %v3538
        %v3540 = vpop.xlane.xlu0 %3539
        %v3541 = vcvt.f32.s32 %v3540
        %v3542 = vcvt.f32.s32 %v3536
        %v3543 = vshll.u32 %v3542, 16
        %v3544 = vadd.s32 %v3543, %v3541
        %v3545 = vsel %vm3519, %v3529, 2147483647
        %v3546 = vand.u32 %v3545, 65535
        %v3547 = vshra.s32 %v3545, 16
        %v3548 = vcvt.s32.f32 %v3546
        %v3549 = vcvt.s32.f32 %v3547
        %3550 = vmin.xlane.f32.xlu0 %v3549
        %v3551 = vpop.xlane.xlu0 %3550
        %vm3552 = vcmp.eq.f32.partialorder %v3549, %v3551
        %v3553 = vsel %vm3552, %v3548, inf
        %3554 = vmin.xlane.f32.xlu0 %v3553
        %v3555 = vpop.xlane.xlu0 %3554
        %v3556 = vcvt.f32.s32 %v3555
        %v3557 = vcvt.f32.s32 %v3551
        %v3558 = vshll.u32 %v3557, 16
        %v3559 = vadd.s32 %v3558, %v3556
        %vm3560 = vcmp.eq.s32.totalorder %v454, %v3544
        %vm3561 = vcmp.eq.s32.totalorder %v454, %v3559
        %v3562 = vsel %vm3560, %v3441, 0.0
        %v3563 = vsel %vm3561, %v3442, 0.0
        %v3564 = vsel %vm3519, %v3562, 0.0
        %3565 = vadd.xlane.f32.xlu0 %v3564
        %v3566 = vpop.xlane.xlu0 %3565
        %v3567 = vsel %vm3519, %v3563, 0.0
        %3568 = vadd.xlane.f32.xlu0 %v3567
        %v3569 = vpop.xlane.xlu0 %3568
        %v3570 = vsel %vm3560, %v3479, 0.0
        %v3571 = vsel %vm3561, %v3480, 0.0
        %v3572 = vsel %vm3519, %v3570, 0.0
        %3573 = vadd.xlane.f32.xlu0 %v3572
        %v3574 = vpop.xlane.xlu0 %3573
        %v3575 = vsel %vm3519, %v3571, 0.0
        %3576 = vadd.xlane.f32.xlu0 %v3575
        %v3577 = vpop.xlane.xlu0 %3576
        %v3578 = vsel %vm3560, %v3517, 0.0
        %v3579 = vsel %vm3561, %v3518, 0.0
        %v3580 = vsel %vm3519, %v3578, 0.0
        %3581 = vadd.xlane.f32.xlu0 %v3580
        %v3582 = vpop.xlane.xlu0 %3581
        %v3583 = vsel %vm3519, %v3579, 0.0
        %3584 = vadd.xlane.f32.xlu0 %v3583
        %v3585 = vpop.xlane.xlu0 %3584
        %v3586 = vsel %vm3560, inf, %v3393
        %v3587 = vsel %vm3561, inf, %v3394
        %v3588 = vsel %vm3519, %v3586, inf
        %3589 = vmin.xlane.f32.xlu0 %v3588
        %v3590 = vpop.xlane.xlu0 %3589
        %v3591 = vsel %vm3519, %v3587, inf
        %3592 = vmin.xlane.f32.xlu0 %v3591
        %v3593 = vpop.xlane.xlu0 %3592
        %vm3594 = vcmp.eq.f32.partialorder %v3586, %v3590
        %vm3595 = vcmp.eq.f32.partialorder %v3587, %v3593
        %v3596 = vsel %vm3594, %v454, 8
        %v3597 = vsel %vm3595, %v454, 8
        %v3598 = vsel %vm3519, %v3596, 2147483647
        %v3599 = vand.u32 %v3598, 65535
        %v3600 = vshra.s32 %v3598, 16
        %v3601 = vcvt.s32.f32 %v3599
        %v3602 = vcvt.s32.f32 %v3600
        %3603 = vmin.xlane.f32.xlu0 %v3602
        %v3604 = vpop.xlane.xlu0 %3603
        %vm3605 = vcmp.eq.f32.partialorder %v3602, %v3604
        %v3606 = vsel %vm3605, %v3601, inf
        %3607 = vmin.xlane.f32.xlu0 %v3606
        %v3608 = vpop.xlane.xlu0 %3607
        %v3609 = vcvt.f32.s32 %v3608
        %v3610 = vcvt.f32.s32 %v3604
        %v3611 = vshll.u32 %v3610, 16
        %v3612 = vadd.s32 %v3611, %v3609
        %v3613 = vsel %vm3519, %v3597, 2147483647
        %v3614 = vand.u32 %v3613, 65535
        %v3615 = vshra.s32 %v3613, 16
        %v3616 = vcvt.s32.f32 %v3614
        %v3617 = vcvt.s32.f32 %v3615
        %3618 = vmin.xlane.f32.xlu0 %v3617
        %v3619 = vpop.xlane.xlu0 %3618
        %vm3620 = vcmp.eq.f32.partialorder %v3617, %v3619
        %v3621 = vsel %vm3620, %v3616, inf
        %3622 = vmin.xlane.f32.xlu0 %v3621
        %v3623 = vpop.xlane.xlu0 %3622
        %v3624 = vcvt.f32.s32 %v3623
        %v3625 = vcvt.f32.s32 %v3619
        %v3626 = vshll.u32 %v3625, 16
        %v3627 = vadd.s32 %v3626, %v3624
        %vm3628 = vcmp.eq.s32.totalorder %v454, %v3612
        %vm3629 = vcmp.eq.s32.totalorder %v454, %v3627
        %v3630 = vsel %vm3628, %v3441, 0.0
        %v3631 = vsel %vm3629, %v3442, 0.0
        %v3632 = vsel %vm3519, %v3630, 0.0
        %3633 = vadd.xlane.f32.xlu0 %v3632
        %v3634 = vpop.xlane.xlu0 %3633
        %v3635 = vsel %vm3519, %v3631, 0.0
        %3636 = vadd.xlane.f32.xlu0 %v3635
        %v3637 = vpop.xlane.xlu0 %3636
        %v3638 = vsel %vm3628, %v3479, 0.0
        %v3639 = vsel %vm3629, %v3480, 0.0
        %v3640 = vsel %vm3519, %v3638, 0.0
        %3641 = vadd.xlane.f32.xlu0 %v3640
        %v3642 = vpop.xlane.xlu0 %3641
        %v3643 = vsel %vm3519, %v3639, 0.0
        %3644 = vadd.xlane.f32.xlu0 %v3643
        %v3645 = vpop.xlane.xlu0 %3644
        %v3646 = vsel %vm3628, %v3517, 0.0
        %v3647 = vsel %vm3629, %v3518, 0.0
        %v3648 = vsel %vm3519, %v3646, 0.0
        %3649 = vadd.xlane.f32.xlu0 %v3648
        %v3650 = vpop.xlane.xlu0 %3649
        %v3651 = vsel %vm3519, %v3647, 0.0
        %3652 = vadd.xlane.f32.xlu0 %v3651
        %v3653 = vpop.xlane.xlu0 %3652
        %v3654 = vsel %vm3628, inf, %v3586
        %v3655 = vsel %vm3629, inf, %v3587
        %v3656 = vsel %vm3519, %v3654, inf
        %3657 = vmin.xlane.f32.xlu0 %v3656
        %v3658 = vpop.xlane.xlu0 %3657
        %v3659 = vsel %vm3519, %v3655, inf
        %3660 = vmin.xlane.f32.xlu0 %v3659
        %v3661 = vpop.xlane.xlu0 %3660
        %vm3662 = vcmp.eq.f32.partialorder %v3654, %v3658
        %vm3663 = vcmp.eq.f32.partialorder %v3655, %v3661
        %v3664 = vsel %vm3662, %v454, 8
        %v3665 = vsel %vm3663, %v454, 8
        %v3666 = vsel %vm3519, %v3664, 2147483647
        %v3667 = vand.u32 %v3666, 65535
        %v3668 = vshra.s32 %v3666, 16
        %v3669 = vcvt.s32.f32 %v3667
        %v3670 = vcvt.s32.f32 %v3668
        %3671 = vmin.xlane.f32.xlu0 %v3670
        %v3672 = vpop.xlane.xlu0 %3671
        %vm3673 = vcmp.eq.f32.partialorder %v3670, %v3672
        %v3674 = vsel %vm3673, %v3669, inf
        %3675 = vmin.xlane.f32.xlu0 %v3674
        %v3676 = vpop.xlane.xlu0 %3675
        %v3677 = vcvt.f32.s32 %v3676
        %v3678 = vcvt.f32.s32 %v3672
        %v3679 = vshll.u32 %v3678, 16
        %v3680 = vadd.s32 %v3679, %v3677
        %v3681 = vsel %vm3519, %v3665, 2147483647
        %v3682 = vand.u32 %v3681, 65535
        %v3683 = vshra.s32 %v3681, 16
        %v3684 = vcvt.s32.f32 %v3682
        %v3685 = vcvt.s32.f32 %v3683
        %3686 = vmin.xlane.f32.xlu0 %v3685
        %v3687 = vpop.xlane.xlu0 %3686
        %vm3688 = vcmp.eq.f32.partialorder %v3685, %v3687
        %v3689 = vsel %vm3688, %v3684, inf
        %3690 = vmin.xlane.f32.xlu0 %v3689
        %v3691 = vpop.xlane.xlu0 %3690
        %v3692 = vcvt.f32.s32 %v3691
        %v3693 = vcvt.f32.s32 %v3687
        %v3694 = vshll.u32 %v3693, 16
        %v3695 = vadd.s32 %v3694, %v3692
        %vm3696 = vcmp.eq.s32.totalorder %v454, %v3680
        %vm3697 = vcmp.eq.s32.totalorder %v454, %v3695
        %v3698 = vsel %vm3696, %v3441, 0.0
        %v3699 = vsel %vm3697, %v3442, 0.0
        %v3700 = vsel %vm3519, %v3698, 0.0
        %3701 = vadd.xlane.f32.xlu0 %v3700
        %v3702 = vpop.xlane.xlu0 %3701
        %v3703 = vsel %vm3519, %v3699, 0.0
        %3704 = vadd.xlane.f32.xlu0 %v3703
        %v3705 = vpop.xlane.xlu0 %3704
        %v3706 = vsel %vm3696, %v3479, 0.0
        %v3707 = vsel %vm3697, %v3480, 0.0
        %v3708 = vsel %vm3519, %v3706, 0.0
        %3709 = vadd.xlane.f32.xlu0 %v3708
        %v3710 = vpop.xlane.xlu0 %3709
        %v3711 = vsel %vm3519, %v3707, 0.0
        %3712 = vadd.xlane.f32.xlu0 %v3711
        %v3713 = vpop.xlane.xlu0 %3712
        %v3714 = vsel %vm3696, %v3517, 0.0
        %v3715 = vsel %vm3697, %v3518, 0.0
        %v3716 = vsel %vm3519, %v3714, 0.0
        %3717 = vadd.xlane.f32.xlu0 %v3716
        %v3718 = vpop.xlane.xlu0 %3717
        %v3719 = vsel %vm3519, %v3715, 0.0
        %3720 = vadd.xlane.f32.xlu0 %v3719
        %v3721 = vpop.xlane.xlu0 %3720
        %v3722 = vsel %vm3696, inf, %v3654
        %v3723 = vsel %vm3697, inf, %v3655
        %v3724 = vsel %vm3519, %v3722, inf
        %3725 = vmin.xlane.f32.xlu0 %v3724
        %v3726 = vpop.xlane.xlu0 %3725
        %v3727 = vsel %vm3519, %v3723, inf
        %3728 = vmin.xlane.f32.xlu0 %v3727
        %v3729 = vpop.xlane.xlu0 %3728
        %vm3730 = vcmp.eq.f32.partialorder %v3722, %v3726
        %vm3731 = vcmp.eq.f32.partialorder %v3723, %v3729
        %v3732 = vsel %vm3730, %v454, 8
        %v3733 = vsel %vm3731, %v454, 8
        %v3734 = vsel %vm3519, %v3732, 2147483647
        %v3735 = vand.u32 %v3734, 65535
        %v3736 = vshra.s32 %v3734, 16
        %v3737 = vcvt.s32.f32 %v3735
        %v3738 = vcvt.s32.f32 %v3736
        %3739 = vmin.xlane.f32.xlu0 %v3738
        %v3740 = vpop.xlane.xlu0 %3739
        %vm3741 = vcmp.eq.f32.partialorder %v3738, %v3740
        %v3742 = vsel %vm3741, %v3737, inf
        %3743 = vmin.xlane.f32.xlu0 %v3742
        %v3744 = vpop.xlane.xlu0 %3743
        %v3745 = vcvt.f32.s32 %v3744
        %v3746 = vcvt.f32.s32 %v3740
        %v3747 = vshll.u32 %v3746, 16
        %v3748 = vadd.s32 %v3747, %v3745
        %v3749 = vsel %vm3519, %v3733, 2147483647
        %v3750 = vand.u32 %v3749, 65535
        %v3751 = vshra.s32 %v3749, 16
        %v3752 = vcvt.s32.f32 %v3750
        %v3753 = vcvt.s32.f32 %v3751
        %3754 = vmin.xlane.f32.xlu0 %v3753
        %v3755 = vpop.xlane.xlu0 %3754
        %vm3756 = vcmp.eq.f32.partialorder %v3753, %v3755
        %v3757 = vsel %vm3756, %v3752, inf
        %3758 = vmin.xlane.f32.xlu0 %v3757
        %v3759 = vpop.xlane.xlu0 %3758
        %v3760 = vcvt.f32.s32 %v3759
        %v3761 = vcvt.f32.s32 %v3755
        %v3762 = vshll.u32 %v3761, 16
        %v3763 = vadd.s32 %v3762, %v3760
        %vm3764 = vcmp.eq.s32.totalorder %v454, %v3748
        %vm3765 = vcmp.eq.s32.totalorder %v454, %v3763
        %v3766 = vsel %vm3764, %v3441, 0.0
        %v3767 = vsel %vm3765, %v3442, 0.0
        %v3768 = vsel %vm3519, %v3766, 0.0
        %3769 = vadd.xlane.f32.xlu0 %v3768
        %v3770 = vpop.xlane.xlu0 %3769
        %v3771 = vsel %vm3519, %v3767, 0.0
        %3772 = vadd.xlane.f32.xlu0 %v3771
        %v3773 = vpop.xlane.xlu0 %3772
        %v3774 = vsel %vm3764, %v3479, 0.0
        %v3775 = vsel %vm3765, %v3480, 0.0
        %v3776 = vsel %vm3519, %v3774, 0.0
        %3777 = vadd.xlane.f32.xlu0 %v3776
        %v3778 = vpop.xlane.xlu0 %3777
        %v3779 = vsel %vm3519, %v3775, 0.0
        %3780 = vadd.xlane.f32.xlu0 %v3779
        %v3781 = vpop.xlane.xlu0 %3780
        %v3782 = vsel %vm3764, %v3517, 0.0
        %v3783 = vsel %vm3765, %v3518, 0.0
        %v3784 = vsel %vm3519, %v3782, 0.0
        %3785 = vadd.xlane.f32.xlu0 %v3784
        %v3786 = vpop.xlane.xlu0 %3785
        %v3787 = vsel %vm3519, %v3783, 0.0
        %3788 = vadd.xlane.f32.xlu0 %v3787
        %v3789 = vpop.xlane.xlu0 %3788
        %vm3790 = vcmask 7168
        %v3791 = vsel %vm3790, %v3522, %v3590
        %v3792 = vsel %vm3790, %v3525, %v3593
        %vm3793 = vcmask 15360
        %v3794 = vsel %vm3793, %v3791, %v3658
        %v3795 = vsel %vm3793, %v3792, %v3661
        %vm3796 = vcmask 23552
        %v3797 = vsel %vm3796, %v3794, %v3726
        %v3798 = vsel %vm3796, %v3795, %v3729
        %v3799 = vsel %vm3383, %v3797, %v3566
        %v3800 = vsel %vm3383, %v3798, %v3569
        %v3801 = vsel %vm3386, %v3799, %v3634
        %v3802 = vsel %vm3386, %v3800, %v3637
        %v3803 = vsel %vm3389, %v3801, %v3702
        %v3804 = vsel %vm3389, %v3802, %v3705
        %v3805 = vsel %vm3392, %v3803, %v3770
        %v3806 = vsel %vm3392, %v3804, %v3773
        %v3807 = vsel %vm3519, %v3805, %v3574
        %v3808 = vsel %vm3519, %v3806, %v3577
        %vm3809 = vcmask 72704
        %v3810 = vsel %vm3809, %v3807, %v3642
        %v3811 = vsel %vm3809, %v3808, %v3645
        %vm3812 = vcmask 80896
        %v3813 = vsel %vm3812, %v3810, %v3710
        %v3814 = vsel %vm3812, %v3811, %v3713
        %vm3815 = vcmask 89088
        %v3816 = vsel %vm3815, %v3813, %v3778
        %v3817 = vsel %vm3815, %v3814, %v3781
        %vm3818 = vcmask 97280
        %v3819 = vsel %vm3818, %v3816, %v3582
        %v3820 = vsel %vm3818, %v3817, %v3585
        %vm3821 = vcmask 105472
        %v3822 = vsel %vm3821, %v3819, %v3650
        %v3823 = vsel %vm3821, %v3820, %v3653
        %vm3824 = vcmask 113664
        %v3825 = vsel %vm3824, %v3822, %v3718
        %v3826 = vsel %vm3824, %v3823, %v3721
        %vm3827 = vcmask 121856
        %v3828 = vsel %vm3827, %v3825, %v3786
        %v3829 = vsel %vm3827, %v3826, %v3789
        %vm3830 = vcmask 130048
        %3831 = vst.msk [vmem:[#allocation2] sm:$0xff] %vm3830, %v3828
        %3832 = vst.msk [vmem:[#allocation2 + $0x8] sm:$0xff] %vm3830, %v3829
        %p3833 = scmp.eq.s32.totalorder %s28, 2
        // Predicated region
        $region61: #{tpu_custom_call.1} parent=55 // pred_check
          %p3834 = pneg %p3833
        $region62: #{tpu_custom_call.1} parent=55 // pred_check_branch
          %3836 = sbr.rel (%p3834) target = $region64
        $region63: #{tpu_custom_call.1} parent=55 // pred_region
          %v3837 = vld [vmem:[#allocation2] sm:$0xff]
          %v3838 = vld [vmem:[#allocation2 + $0x8] sm:$0xff]
          %v3839 = vsub.f32 %v3837, %v402
          %v3840 = vsub.f32 %v3838, %v407
          %v3841 = vsub.f32 %v3837, %v417
          %v3842 = vsub.f32 %v3838, %v421
          %v3843 = vsub.f32 %v3837, %v431
          %v3844 = vsub.f32 %v3838, %v435
          %3847 = vrot.lane.b32.xlu0 %v3841, 124
          %v3848 = vpop.permute.xlu0 %3847
          %3849 = vrot.lane.b32.xlu0 %v3842, 124
          %v3850 = vpop.permute.xlu0 %3849
          %v3853 = vmax.f32 %v3839, %v3848
          %v3854 = vmax.f32 %v3840, %v3850
          %3857 = vrot.lane.b32.xlu0 %v3843, 120
          %v3858 = vpop.permute.xlu0 %3857
          %3859 = vrot.lane.b32.xlu0 %v3844, 120
          %v3860 = vpop.permute.xlu0 %3859
          %v3863 = vmax.f32 %v3853, %v3858
          %v3864 = vmax.f32 %v3854, %v3860
          %v3865 = vmin.f32 %v3839, %v3848
          %v3866 = vmin.f32 %v3840, %v3850
          %v3867 = vmin.f32 %v3865, %v3858
          %v3868 = vmin.f32 %v3866, %v3860
          %vm3869 = vcmp.gt.f32.partialorder %v3863, 0.3
          %vm3870 = vcmp.gt.f32.partialorder %v3864, 0.3
          %vm3871 = vcmp.lt.f32.partialorder %v3867, -0.3
          %vm3872 = vcmp.lt.f32.partialorder %v3868, -0.3
          %vm3873 = vmor %vm3869, %vm3871
          %vm3874 = vmor %vm3870, %vm3872
          %3876 = vset.pattern.permute.xlu0 4
          %3877 = vperm.xlu0 %3876, %v3839
          %v3878 = vpop.permute.xlu0 %3877
          %3881 = vset.pattern.permute.xlu0 4
          %3882 = vperm.xlu0 %3881, %v3840
          %v3883 = vpop.permute.xlu0 %3882
          %v3885 = vsel %vm3873, %v3878, %v3839
          %v3886 = vsel %vm3874, %v3883, %v3840
          %3887 = vset.pattern.permute.xlu0 8
          %3888 = vperm.xlu0 %3887, %v3841
          %v3889 = vpop.permute.xlu0 %3888
          %3891 = vset.pattern.permute.xlu0 8
          %3892 = vperm.xlu0 %3891, %v3842
          %v3893 = vpop.permute.xlu0 %3892
          %v3895 = vsel %vm3873, %v3889, %v3848
          %v3896 = vsel %vm3874, %v3893, %v3850
          %3897 = vset.pattern.permute.xlu0 12
          %3898 = vperm.xlu0 %3897, %v3843
          %v3899 = vpop.permute.xlu0 %3898
          %3901 = vset.pattern.permute.xlu0 12
          %3902 = vperm.xlu0 %3901, %v3844
          %v3903 = vpop.permute.xlu0 %3902
          %v3905 = vsel %vm3873, %v3899, %v3858
          %v3906 = vsel %vm3874, %v3903, %v3860
          %3909 = vrot.lane.b32.xlu0 %v3885, 127
          %v3910 = vpop.permute.xlu0 %3909
          %3911 = vrot.lane.b32.xlu0 %v3886, 127
          %v3912 = vpop.permute.xlu0 %3911
          %3913 = vrot.lane.b32.xlu0 %v3885, 126
          %v3914 = vpop.permute.xlu0 %3913
          %3915 = vrot.lane.b32.xlu0 %v3886, 126
          %v3916 = vpop.permute.xlu0 %3915
          %3917 = vrot.lane.b32.xlu0 %v3885, 125
          %v3918 = vpop.permute.xlu0 %3917
          %3919 = vrot.lane.b32.xlu0 %v3886, 125
          %v3920 = vpop.permute.xlu0 %3919
          %3923 = vrot.lane.b32.xlu0 %v3895, 127
          %v3924 = vpop.permute.xlu0 %3923
          %3925 = vrot.lane.b32.xlu0 %v3896, 127
          %v3926 = vpop.permute.xlu0 %3925
          %3927 = vrot.lane.b32.xlu0 %v3895, 126
          %v3928 = vpop.permute.xlu0 %3927
          %3929 = vrot.lane.b32.xlu0 %v3896, 126
          %v3930 = vpop.permute.xlu0 %3929
          %3931 = vrot.lane.b32.xlu0 %v3895, 125
          %v3932 = vpop.permute.xlu0 %3931
          %3933 = vrot.lane.b32.xlu0 %v3896, 125
          %v3934 = vpop.permute.xlu0 %3933
          %3937 = vrot.lane.b32.xlu0 %v3905, 127
          %v3938 = vpop.permute.xlu0 %3937
          %3939 = vrot.lane.b32.xlu0 %v3906, 127
          %v3940 = vpop.permute.xlu0 %3939
          %3941 = vrot.lane.b32.xlu0 %v3905, 126
          %v3942 = vpop.permute.xlu0 %3941
          %3943 = vrot.lane.b32.xlu0 %v3906, 126
          %v3944 = vpop.permute.xlu0 %3943
          %3945 = vrot.lane.b32.xlu0 %v3905, 125
          %v3946 = vpop.permute.xlu0 %3945
          %3947 = vrot.lane.b32.xlu0 %v3906, 125
          %v3948 = vpop.permute.xlu0 %3947
          %v3949 = vld [vmem:[%s3] sm:$0x7]
          %3950 = vset.pattern.permute.xlu0 4
          %3951 = vperm.xlu0 %3950, %v3885
          %v3952 = vpop.permute.xlu0 %3951
          %3954 = vset.pattern.permute.xlu0 4
          %3955 = vperm.xlu0 %3954, %v3886
          %v3956 = vpop.permute.xlu0 %3955
          %3958 = vset.pattern.permute.xlu0 4
          %3959 = vperm.xlu0 %3958, %v3910
          %v3960 = vpop.permute.xlu0 %3959
          %3962 = vset.pattern.permute.xlu0 4
          %3963 = vperm.xlu0 %3962, %v3912
          %v3964 = vpop.permute.xlu0 %3963
          %3966 = vset.pattern.permute.xlu0 4
          %3967 = vperm.xlu0 %3966, %v3914
          %v3968 = vpop.permute.xlu0 %3967
          %3970 = vset.pattern.permute.xlu0 4
          %3971 = vperm.xlu0 %3970, %v3916
          %v3972 = vpop.permute.xlu0 %3971
          %3974 = vset.pattern.permute.xlu0 4
          %3975 = vperm.xlu0 %3974, %v3918
          %v3976 = vpop.permute.xlu0 %3975
          %3978 = vset.pattern.permute.xlu0 4
          %3979 = vperm.xlu0 %3978, %v3920
          %v3980 = vpop.permute.xlu0 %3979
          %v3982 = vlaneseq
          %v3983 = vshrl.u32 %v3982, 7
          %v3984 = vsub.s32 0, %v3983
          %v3985 = vrot.slane %v3949, %v3984
          %v3986 = vmul.f32 %v3952, %v3985
          %v3987 = vmul.f32 %v3956, %v3985
          %v3988 = vmul.f32 %v3960, %v3985
          %v3989 = vmul.f32 %v3964, %v3985
          %v3990 = vmul.f32 %v3968, %v3985
          %v3991 = vmul.f32 %v3972, %v3985
          %v3992 = vmul.f32 %v3976, %v3985
          %v3993 = vmul.f32 %v3980, %v3985
          %3994 = vset.pattern.permute.xlu0 4
          %3995 = vperm.xlu0 %3994, %v3895
          %v3996 = vpop.permute.xlu0 %3995
          %3998 = vset.pattern.permute.xlu0 4
          %3999 = vperm.xlu0 %3998, %v3896
          %v4000 = vpop.permute.xlu0 %3999
          %4002 = vset.pattern.permute.xlu0 4
          %4003 = vperm.xlu0 %4002, %v3924
          %v4004 = vpop.permute.xlu0 %4003
          %4006 = vset.pattern.permute.xlu0 4
          %4007 = vperm.xlu0 %4006, %v3926
          %v4008 = vpop.permute.xlu0 %4007
          %4010 = vset.pattern.permute.xlu0 4
          %4011 = vperm.xlu0 %4010, %v3928
          %v4012 = vpop.permute.xlu0 %4011
          %4014 = vset.pattern.permute.xlu0 4
          %4015 = vperm.xlu0 %4014, %v3930
          %v4016 = vpop.permute.xlu0 %4015
          %4018 = vset.pattern.permute.xlu0 4
          %4019 = vperm.xlu0 %4018, %v3932
          %v4020 = vpop.permute.xlu0 %4019
          %4022 = vset.pattern.permute.xlu0 4
          %4023 = vperm.xlu0 %4022, %v3934
          %v4024 = vpop.permute.xlu0 %4023
          %v4026 = vlaneseq
          %v4027 = vshrl.u32 %v4026, 7
          %v4028 = vsub.s32 1, %v4027
          %v4029 = vrot.slane %v3949, %v4028
          %v4030 = vmul.f32 %v3996, %v4029
          %v4031 = vmul.f32 %v4000, %v4029
          %v4032 = vmul.f32 %v4004, %v4029
          %v4033 = vmul.f32 %v4008, %v4029
          %v4034 = vmul.f32 %v4012, %v4029
          %v4035 = vmul.f32 %v4016, %v4029
          %v4036 = vmul.f32 %v4020, %v4029
          %v4037 = vmul.f32 %v4024, %v4029
          %v4038 = vadd.f32 %v3986, %v4030
          %v4039 = vadd.f32 %v3987, %v4031
          %v4040 = vadd.f32 %v3988, %v4032
          %v4041 = vadd.f32 %v3989, %v4033
          %v4042 = vadd.f32 %v3990, %v4034
          %v4043 = vadd.f32 %v3991, %v4035
          %v4044 = vadd.f32 %v3992, %v4036
          %v4045 = vadd.f32 %v3993, %v4037
          %4046 = vset.pattern.permute.xlu0 4
          %4047 = vperm.xlu0 %4046, %v3905
          %v4048 = vpop.permute.xlu0 %4047
          %4050 = vset.pattern.permute.xlu0 4
          %4051 = vperm.xlu0 %4050, %v3906
          %v4052 = vpop.permute.xlu0 %4051
          %4054 = vset.pattern.permute.xlu0 4
          %4055 = vperm.xlu0 %4054, %v3938
          %v4056 = vpop.permute.xlu0 %4055
          %4058 = vset.pattern.permute.xlu0 4
          %4059 = vperm.xlu0 %4058, %v3940
          %v4060 = vpop.permute.xlu0 %4059
          %4062 = vset.pattern.permute.xlu0 4
          %4063 = vperm.xlu0 %4062, %v3942
          %v4064 = vpop.permute.xlu0 %4063
          %4066 = vset.pattern.permute.xlu0 4
          %4067 = vperm.xlu0 %4066, %v3944
          %v4068 = vpop.permute.xlu0 %4067
          %4070 = vset.pattern.permute.xlu0 4
          %4071 = vperm.xlu0 %4070, %v3946
          %v4072 = vpop.permute.xlu0 %4071
          %4074 = vset.pattern.permute.xlu0 4
          %4075 = vperm.xlu0 %4074, %v3948
          %v4076 = vpop.permute.xlu0 %4075
          %v4078 = vlaneseq
          %v4079 = vshrl.u32 %v4078, 7
          %v4080 = vsub.s32 2, %v4079
          %v4081 = vrot.slane %v3949, %v4080
          %v4082 = vmul.f32 %v4048, %v4081
          %v4083 = vmul.f32 %v4052, %v4081
          %v4084 = vmul.f32 %v4056, %v4081
          %v4085 = vmul.f32 %v4060, %v4081
          %v4086 = vmul.f32 %v4064, %v4081
          %v4087 = vmul.f32 %v4068, %v4081
          %v4088 = vmul.f32 %v4072, %v4081
          %v4089 = vmul.f32 %v4076, %v4081
          %v4090 = vadd.f32 %v4038, %v4082
          %v4091 = vadd.f32 %v4039, %v4083
          %v4092 = vadd.f32 %v4040, %v4084
          %v4093 = vadd.f32 %v4041, %v4085
          %v4094 = vadd.f32 %v4042, %v4086
          %v4095 = vadd.f32 %v4043, %v4087
          %v4096 = vadd.f32 %v4044, %v4088
          %v4097 = vadd.f32 %v4045, %v4089
          %v4098 = vld [vmem:[%s4] sm:$0x1]
          %v4100 = vlaneseq
          %v4101 = vshrl.u32 %v4100, 7
          %v4102 = vsub.s32 0, %v4101
          %v4103 = vrot.slane %v4098, %v4102
          %v4105 = vadd.f32 %v4090, %v4103
          %v4106 = vadd.f32 %v4091, %v4103
          %v4107 = vadd.f32 %v4092, %v4103
          %v4108 = vadd.f32 %v4093, %v4103
          %v4109 = vadd.f32 %v4094, %v4103
          %v4110 = vadd.f32 %v4095, %v4103
          %v4111 = vadd.f32 %v4096, %v4103
          %v4112 = vadd.f32 %v4097, %v4103
          %v4113 = vmax.f32 %v4105, 0.0
          %v4114 = vmax.f32 %v4106, 0.0
          %v4115 = vmax.f32 %v4107, 0.0
          %v4116 = vmax.f32 %v4108, 0.0
          %v4117 = vmax.f32 %v4109, 0.0
          %v4118 = vmax.f32 %v4110, 0.0
          %v4119 = vmax.f32 %v4111, 0.0
          %v4120 = vmax.f32 %v4112, 0.0
          %v4121 = vld [vmem:[%s5] sm:$0xff]
          %v4122 = vld [vmem:[%s5 + $0x8] sm:$0xff]
          %v4123 = vld [vmem:[%s5 + $0x10] sm:$0xff]
          %v4124 = vld [vmem:[%s5 + $0x18] sm:$0xff]
          %v4125 = vld [vmem:[%s5 + $0x20] sm:$0xff]
          %v4126 = vld [vmem:[%s5 + $0x28] sm:$0xff]
          %v4127 = vld [vmem:[%s5 + $0x30] sm:$0xff]
          %v4128 = vld [vmem:[%s5 + $0x38] sm:$0xff]
          %v4129 = vld [vmem:[%s6] sm:$0x1]
          %v4131 = vlaneseq
          %v4132 = vshrl.u32 %v4131, 7
          %v4133 = vsub.s32 0, %v4132
          %v4134 = vrot.slane %v4129, %v4133
          %vm4136 = vcmask 523264
          %v4138 = vsel %vm4136, %v4113, 0
          %v4141 = vsel %vm4136, %v4114, 0
          %v4144 = vsel %vm4136, %v4115, 0
          %v4147 = vsel %vm4136, %v4116, 0
          %v4150 = vsel %vm4136, %v4117, 0
          %v4153 = vsel %vm4136, %v4118, 0
          %v4156 = vsel %vm4136, %v4119, 0
          %v4159 = vsel %vm4136, %v4120, 0
          %4161 = vmatprep.subr.mxu0 0.0
          %v4162 = vand.u32 %v4121, 4294901760
          %4163 = vmatpush1.msra.mxu0 %v4162
          %4164 = vmatprep.subr.mxu0 0.0
          %v4165 = vand.u32 %v4122, 4294901760
          %4166 = vmatpush1.msra.mxu0 %v4165
          %4167 = vmatprep.subr.mxu0 0.0
          %v4168 = vand.u32 %v4123, 4294901760
          %4169 = vmatpush1.msra.mxu0 %v4168
          %4170 = vmatprep.subr.mxu0 0.0
          %v4171 = vand.u32 %v4124, 4294901760
          %4172 = vmatpush1.msra.mxu0 %v4171
          %4173 = vmatprep.subr.mxu0 0.0
          %v4174 = vand.u32 %v4125, 4294901760
          %4175 = vmatpush1.msra.mxu0 %v4174
          %4176 = vmatprep.subr.mxu0 0.0
          %v4177 = vand.u32 %v4126, 4294901760
          %4178 = vmatpush1.msra.mxu0 %v4177
          %4179 = vmatprep.subr.mxu0 0.0
          %v4180 = vand.u32 %v4127, 4294901760
          %4181 = vmatpush1.msra.mxu0 %v4180
          %4182 = vmatprep.subr.mxu0 0.0
          %v4183 = vand.u32 %v4128, 4294901760
          %4184 = vmatpush1.msra.mxu0 %v4183
          %4185 = vmatprep.subr.mxu0 0.0
          %4186 = vmatpush1.msra.mxu0 0.0
          %4187 = vmatprep.subr.mxu0 0.0
          %4188 = vmatpush1.msra.mxu0 0.0
          %4189 = vmatprep.subr.mxu0 0.0
          %4190 = vmatpush1.msra.mxu0 0.0
          %4191 = vmatprep.subr.mxu0 0.0
          %4192 = vmatpush1.msra.mxu0 0.0
          %4193 = vmatprep.subr.mxu0 0.0
          %4194 = vmatpush1.msra.mxu0 0.0
          %4195 = vmatprep.subr.mxu0 0.0
          %4196 = vmatpush1.msra.mxu0 0.0
          %4197 = vmatprep.subr.mxu0 0.0
          %4198 = vmatpush1.msra.mxu0 0.0
          %4199 = vmatprep.subr.mxu0 0.0
          %4200 = vmatpush1.msra.mxu0 0.0
          %4201 = vmatprep.subr.mxu0 0.0
          %4202 = vmatpush1.msra.mxu0 0.0
          %4203 = vmatprep.subr.mxu0 0.0
          %4204 = vmatpush1.msra.mxu0 0.0
          %4205 = vmatprep.subr.mxu0 0.0
          %4206 = vmatpush1.msra.mxu0 0.0
          %4207 = vmatprep.subr.mxu0 0.0
          %4208 = vmatpush1.msra.mxu0 0.0
          %4209 = vmatprep.subr.mxu0 0.0
          %4210 = vmatpush1.msra.mxu0 0.0
          %4211 = vmatprep.subr.mxu0 0.0
          %4212 = vmatpush1.msra.mxu0 0.0
          %4213 = vmatprep.subr.mxu0 0.0
          %4214 = vmatpush1.msra.mxu0 0.0
          %4215 = vmatprep.subr.mxu0 0.0
          %4216 = vmatpush1.msra.mxu0 0.0
          %4217 = vmatprep.subr.mxu0 0.0
          %4218 = vmatpush1.msra.mxu0 0.0
          %4219 = vmatprep.subr.mxu0 0.0
          %4220 = vmatpush1.msra.mxu0 0.0
          %4221 = vmatprep.subr.mxu0 0.0
          %4222 = vmatpush1.msra.mxu0 0.0
          %4223 = vmatprep.subr.mxu0 0.0
          %4224 = vmatpush1.msra.mxu0 0.0
          %4225 = vmatprep.subr.mxu0 0.0
          %4226 = vmatpush1.msra.mxu0 0.0
          %4227 = vmatprep.subr.mxu0 0.0
          %4228 = vmatpush1.msra.mxu0 0.0
          %4229 = vmatprep.subr.mxu0 0.0
          %4230 = vmatpush1.msra.mxu0 0.0
          %4231 = vmatprep.subr.mxu0 0.0
          %4232 = vmatpush1.msra.mxu0 0.0
          %4233 = vmatprep.mubr.f32.mxu0 0.0
          %v4234 = vand.u32 %v4138, 4294901760
          %v4235 = vsub.f32 %v4138, %v4234
          %v4236 = vand.u32 %v4235, 4294901760
          %v4237 = vsub.f32 %v4235, %v4236
          %v4238 = vand.u32 %v4237, 4294901760
          %4239 = vmatmul.mubr.f32.gmra.mrb[0].mxu0 %v4238
          %v4240 = vpop.f32.mrb[0].mxu0
          %v4241 = vadd.f32 %v4134, %v4240
          %v4242 = vpop.f32.mrb[0].mxu0
          %4243 = vmatprep.mubr.f32.mxu0 0.0
          %v4244 = vand.u32 %v4141, 4294901760
          %v4245 = vsub.f32 %v4141, %v4244
          %v4246 = vand.u32 %v4245, 4294901760
          %v4247 = vsub.f32 %v4245, %v4246
          %v4248 = vand.u32 %v4247, 4294901760
          %4249 = vmatmul.mubr.f32.gmra.mrb[0].mxu0 %v4248
          %v4250 = vpop.f32.mrb[0].mxu0
          %v4251 = vadd.f32 %v4134, %v4250
          %v4252 = vpop.f32.mrb[0].mxu0
          %4253 = vmatprep.mubr.f32.mxu0 0.0
          %v4254 = vand.u32 %v4144, 4294901760
          %v4255 = vsub.f32 %v4144, %v4254
          %v4256 = vand.u32 %v4255, 4294901760
          %v4257 = vsub.f32 %v4255, %v4256
          %v4258 = vand.u32 %v4257, 4294901760
          %4259 = vmatmul.mubr.f32.gmra.mrb[0].mxu0 %v4258
          %v4260 = vpop.f32.mrb[0].mxu0
          %v4261 = vadd.f32 %v4134, %v4260
          %v4262 = vpop.f32.mrb[0].mxu0
          %4263 = vmatprep.mubr.f32.mxu0 0.0
          %v4264 = vand.u32 %v4147, 4294901760
          %v4265 = vsub.f32 %v4147, %v4264
          %v4266 = vand.u32 %v4265, 4294901760
          %v4267 = vsub.f32 %v4265, %v4266
          %v4268 = vand.u32 %v4267, 4294901760
          %4269 = vmatmul.mubr.f32.gmra.mrb[0].mxu0 %v4268
          %v4270 = vpop.f32.mrb[0].mxu0
          %v4271 = vadd.f32 %v4134, %v4270
          %v4272 = vpop.f32.mrb[0].mxu0
          %4273 = vmatprep.mubr.f32.mxu0 0.0
          %v4274 = vand.u32 %v4150, 4294901760
          %v4275 = vsub.f32 %v4150, %v4274
          %v4276 = vand.u32 %v4275, 4294901760
          %v4277 = vsub.f32 %v4275, %v4276
          %v4278 = vand.u32 %v4277, 4294901760
          %4279 = vmatmul.mubr.f32.gmra.mrb[0].mxu0 %v4278
          %v4280 = vpop.f32.mrb[0].mxu0
          %v4281 = vadd.f32 %v4134, %v4280
          %v4282 = vpop.f32.mrb[0].mxu0
          %4283 = vmatprep.mubr.f32.mxu0 0.0
          %v4284 = vand.u32 %v4153, 4294901760
          %v4285 = vsub.f32 %v4153, %v4284
          %v4286 = vand.u32 %v4285, 4294901760
          %v4287 = vsub.f32 %v4285, %v4286
          %v4288 = vand.u32 %v4287, 4294901760
          %4289 = vmatmul.mubr.f32.gmra.mrb[0].mxu0 %v4288
          %v4290 = vpop.f32.mrb[0].mxu0
          %v4291 = vadd.f32 %v4134, %v4290
          %v4292 = vpop.f32.mrb[0].mxu0
          %4293 = vmatprep.mubr.f32.mxu0 0.0
          %v4294 = vand.u32 %v4156, 4294901760
          %v4295 = vsub.f32 %v4156, %v4294
          %v4296 = vand.u32 %v4295, 4294901760
          %v4297 = vsub.f32 %v4295, %v4296
          %v4298 = vand.u32 %v4297, 4294901760
          %4299 = vmatmul.mubr.f32.gmra.mrb[0].mxu0 %v4298
          %v4300 = vpop.f32.mrb[0].mxu0
          %v4301 = vadd.f32 %v4134, %v4300
          %v4302 = vpop.f32.mrb[0].mxu0
          %4303 = vmatprep.mubr.f32.mxu0 0.0
          %v4304 = vand.u32 %v4159, 4294901760
          %v4305 = vsub.f32 %v4159, %v4304
          %v4306 = vand.u32 %v4305, 4294901760
          %v4307 = vsub.f32 %v4305, %v4306
          %v4308 = vand.u32 %v4307, 4294901760
          %4309 = vmatmul.mubr.f32.gmra.mrb[0].mxu0 %v4308
          %v4310 = vpop.f32.mrb[0].mxu0
          %v4311 = vadd.f32 %v4134, %v4310
          %v4312 = vpop.f32.mrb[0].mxu0
          %4313 = vdwg.mxu0
          %4314 = vmatprep.subr.mxu0 0.0
          %v4315 = vand.u32 %v4121, 4294901760
          %v4316 = vsub.f32 %v4121, %v4315
          %v4317 = vand.u32 %v4316, 4294901760
          %v4318 = vsub.f32 %v4316, %v4317
          %v4319 = vand.u32 %v4318, 4294901760
          %4320 = vmatpush1.msra.mxu0 %v4319
          %4321 = vmatprep.subr.mxu0 0.0
          %v4322 = vand.u32 %v4122, 4294901760
          %v4323 = vsub.f32 %v4122, %v4322
          %v4324 = vand.u32 %v4323, 4294901760
          %v4325 = vsub.f32 %v4323, %v4324
          %v4326 = vand.u32 %v4325, 4294901760
          %4327 = vmatpush1.msra.mxu0 %v4326
          %4328 = vmatprep.subr.mxu0 0.0
          %v4329 = vand.u32 %v4123, 4294901760
          %v4330 = vsub.f32 %v4123, %v4329
          %v4331 = vand.u32 %v4330, 4294901760
          %v4332 = vsub.f32 %v4330, %v4331
          %v4333 = vand.u32 %v4332, 4294901760
          %4334 = vmatpush1.msra.mxu0 %v4333
          %4335 = vmatprep.subr.mxu0 0.0
          %v4336 = vand.u32 %v4124, 4294901760
          %v4337 = vsub.f32 %v4124, %v4336
          %v4338 = vand.u32 %v4337, 4294901760
          %v4339 = vsub.f32 %v4337, %v4338
          %v4340 = vand.u32 %v4339, 4294901760
          %4341 = vmatpush1.msra.mxu0 %v4340
          %4342 = vmatprep.subr.mxu0 0.0
          %v4343 = vand.u32 %v4125, 4294901760
          %v4344 = vsub.f32 %v4125, %v4343
          %v4345 = vand.u32 %v4344, 4294901760
          %v4346 = vsub.f32 %v4344, %v4345
          %v4347 = vand.u32 %v4346, 4294901760
          %4348 = vmatpush1.msra.mxu0 %v4347
          %4349 = vmatprep.subr.mxu0 0.0
          %v4350 = vand.u32 %v4126, 4294901760
          %v4351 = vsub.f32 %v4126, %v4350
          %v4352 = vand.u32 %v4351, 4294901760
          %v4353 = vsub.f32 %v4351, %v4352
          %v4354 = vand.u32 %v4353, 4294901760
          %4355 = vmatpush1.msra.mxu0 %v4354
          %4356 = vmatprep.subr.mxu0 0.0
          %v4357 = vand.u32 %v4127, 4294901760
          %v4358 = vsub.f32 %v4127, %v4357
          %v4359 = vand.u32 %v4358, 4294901760
          %v4360 = vsub.f32 %v4358, %v4359
          %v4361 = vand.u32 %v4360, 4294901760
          %4362 = vmatpush1.msra.mxu0 %v4361
          %4363 = vmatprep.subr.mxu0 0.0
          %v4364 = vand.u32 %v4128, 4294901760
          %v4365 = vsub.f32 %v4128, %v4364
          %v4366 = vand.u32 %v4365, 4294901760
          %v4367 = vsub.f32 %v4365, %v4366
          %v4368 = vand.u32 %v4367, 4294901760
          %4369 = vmatpush1.msra.mxu0 %v4368
          %4370 = vmatprep.subr.mxu0 0.0
          %4371 = vmatpush1.msra.mxu0 0.0
          %4372 = vmatprep.subr.mxu0 0.0
          %4373 = vmatpush1.msra.mxu0 0.0
          %4374 = vmatprep.subr.mxu0 0.0
          %4375 = vmatpush1.msra.mxu0 0.0
          %4376 = vmatprep.subr.mxu0 0.0
          %4377 = vmatpush1.msra.mxu0 0.0
          %4378 = vmatprep.subr.mxu0 0.0
          %4379 = vmatpush1.msra.mxu0 0.0
          %4380 = vmatprep.subr.mxu0 0.0
          %4381 = vmatpush1.msra.mxu0 0.0
          %4382 = vmatprep.subr.mxu0 0.0
          %4383 = vmatpush1.msra.mxu0 0.0
          %4384 = vmatprep.subr.mxu0 0.0
          %4385 = vmatpush1.msra.mxu0 0.0
          %4386 = vmatprep.subr.mxu0 0.0
          %4387 = vmatpush1.msra.mxu0 0.0
          %4388 = vmatprep.subr.mxu0 0.0
          %4389 = vmatpush1.msra.mxu0 0.0
          %4390 = vmatprep.subr.mxu0 0.0
          %4391 = vmatpush1.msra.mxu0 0.0
          %4392 = vmatprep.subr.mxu0 0.0
          %4393 = vmatpush1.msra.mxu0 0.0
          %4394 = vmatprep.subr.mxu0 0.0
          %4395 = vmatpush1.msra.mxu0 0.0
          %4396 = vmatprep.subr.mxu0 0.0
          %4397 = vmatpush1.msra.mxu0 0.0
          %4398 = vmatprep.subr.mxu0 0.0
          %4399 = vmatpush1.msra.mxu0 0.0
          %4400 = vmatprep.subr.mxu0 0.0
          %4401 = vmatpush1.msra.mxu0 0.0
          %4402 = vmatprep.subr.mxu0 0.0
          %4403 = vmatpush1.msra.mxu0 0.0
          %4404 = vmatprep.subr.mxu0 0.0
          %4405 = vmatpush1.msra.mxu0 0.0
          %4406 = vmatprep.subr.mxu0 0.0
          %4407 = vmatpush1.msra.mxu0 0.0
          %4408 = vmatprep.subr.mxu0 0.0
          %4409 = vmatpush1.msra.mxu0 0.0
          %4410 = vmatprep.subr.mxu0 0.0
          %4411 = vmatpush1.msra.mxu0 0.0
          %4412 = vmatprep.subr.mxu0 0.0
          %4413 = vmatpush1.msra.mxu0 0.0
          %4414 = vmatprep.subr.mxu0 0.0
          %4415 = vmatpush1.msra.mxu0 0.0
          %4416 = vmatprep.subr.mxu0 0.0
          %4417 = vmatpush1.msra.mxu0 0.0
          %4418 = vmatprep.mubr.f32.mxu0 0.0
          %v4419 = vand.u32 %v4138, 4294901760
          %4420 = vmatmul.mubr.f32.gmra.mrb[0].mxu0 %v4419
          %v4421 = vpop.f32.mrb[0].mxu0
          %v4422 = vadd.f32 %v4241, %v4421
          %v4423 = vpop.f32.mrb[0].mxu0
          %4424 = vmatprep.mubr.f32.mxu0 0.0
          %v4425 = vand.u32 %v4141, 4294901760
          %4426 = vmatmul.mubr.f32.gmra.mrb[0].mxu0 %v4425
          %v4427 = vpop.f32.mrb[0].mxu0
          %v4428 = vadd.f32 %v4251, %v4427
          %v4429 = vpop.f32.mrb[0].mxu0
          %4430 = vmatprep.mubr.f32.mxu0 0.0
          %v4431 = vand.u32 %v4144, 4294901760
          %4432 = vmatmul.mubr.f32.gmra.mrb[0].mxu0 %v4431
          %v4433 = vpop.f32.mrb[0].mxu0
          %v4434 = vadd.f32 %v4261, %v4433
          %v4435 = vpop.f32.mrb[0].mxu0
          %4436 = vmatprep.mubr.f32.mxu0 0.0
          %v4437 = vand.u32 %v4147, 4294901760
          %4438 = vmatmul.mubr.f32.gmra.mrb[0].mxu0 %v4437
          %v4439 = vpop.f32.mrb[0].mxu0
          %v4440 = vadd.f32 %v4271, %v4439
          %v4441 = vpop.f32.mrb[0].mxu0
          %4442 = vmatprep.mubr.f32.mxu0 0.0
          %v4443 = vand.u32 %v4150, 4294901760
          %4444 = vmatmul.mubr.f32.gmra.mrb[0].mxu0 %v4443
          %v4445 = vpop.f32.mrb[0].mxu0
          %v4446 = vadd.f32 %v4281, %v4445
          %v4447 = vpop.f32.mrb[0].mxu0
          %4448 = vmatprep.mubr.f32.mxu0 0.0
          %v4449 = vand.u32 %v4153, 4294901760
          %4450 = vmatmul.mubr.f32.gmra.mrb[0].mxu0 %v4449
          %v4451 = vpop.f32.mrb[0].mxu0
          %v4452 = vadd.f32 %v4291, %v4451
          %v4453 = vpop.f32.mrb[0].mxu0
          %4454 = vmatprep.mubr.f32.mxu0 0.0
          %v4455 = vand.u32 %v4156, 4294901760
          %4456 = vmatmul.mubr.f32.gmra.mrb[0].mxu0 %v4455
          %v4457 = vpop.f32.mrb[0].mxu0
          %v4458 = vadd.f32 %v4301, %v4457
          %v4459 = vpop.f32.mrb[0].mxu0
          %4460 = vmatprep.mubr.f32.mxu0 0.0
          %v4461 = vand.u32 %v4159, 4294901760
          %4462 = vmatmul.mubr.f32.gmra.mrb[0].mxu0 %v4461
          %v4463 = vpop.f32.mrb[0].mxu0
          %v4464 = vadd.f32 %v4311, %v4463
          %v4465 = vpop.f32.mrb[0].mxu0
          %4466 = vdwg.mxu0
          %4467 = vmatprep.subr.mxu0 0.0
          %v4468 = vand.u32 %v4121, 4294901760
          %v4469 = vsub.f32 %v4121, %v4468
          %4470 = vmatpush1.msra.mxu0 %v4469
          %4471 = vmatprep.subr.mxu0 0.0
          %v4472 = vand.u32 %v4122, 4294901760
          %v4473 = vsub.f32 %v4122, %v4472
          %4474 = vmatpush1.msra.mxu0 %v4473
          %4475 = vmatprep.subr.mxu0 0.0
          %v4476 = vand.u32 %v4123, 4294901760
          %v4477 = vsub.f32 %v4123, %v4476
          %4478 = vmatpush1.msra.mxu0 %v4477
          %4479 = vmatprep.subr.mxu0 0.0
          %v4480 = vand.u32 %v4124, 4294901760
          %v4481 = vsub.f32 %v4124, %v4480
          %4482 = vmatpush1.msra.mxu0 %v4481
          %4483 = vmatprep.subr.mxu0 0.0
          %v4484 = vand.u32 %v4125, 4294901760
          %v4485 = vsub.f32 %v4125, %v4484
          %4486 = vmatpush1.msra.mxu0 %v4485
          %4487 = vmatprep.subr.mxu0 0.0
          %v4488 = vand.u32 %v4126, 4294901760
          %v4489 = vsub.f32 %v4126, %v4488
          %4490 = vmatpush1.msra.mxu0 %v4489
          %4491 = vmatprep.subr.mxu0 0.0
          %v4492 = vand.u32 %v4127, 4294901760
          %v4493 = vsub.f32 %v4127, %v4492
          %4494 = vmatpush1.msra.mxu0 %v4493
          %4495 = vmatprep.subr.mxu0 0.0
          %v4496 = vand.u32 %v4128, 4294901760
          %v4497 = vsub.f32 %v4128, %v4496
          %4498 = vmatpush1.msra.mxu0 %v4497
          %4499 = vmatprep.subr.mxu0 0.0
          %4500 = vmatpush1.msra.mxu0 0.0
          %4501 = vmatprep.subr.mxu0 0.0
          %4502 = vmatpush1.msra.mxu0 0.0
          %4503 = vmatprep.subr.mxu0 0.0
          %4504 = vmatpush1.msra.mxu0 0.0
          %4505 = vmatprep.subr.mxu0 0.0
          %4506 = vmatpush1.msra.mxu0 0.0
          %4507 = vmatprep.subr.mxu0 0.0
          %4508 = vmatpush1.msra.mxu0 0.0
          %4509 = vmatprep.subr.mxu0 0.0
          %4510 = vmatpush1.msra.mxu0 0.0
          %4511 = vmatprep.subr.mxu0 0.0
          %4512 = vmatpush1.msra.mxu0 0.0
          %4513 = vmatprep.subr.mxu0 0.0
          %4514 = vmatpush1.msra.mxu0 0.0
          %4515 = vmatprep.subr.mxu0 0.0
          %4516 = vmatpush1.msra.mxu0 0.0
          %4517 = vmatprep.subr.mxu0 0.0
          %4518 = vmatpush1.msra.mxu0 0.0
          %4519 = vmatprep.subr.mxu0 0.0
          %4520 = vmatpush1.msra.mxu0 0.0
          %4521 = vmatprep.subr.mxu0 0.0
          %4522 = vmatpush1.msra.mxu0 0.0
          %4523 = vmatprep.subr.mxu0 0.0
          %4524 = vmatpush1.msra.mxu0 0.0
          %4525 = vmatprep.subr.mxu0 0.0
          %4526 = vmatpush1.msra.mxu0 0.0
          %4527 = vmatprep.subr.mxu0 0.0
          %4528 = vmatpush1.msra.mxu0 0.0
          %4529 = vmatprep.subr.mxu0 0.0
          %4530 = vmatpush1.msra.mxu0 0.0
          %4531 = vmatprep.subr.mxu0 0.0
          %4532 = vmatpush1.msra.mxu0 0.0
          %4533 = vmatprep.subr.mxu0 0.0
          %4534 = vmatpush1.msra.mxu0 0.0
          %4535 = vmatprep.subr.mxu0 0.0
          %4536 = vmatpush1.msra.mxu0 0.0
          %4537 = vmatprep.subr.mxu0 0.0
          %4538 = vmatpush1.msra.mxu0 0.0
          %4539 = vmatprep.subr.mxu0 0.0
          %4540 = vmatpush1.msra.mxu0 0.0
          %4541 = vmatprep.subr.mxu0 0.0
          %4542 = vmatpush1.msra.mxu0 0.0
          %4543 = vmatprep.subr.mxu0 0.0
          %4544 = vmatpush1.msra.mxu0 0.0
          %4545 = vmatprep.subr.mxu0 0.0
          %4546 = vmatpush1.msra.mxu0 0.0
          %4547 = vmatprep.mubr.f32.mxu0 0.0
          %v4548 = vand.u32 %v4138, 4294901760
          %v4549 = vsub.f32 %v4138, %v4548
          %4550 = vmatmul.mubr.f32.gmra.mrb[0].mxu0 %v4549
          %v4551 = vpop.f32.mrb[0].mxu0
          %v4552 = vadd.f32 %v4422, %v4551
          %v4553 = vpop.f32.mrb[0].mxu0
          %4554 = vmatprep.mubr.f32.mxu0 0.0
          %v4555 = vand.u32 %v4141, 4294901760
          %v4556 = vsub.f32 %v4141, %v4555
          %4557 = vmatmul.mubr.f32.gmra.mrb[0].mxu0 %v4556
          %v4558 = vpop.f32.mrb[0].mxu0
          %v4559 = vadd.f32 %v4428, %v4558
          %v4560 = vpop.f32.mrb[0].mxu0
          %4561 = vmatprep.mubr.f32.mxu0 0.0
          %v4562 = vand.u32 %v4144, 4294901760
          %v4563 = vsub.f32 %v4144, %v4562
          %4564 = vmatmul.mubr.f32.gmra.mrb[0].mxu0 %v4563
          %v4565 = vpop.f32.mrb[0].mxu0
          %v4566 = vadd.f32 %v4434, %v4565
          %v4567 = vpop.f32.mrb[0].mxu0
          %4568 = vmatprep.mubr.f32.mxu0 0.0
          %v4569 = vand.u32 %v4147, 4294901760
          %v4570 = vsub.f32 %v4147, %v4569
          %4571 = vmatmul.mubr.f32.gmra.mrb[0].mxu0 %v4570
          %v4572 = vpop.f32.mrb[0].mxu0
          %v4573 = vadd.f32 %v4440, %v4572
          %v4574 = vpop.f32.mrb[0].mxu0
          %4575 = vmatprep.mubr.f32.mxu0 0.0
          %v4576 = vand.u32 %v4150, 4294901760
          %v4577 = vsub.f32 %v4150, %v4576
          %4578 = vmatmul.mubr.f32.gmra.mrb[0].mxu0 %v4577
          %v4579 = vpop.f32.mrb[0].mxu0
          %v4580 = vadd.f32 %v4446, %v4579
          %v4581 = vpop.f32.mrb[0].mxu0
          %4582 = vmatprep.mubr.f32.mxu0 0.0
          %v4583 = vand.u32 %v4153, 4294901760
          %v4584 = vsub.f32 %v4153, %v4583
          %4585 = vmatmul.mubr.f32.gmra.mrb[0].mxu0 %v4584
          %v4586 = vpop.f32.mrb[0].mxu0
          %v4587 = vadd.f32 %v4452, %v4586
          %v4588 = vpop.f32.mrb[0].mxu0
          %4589 = vmatprep.mubr.f32.mxu0 0.0
          %v4590 = vand.u32 %v4156, 4294901760
          %v4591 = vsub.f32 %v4156, %v4590
          %4592 = vmatmul.mubr.f32.gmra.mrb[0].mxu0 %v4591
          %v4593 = vpop.f32.mrb[0].mxu0
          %v4594 = vadd.f32 %v4458, %v4593
          %v4595 = vpop.f32.mrb[0].mxu0
          %4596 = vmatprep.mubr.f32.mxu0 0.0
          %v4597 = vand.u32 %v4159, 4294901760
          %v4598 = vsub.f32 %v4159, %v4597
          %4599 = vmatmul.mubr.f32.gmra.mrb[0].mxu0 %v4598
          %v4600 = vpop.f32.mrb[0].mxu0
          %v4601 = vadd.f32 %v4464, %v4600
          %v4602 = vpop.f32.mrb[0].mxu0
          %4603 = vdwg.mxu0
          %4604 = vmatprep.subr.mxu0 0.0
          %v4605 = vand.u32 %v4121, 4294901760
          %4606 = vmatpush1.msra.mxu0 %v4605
          %4607 = vmatprep.subr.mxu0 0.0
          %v4608 = vand.u32 %v4122, 4294901760
          %4609 = vmatpush1.msra.mxu0 %v4608
          %4610 = vmatprep.subr.mxu0 0.0
          %v4611 = vand.u32 %v4123, 4294901760
          %4612 = vmatpush1.msra.mxu0 %v4611
          %4613 = vmatprep.subr.mxu0 0.0
          %v4614 = vand.u32 %v4124, 4294901760
          %4615 = vmatpush1.msra.mxu0 %v4614
          %4616 = vmatprep.subr.mxu0 0.0
          %v4617 = vand.u32 %v4125, 4294901760
          %4618 = vmatpush1.msra.mxu0 %v4617
          %4619 = vmatprep.subr.mxu0 0.0
          %v4620 = vand.u32 %v4126, 4294901760
          %4621 = vmatpush1.msra.mxu0 %v4620
          %4622 = vmatprep.subr.mxu0 0.0
          %v4623 = vand.u32 %v4127, 4294901760
          %4624 = vmatpush1.msra.mxu0 %v4623
          %4625 = vmatprep.subr.mxu0 0.0
          %v4626 = vand.u32 %v4128, 4294901760
          %4627 = vmatpush1.msra.mxu0 %v4626
          %4628 = vmatprep.subr.mxu0 0.0
          %4629 = vmatpush1.msra.mxu0 0.0
          %4630 = vmatprep.subr.mxu0 0.0
          %4631 = vmatpush1.msra.mxu0 0.0
          %4632 = vmatprep.subr.mxu0 0.0
          %4633 = vmatpush1.msra.mxu0 0.0
          %4634 = vmatprep.subr.mxu0 0.0
          %4635 = vmatpush1.msra.mxu0 0.0
          %4636 = vmatprep.subr.mxu0 0.0
          %4637 = vmatpush1.msra.mxu0 0.0
          %4638 = vmatprep.subr.mxu0 0.0
          %4639 = vmatpush1.msra.mxu0 0.0
          %4640 = vmatprep.subr.mxu0 0.0
          %4641 = vmatpush1.msra.mxu0 0.0
          %4642 = vmatprep.subr.mxu0 0.0
          %4643 = vmatpush1.msra.mxu0 0.0
          %4644 = vmatprep.subr.mxu0 0.0
          %4645 = vmatpush1.msra.mxu0 0.0
          %4646 = vmatprep.subr.mxu0 0.0
          %4647 = vmatpush1.msra.mxu0 0.0
          %4648 = vmatprep.subr.mxu0 0.0
          %4649 = vmatpush1.msra.mxu0 0.0
          %4650 = vmatprep.subr.mxu0 0.0
          %4651 = vmatpush1.msra.mxu0 0.0
          %4652 = vmatprep.subr.mxu0 0.0
          %4653 = vmatpush1.msra.mxu0 0.0
          %4654 = vmatprep.subr.mxu0 0.0
          %4655 = vmatpush1.msra.mxu0 0.0
          %4656 = vmatprep.subr.mxu0 0.0
          %4657 = vmatpush1.msra.mxu0 0.0
          %4658 = vmatprep.subr.mxu0 0.0
          %4659 = vmatpush1.msra.mxu0 0.0
          %4660 = vmatprep.subr.mxu0 0.0
          %4661 = vmatpush1.msra.mxu0 0.0
          %4662 = vmatprep.subr.mxu0 0.0
          %4663 = vmatpush1.msra.mxu0 0.0
          %4664 = vmatprep.subr.mxu0 0.0
          %4665 = vmatpush1.msra.mxu0 0.0
          %4666 = vmatprep.subr.mxu0 0.0
          %4667 = vmatpush1.msra.mxu0 0.0
          %4668 = vmatprep.subr.mxu0 0.0
          %4669 = vmatpush1.msra.mxu0 0.0
          %4670 = vmatprep.subr.mxu0 0.0
          %4671 = vmatpush1.msra.mxu0 0.0
          %4672 = vmatprep.subr.mxu0 0.0
          %4673 = vmatpush1.msra.mxu0 0.0
          %4674 = vmatprep.subr.mxu0 0.0
          %4675 = vmatpush1.msra.mxu0 0.0
          %4676 = vmatprep.mubr.f32.mxu0 0.0
          %v4677 = vand.u32 %v4138, 4294901760
          %v4678 = vsub.f32 %v4138, %v4677
          %v4679 = vand.u32 %v4678, 4294901760
          %4680 = vmatmul.mubr.f32.gmra.mrb[0].mxu0 %v4679
          %v4681 = vpop.f32.mrb[0].mxu0
          %v4682 = vadd.f32 %v4552, %v4681
          %v4683 = vpop.f32.mrb[0].mxu0
          %4684 = vmatprep.mubr.f32.mxu0 0.0
          %v4685 = vand.u32 %v4141, 4294901760
          %v4686 = vsub.f32 %v4141, %v4685
          %v4687 = vand.u32 %v4686, 4294901760
          %4688 = vmatmul.mubr.f32.gmra.mrb[0].mxu0 %v4687
          %v4689 = vpop.f32.mrb[0].mxu0
          %v4690 = vadd.f32 %v4559, %v4689
          %v4691 = vpop.f32.mrb[0].mxu0
          %4692 = vmatprep.mubr.f32.mxu0 0.0
          %v4693 = vand.u32 %v4144, 4294901760
          %v4694 = vsub.f32 %v4144, %v4693
          %v4695 = vand.u32 %v4694, 4294901760
          %4696 = vmatmul.mubr.f32.gmra.mrb[0].mxu0 %v4695
          %v4697 = vpop.f32.mrb[0].mxu0
          %v4698 = vadd.f32 %v4566, %v4697
          %v4699 = vpop.f32.mrb[0].mxu0
          %4700 = vmatprep.mubr.f32.mxu0 0.0
          %v4701 = vand.u32 %v4147, 4294901760
          %v4702 = vsub.f32 %v4147, %v4701
          %v4703 = vand.u32 %v4702, 4294901760
          %4704 = vmatmul.mubr.f32.gmra.mrb[0].mxu0 %v4703
          %v4705 = vpop.f32.mrb[0].mxu0
          %v4706 = vadd.f32 %v4573, %v4705
          %v4707 = vpop.f32.mrb[0].mxu0
          %4708 = vmatprep.mubr.f32.mxu0 0.0
          %v4709 = vand.u32 %v4150, 4294901760
          %v4710 = vsub.f32 %v4150, %v4709
          %v4711 = vand.u32 %v4710, 4294901760
          %4712 = vmatmul.mubr.f32.gmra.mrb[0].mxu0 %v4711
          %v4713 = vpop.f32.mrb[0].mxu0
          %v4714 = vadd.f32 %v4580, %v4713
          %v4715 = vpop.f32.mrb[0].mxu0
          %4716 = vmatprep.mubr.f32.mxu0 0.0
          %v4717 = vand.u32 %v4153, 4294901760
          %v4718 = vsub.f32 %v4153, %v4717
          %v4719 = vand.u32 %v4718, 4294901760
          %4720 = vmatmul.mubr.f32.gmra.mrb[0].mxu0 %v4719
          %v4721 = vpop.f32.mrb[0].mxu0
          %v4722 = vadd.f32 %v4587, %v4721
          %v4723 = vpop.f32.mrb[0].mxu0
          %4724 = vmatprep.mubr.f32.mxu0 0.0
          %v4725 = vand.u32 %v4156, 4294901760
          %v4726 = vsub.f32 %v4156, %v4725
          %v4727 = vand.u32 %v4726, 4294901760
          %4728 = vmatmul.mubr.f32.gmra.mrb[0].mxu0 %v4727
          %v4729 = vpop.f32.mrb[0].mxu0
          %v4730 = vadd.f32 %v4594, %v4729
          %v4731 = vpop.f32.mrb[0].mxu0
          %4732 = vmatprep.mubr.f32.mxu0 0.0
          %v4733 = vand.u32 %v4159, 4294901760
          %v4734 = vsub.f32 %v4159, %v4733
          %v4735 = vand.u32 %v4734, 4294901760
          %4736 = vmatmul.mubr.f32.gmra.mrb[0].mxu0 %v4735
          %v4737 = vpop.f32.mrb[0].mxu0
          %v4738 = vadd.f32 %v4601, %v4737
          %v4739 = vpop.f32.mrb[0].mxu0
          %4740 = vdwg.mxu0
          %4741 = vmatprep.subr.mxu0 0.0
          %v4742 = vand.u32 %v4121, 4294901760
          %v4743 = vsub.f32 %v4121, %v4742
          %v4744 = vand.u32 %v4743, 4294901760
          %4745 = vmatpush1.msra.mxu0 %v4744
          %4746 = vmatprep.subr.mxu0 0.0
          %v4747 = vand.u32 %v4122, 4294901760
          %v4748 = vsub.f32 %v4122, %v4747
          %v4749 = vand.u32 %v4748, 4294901760
          %4750 = vmatpush1.msra.mxu0 %v4749
          %4751 = vmatprep.subr.mxu0 0.0
          %v4752 = vand.u32 %v4123, 4294901760
          %v4753 = vsub.f32 %v4123, %v4752
          %v4754 = vand.u32 %v4753, 4294901760
          %4755 = vmatpush1.msra.mxu0 %v4754
          %4756 = vmatprep.subr.mxu0 0.0
          %v4757 = vand.u32 %v4124, 4294901760
          %v4758 = vsub.f32 %v4124, %v4757
          %v4759 = vand.u32 %v4758, 4294901760
          %4760 = vmatpush1.msra.mxu0 %v4759
          %4761 = vmatprep.subr.mxu0 0.0
          %v4762 = vand.u32 %v4125, 4294901760
          %v4763 = vsub.f32 %v4125, %v4762
          %v4764 = vand.u32 %v4763, 4294901760
          %4765 = vmatpush1.msra.mxu0 %v4764
          %4766 = vmatprep.subr.mxu0 0.0
          %v4767 = vand.u32 %v4126, 4294901760
          %v4768 = vsub.f32 %v4126, %v4767
          %v4769 = vand.u32 %v4768, 4294901760
          %4770 = vmatpush1.msra.mxu0 %v4769
          %4771 = vmatprep.subr.mxu0 0.0
          %v4772 = vand.u32 %v4127, 4294901760
          %v4773 = vsub.f32 %v4127, %v4772
          %v4774 = vand.u32 %v4773, 4294901760
          %4775 = vmatpush1.msra.mxu0 %v4774
          %4776 = vmatprep.subr.mxu0 0.0
          %v4777 = vand.u32 %v4128, 4294901760
          %v4778 = vsub.f32 %v4128, %v4777
          %v4779 = vand.u32 %v4778, 4294901760
          %4780 = vmatpush1.msra.mxu0 %v4779
          %4781 = vmatprep.subr.mxu0 0.0
          %4782 = vmatpush1.msra.mxu0 0.0
          %4783 = vmatprep.subr.mxu0 0.0
          %4784 = vmatpush1.msra.mxu0 0.0
          %4785 = vmatprep.subr.mxu0 0.0
          %4786 = vmatpush1.msra.mxu0 0.0
          %4787 = vmatprep.subr.mxu0 0.0
          %4788 = vmatpush1.msra.mxu0 0.0
          %4789 = vmatprep.subr.mxu0 0.0
          %4790 = vmatpush1.msra.mxu0 0.0
          %4791 = vmatprep.subr.mxu0 0.0
          %4792 = vmatpush1.msra.mxu0 0.0
          %4793 = vmatprep.subr.mxu0 0.0
          %4794 = vmatpush1.msra.mxu0 0.0
          %4795 = vmatprep.subr.mxu0 0.0
          %4796 = vmatpush1.msra.mxu0 0.0
          %4797 = vmatprep.subr.mxu0 0.0
          %4798 = vmatpush1.msra.mxu0 0.0
          %4799 = vmatprep.subr.mxu0 0.0
          %4800 = vmatpush1.msra.mxu0 0.0
          %4801 = vmatprep.subr.mxu0 0.0
          %4802 = vmatpush1.msra.mxu0 0.0
          %4803 = vmatprep.subr.mxu0 0.0
          %4804 = vmatpush1.msra.mxu0 0.0
          %4805 = vmatprep.subr.mxu0 0.0
          %4806 = vmatpush1.msra.mxu0 0.0
          %4807 = vmatprep.subr.mxu0 0.0
          %4808 = vmatpush1.msra.mxu0 0.0
          %4809 = vmatprep.subr.mxu0 0.0
          %4810 = vmatpush1.msra.mxu0 0.0
          %4811 = vmatprep.subr.mxu0 0.0
          %4812 = vmatpush1.msra.mxu0 0.0
          %4813 = vmatprep.subr.mxu0 0.0
          %4814 = vmatpush1.msra.mxu0 0.0
          %4815 = vmatprep.subr.mxu0 0.0
          %4816 = vmatpush1.msra.mxu0 0.0
          %4817 = vmatprep.subr.mxu0 0.0
          %4818 = vmatpush1.msra.mxu0 0.0
          %4819 = vmatprep.subr.mxu0 0.0
          %4820 = vmatpush1.msra.mxu0 0.0
          %4821 = vmatprep.subr.mxu0 0.0
          %4822 = vmatpush1.msra.mxu0 0.0
          %4823 = vmatprep.subr.mxu0 0.0
          %4824 = vmatpush1.msra.mxu0 0.0
          %4825 = vmatprep.subr.mxu0 0.0
          %4826 = vmatpush1.msra.mxu0 0.0
          %4827 = vmatprep.subr.mxu0 0.0
          %4828 = vmatpush1.msra.mxu0 0.0
          %4829 = vmatprep.mubr.f32.mxu0 0.0
          %v4830 = vand.u32 %v4138, 4294901760
          %4831 = vmatmul.mubr.f32.gmra.mrb[0].mxu0 %v4830
          %v4832 = vpop.f32.mrb[0].mxu0
          %v4833 = vadd.f32 %v4682, %v4832
          %v4834 = vpop.f32.mrb[0].mxu0
          %4835 = vmatprep.mubr.f32.mxu0 0.0
          %v4836 = vand.u32 %v4141, 4294901760
          %4837 = vmatmul.mubr.f32.gmra.mrb[0].mxu0 %v4836
          %v4838 = vpop.f32.mrb[0].mxu0
          %v4839 = vadd.f32 %v4690, %v4838
          %v4840 = vpop.f32.mrb[0].mxu0
          %4841 = vmatprep.mubr.f32.mxu0 0.0
          %v4842 = vand.u32 %v4144, 4294901760
          %4843 = vmatmul.mubr.f32.gmra.mrb[0].mxu0 %v4842
          %v4844 = vpop.f32.mrb[0].mxu0
          %v4845 = vadd.f32 %v4698, %v4844
          %v4846 = vpop.f32.mrb[0].mxu0
          %4847 = vmatprep.mubr.f32.mxu0 0.0
          %v4848 = vand.u32 %v4147, 4294901760
          %4849 = vmatmul.mubr.f32.gmra.mrb[0].mxu0 %v4848
          %v4850 = vpop.f32.mrb[0].mxu0
          %v4851 = vadd.f32 %v4706, %v4850
          %v4852 = vpop.f32.mrb[0].mxu0
          %4853 = vmatprep.mubr.f32.mxu0 0.0
          %v4854 = vand.u32 %v4150, 4294901760
          %4855 = vmatmul.mubr.f32.gmra.mrb[0].mxu0 %v4854
          %v4856 = vpop.f32.mrb[0].mxu0
          %v4857 = vadd.f32 %v4714, %v4856
          %v4858 = vpop.f32.mrb[0].mxu0
          %4859 = vmatprep.mubr.f32.mxu0 0.0
          %v4860 = vand.u32 %v4153, 4294901760
          %4861 = vmatmul.mubr.f32.gmra.mrb[0].mxu0 %v4860
          %v4862 = vpop.f32.mrb[0].mxu0
          %v4863 = vadd.f32 %v4722, %v4862
          %v4864 = vpop.f32.mrb[0].mxu0
          %4865 = vmatprep.mubr.f32.mxu0 0.0
          %v4866 = vand.u32 %v4156, 4294901760
          %4867 = vmatmul.mubr.f32.gmra.mrb[0].mxu0 %v4866
          %v4868 = vpop.f32.mrb[0].mxu0
          %v4869 = vadd.f32 %v4730, %v4868
          %v4870 = vpop.f32.mrb[0].mxu0
          %4871 = vmatprep.mubr.f32.mxu0 0.0
          %v4872 = vand.u32 %v4159, 4294901760
          %4873 = vmatmul.mubr.f32.gmra.mrb[0].mxu0 %v4872
          %v4874 = vpop.f32.mrb[0].mxu0
          %v4875 = vadd.f32 %v4738, %v4874
          %v4876 = vpop.f32.mrb[0].mxu0
          %4877 = vdwg.mxu0
          %4878 = vmatprep.subr.mxu0 0.0
          %v4879 = vand.u32 %v4121, 4294901760
          %4880 = vmatpush1.msra.mxu0 %v4879
          %4881 = vmatprep.subr.mxu0 0.0
          %v4882 = vand.u32 %v4122, 4294901760
          %4883 = vmatpush1.msra.mxu0 %v4882
          %4884 = vmatprep.subr.mxu0 0.0
          %v4885 = vand.u32 %v4123, 4294901760
          %4886 = vmatpush1.msra.mxu0 %v4885
          %4887 = vmatprep.subr.mxu0 0.0
          %v4888 = vand.u32 %v4124, 4294901760
          %4889 = vmatpush1.msra.mxu0 %v4888
          %4890 = vmatprep.subr.mxu0 0.0
          %v4891 = vand.u32 %v4125, 4294901760
          %4892 = vmatpush1.msra.mxu0 %v4891
          %4893 = vmatprep.subr.mxu0 0.0
          %v4894 = vand.u32 %v4126, 4294901760
          %4895 = vmatpush1.msra.mxu0 %v4894
          %4896 = vmatprep.subr.mxu0 0.0
          %v4897 = vand.u32 %v4127, 4294901760
          %4898 = vmatpush1.msra.mxu0 %v4897
          %4899 = vmatprep.subr.mxu0 0.0
          %v4900 = vand.u32 %v4128, 4294901760
          %4901 = vmatpush1.msra.mxu0 %v4900
          %4902 = vmatprep.subr.mxu0 0.0
          %4903 = vmatpush1.msra.mxu0 0.0
          %4904 = vmatprep.subr.mxu0 0.0
          %4905 = vmatpush1.msra.mxu0 0.0
          %4906 = vmatprep.subr.mxu0 0.0
          %4907 = vmatpush1.msra.mxu0 0.0
          %4908 = vmatprep.subr.mxu0 0.0
          %4909 = vmatpush1.msra.mxu0 0.0
          %4910 = vmatprep.subr.mxu0 0.0
          %4911 = vmatpush1.msra.mxu0 0.0
          %4912 = vmatprep.subr.mxu0 0.0
          %4913 = vmatpush1.msra.mxu0 0.0
          %4914 = vmatprep.subr.mxu0 0.0
          %4915 = vmatpush1.msra.mxu0 0.0
          %4916 = vmatprep.subr.mxu0 0.0
          %4917 = vmatpush1.msra.mxu0 0.0
          %4918 = vmatprep.subr.mxu0 0.0
          %4919 = vmatpush1.msra.mxu0 0.0
          %4920 = vmatprep.subr.mxu0 0.0
          %4921 = vmatpush1.msra.mxu0 0.0
          %4922 = vmatprep.subr.mxu0 0.0
          %4923 = vmatpush1.msra.mxu0 0.0
          %4924 = vmatprep.subr.mxu0 0.0
          %4925 = vmatpush1.msra.mxu0 0.0
          %4926 = vmatprep.subr.mxu0 0.0
          %4927 = vmatpush1.msra.mxu0 0.0
          %4928 = vmatprep.subr.mxu0 0.0
          %4929 = vmatpush1.msra.mxu0 0.0
          %4930 = vmatprep.subr.mxu0 0.0
          %4931 = vmatpush1.msra.mxu0 0.0
          %4932 = vmatprep.subr.mxu0 0.0
          %4933 = vmatpush1.msra.mxu0 0.0
          %4934 = vmatprep.subr.mxu0 0.0
          %4935 = vmatpush1.msra.mxu0 0.0
          %4936 = vmatprep.subr.mxu0 0.0
          %4937 = vmatpush1.msra.mxu0 0.0
          %4938 = vmatprep.subr.mxu0 0.0
          %4939 = vmatpush1.msra.mxu0 0.0
          %4940 = vmatprep.subr.mxu0 0.0
          %4941 = vmatpush1.msra.mxu0 0.0
          %4942 = vmatprep.subr.mxu0 0.0
          %4943 = vmatpush1.msra.mxu0 0.0
          %4944 = vmatprep.subr.mxu0 0.0
          %4945 = vmatpush1.msra.mxu0 0.0
          %4946 = vmatprep.subr.mxu0 0.0
          %4947 = vmatpush1.msra.mxu0 0.0
          %4948 = vmatprep.subr.mxu0 0.0
          %4949 = vmatpush1.msra.mxu0 0.0
          %4950 = vmatprep.mubr.f32.mxu0 0.0
          %v4951 = vand.u32 %v4138, 4294901760
          %4952 = vmatmul.mubr.f32.gmra.mrb[0].mxu0 %v4951
          %v4953 = vpop.f32.mrb[0].mxu0
          %v4954 = vadd.f32 %v4833, %v4953
          %v4955 = vpop.f32.mrb[0].mxu0
          %4956 = vmatprep.mubr.f32.mxu0 0.0
          %v4957 = vand.u32 %v4141, 4294901760
          %4958 = vmatmul.mubr.f32.gmra.mrb[0].mxu0 %v4957
          %v4959 = vpop.f32.mrb[0].mxu0
          %v4960 = vadd.f32 %v4839, %v4959
          %v4961 = vpop.f32.mrb[0].mxu0
          %4962 = vmatprep.mubr.f32.mxu0 0.0
          %v4963 = vand.u32 %v4144, 4294901760
          %4964 = vmatmul.mubr.f32.gmra.mrb[0].mxu0 %v4963
          %v4965 = vpop.f32.mrb[0].mxu0
          %v4966 = vadd.f32 %v4845, %v4965
          %v4967 = vpop.f32.mrb[0].mxu0
          %4968 = vmatprep.mubr.f32.mxu0 0.0
          %v4969 = vand.u32 %v4147, 4294901760
          %4970 = vmatmul.mubr.f32.gmra.mrb[0].mxu0 %v4969
          %v4971 = vpop.f32.mrb[0].mxu0
          %v4972 = vadd.f32 %v4851, %v4971
          %v4973 = vpop.f32.mrb[0].mxu0
          %4974 = vmatprep.mubr.f32.mxu0 0.0
          %v4975 = vand.u32 %v4150, 4294901760
          %4976 = vmatmul.mubr.f32.gmra.mrb[0].mxu0 %v4975
          %v4977 = vpop.f32.mrb[0].mxu0
          %v4978 = vadd.f32 %v4857, %v4977
          %v4979 = vpop.f32.mrb[0].mxu0
          %4980 = vmatprep.mubr.f32.mxu0 0.0
          %v4981 = vand.u32 %v4153, 4294901760
          %4982 = vmatmul.mubr.f32.gmra.mrb[0].mxu0 %v4981
          %v4983 = vpop.f32.mrb[0].mxu0
          %v4984 = vadd.f32 %v4863, %v4983
          %v4985 = vpop.f32.mrb[0].mxu0
          %4986 = vmatprep.mubr.f32.mxu0 0.0
          %v4987 = vand.u32 %v4156, 4294901760
          %4988 = vmatmul.mubr.f32.gmra.mrb[0].mxu0 %v4987
          %v4989 = vpop.f32.mrb[0].mxu0
          %v4990 = vadd.f32 %v4869, %v4989
          %v4991 = vpop.f32.mrb[0].mxu0
          %4992 = vmatprep.mubr.f32.mxu0 0.0
          %v4993 = vand.u32 %v4159, 4294901760
          %4994 = vmatmul.mubr.f32.gmra.mrb[0].mxu0 %v4993
          %v4995 = vpop.f32.mrb[0].mxu0
          %v4996 = vadd.f32 %v4875, %v4995
          %v4997 = vpop.f32.mrb[0].mxu0
          %4998 = vdwg.mxu0
          %v4999 = vmax.f32 %v4954, 0.0
          %v5000 = vmax.f32 %v4960, 0.0
          %v5001 = vmax.f32 %v4966, 0.0
          %v5002 = vmax.f32 %v4972, 0.0
          %v5003 = vmax.f32 %v4978, 0.0
          %v5004 = vmax.f32 %v4984, 0.0
          %v5005 = vmax.f32 %v4990, 0.0
          %v5006 = vmax.f32 %v4996, 0.0
          %v5007 = vmax.f32 %v4999, %v5001
          %v5008 = vmax.f32 %v5000, %v5002
          %v5009 = vmax.f32 %v5007, %v5003
          %v5010 = vmax.f32 %v5008, %v5004
          %v5011 = vmax.f32 %v5009, %v5005
          %v5012 = vmax.f32 %v5010, %v5006
          %v5013 = vld [vmem:[%s7] sm:$0xff]
          %v5014 = vld [vmem:[%s7 + $0x8] sm:$0xff]
          %v5015 = vld [vmem:[%s7 + $0x10] sm:$0xff]
          %v5016 = vld [vmem:[%s7 + $0x18] sm:$0xff]
          %v5017 = vld [vmem:[%s7 + $0x20] sm:$0xff]
          %v5018 = vld [vmem:[%s7 + $0x28] sm:$0xff]
          %v5019 = vld [vmem:[%s7 + $0x30] sm:$0xff]
          %v5020 = vld [vmem:[%s7 + $0x38] sm:$0xff]
          %v5021 = vld [vmem:[%s7 + $0x40] sm:$0xff]
          %v5022 = vld [vmem:[%s7 + $0x48] sm:$0xff]
          %v5023 = vld [vmem:[%s7 + $0x50] sm:$0xff]
          %v5024 = vld [vmem:[%s7 + $0x58] sm:$0xff]
          %v5025 = vld [vmem:[%s7 + $0x60] sm:$0xff]
          %v5026 = vld [vmem:[%s7 + $0x68] sm:$0xff]
          %v5027 = vld [vmem:[%s7 + $0x70] sm:$0xff]
          %v5028 = vld [vmem:[%s7 + $0x78] sm:$0xff]
          %v5029 = vld [vmem:[%s8] sm:$0x1]
          %v5031 = vlaneseq
          %v5032 = vshrl.u32 %v5031, 7
          %v5033 = vsub.s32 0, %v5032
          %v5034 = vrot.slane %v5029, %v5033
          %5036 = vmatprep.subr.mxu0 0.0
          %v5037 = vand.u32 %v5013, 4294901760
          %5038 = vmatpush1.msra.mxu0 %v5037
          %5039 = vmatprep.subr.mxu0 0.0
          %v5040 = vand.u32 %v5014, 4294901760
          %5041 = vmatpush1.msra.mxu0 %v5040
          %5042 = vmatprep.subr.mxu0 0.0
          %v5043 = vand.u32 %v5015, 4294901760
          %5044 = vmatpush1.msra.mxu0 %v5043
          %5045 = vmatprep.subr.mxu0 0.0
          %v5046 = vand.u32 %v5016, 4294901760
          %5047 = vmatpush1.msra.mxu0 %v5046
          %5048 = vmatprep.subr.mxu0 0.0
          %v5049 = vand.u32 %v5017, 4294901760
          %5050 = vmatpush1.msra.mxu0 %v5049
          %5051 = vmatprep.subr.mxu0 0.0
          %v5052 = vand.u32 %v5018, 4294901760
          %5053 = vmatpush1.msra.mxu0 %v5052
          %5054 = vmatprep.subr.mxu0 0.0
          %v5055 = vand.u32 %v5019, 4294901760
          %5056 = vmatpush1.msra.mxu0 %v5055
          %5057 = vmatprep.subr.mxu0 0.0
          %v5058 = vand.u32 %v5020, 4294901760
          %5059 = vmatpush1.msra.mxu0 %v5058
          %5060 = vmatprep.subr.mxu0 0.0
          %v5061 = vand.u32 %v5021, 4294901760
          %5062 = vmatpush1.msra.mxu0 %v5061
          %5063 = vmatprep.subr.mxu0 0.0
          %v5064 = vand.u32 %v5022, 4294901760
          %5065 = vmatpush1.msra.mxu0 %v5064
          %5066 = vmatprep.subr.mxu0 0.0
          %v5067 = vand.u32 %v5023, 4294901760
          %5068 = vmatpush1.msra.mxu0 %v5067
          %5069 = vmatprep.subr.mxu0 0.0
          %v5070 = vand.u32 %v5024, 4294901760
          %5071 = vmatpush1.msra.mxu0 %v5070
          %5072 = vmatprep.subr.mxu0 0.0
          %v5073 = vand.u32 %v5025, 4294901760
          %5074 = vmatpush1.msra.mxu0 %v5073
          %5075 = vmatprep.subr.mxu0 0.0
          %v5076 = vand.u32 %v5026, 4294901760
          %5077 = vmatpush1.msra.mxu0 %v5076
          %5078 = vmatprep.subr.mxu0 0.0
          %v5079 = vand.u32 %v5027, 4294901760
          %5080 = vmatpush1.msra.mxu0 %v5079
          %5081 = vmatprep.subr.mxu0 0.0
          %v5082 = vand.u32 %v5028, 4294901760
          %5083 = vmatpush1.msra.mxu0 %v5082
          %5084 = vmatprep.subr.mxu0 0.0
          %5085 = vmatpush1.msra.mxu0 0.0
          %5086 = vmatprep.subr.mxu0 0.0
          %5087 = vmatpush1.msra.mxu0 0.0
          %5088 = vmatprep.subr.mxu0 0.0
          %5089 = vmatpush1.msra.mxu0 0.0
          %5090 = vmatprep.subr.mxu0 0.0
          %5091 = vmatpush1.msra.mxu0 0.0
          %5092 = vmatprep.subr.mxu0 0.0
          %5093 = vmatpush1.msra.mxu0 0.0
          %5094 = vmatprep.subr.mxu0 0.0
          %5095 = vmatpush1.msra.mxu0 0.0
          %5096 = vmatprep.subr.mxu0 0.0
          %5097 = vmatpush1.msra.mxu0 0.0
          %5098 = vmatprep.subr.mxu0 0.0
          %5099 = vmatpush1.msra.mxu0 0.0
          %5100 = vmatprep.subr.mxu0 0.0
          %5101 = vmatpush1.msra.mxu0 0.0
          %5102 = vmatprep.subr.mxu0 0.0
          %5103 = vmatpush1.msra.mxu0 0.0
          %5104 = vmatprep.subr.mxu0 0.0
          %5105 = vmatpush1.msra.mxu0 0.0
          %5106 = vmatprep.subr.mxu0 0.0
          %5107 = vmatpush1.msra.mxu0 0.0
          %5108 = vmatprep.subr.mxu0 0.0
          %5109 = vmatpush1.msra.mxu0 0.0
          %5110 = vmatprep.subr.mxu0 0.0
          %5111 = vmatpush1.msra.mxu0 0.0
          %5112 = vmatprep.subr.mxu0 0.0
          %5113 = vmatpush1.msra.mxu0 0.0
          %5114 = vmatprep.subr.mxu0 0.0
          %5115 = vmatpush1.msra.mxu0 0.0
          %5116 = vmatprep.mubr.f32.mxu0 0.0
          %v5117 = vand.u32 %v5011, 4294901760
          %v5118 = vsub.f32 %v5011, %v5117
          %v5119 = vand.u32 %v5118, 4294901760
          %v5120 = vsub.f32 %v5118, %v5119
          %v5121 = vand.u32 %v5120, 4294901760
          %5122 = vmatmul.mubr.f32.gmra.mrb[0].mxu0 %v5121
          %v5123 = vpop.f32.mrb[0].mxu0
          %v5124 = vadd.f32 %v5034, %v5123
          %v5125 = vpop.f32.mrb[0].mxu0
          %5126 = vmatprep.mubr.f32.mxu0 0.0
          %v5127 = vand.u32 %v5012, 4294901760
          %v5128 = vsub.f32 %v5012, %v5127
          %v5129 = vand.u32 %v5128, 4294901760
          %v5130 = vsub.f32 %v5128, %v5129
          %v5131 = vand.u32 %v5130, 4294901760
          %5132 = vmatmul.mubr.f32.gmra.mrb[0].mxu0 %v5131
          %v5133 = vpop.f32.mrb[0].mxu0
          %v5134 = vadd.f32 %v5034, %v5133
          %v5135 = vpop.f32.mrb[0].mxu0
          %5136 = vdwg.mxu0
          %5137 = vmatprep.subr.mxu0 0.0
          %v5138 = vand.u32 %v5013, 4294901760
          %v5139 = vsub.f32 %v5013, %v5138
          %v5140 = vand.u32 %v5139, 4294901760
          %v5141 = vsub.f32 %v5139, %v5140
          %v5142 = vand.u32 %v5141, 4294901760
          %5143 = vmatpush1.msra.mxu0 %v5142
          %5144 = vmatprep.subr.mxu0 0.0
          %v5145 = vand.u32 %v5014, 4294901760
          %v5146 = vsub.f32 %v5014, %v5145
          %v5147 = vand.u32 %v5146, 4294901760
          %v5148 = vsub.f32 %v5146, %v5147
          %v5149 = vand.u32 %v5148, 4294901760
          %5150 = vmatpush1.msra.mxu0 %v5149
          %5151 = vmatprep.subr.mxu0 0.0
          %v5152 = vand.u32 %v5015, 4294901760
          %v5153 = vsub.f32 %v5015, %v5152
          %v5154 = vand.u32 %v5153, 4294901760
          %v5155 = vsub.f32 %v5153, %v5154
          %v5156 = vand.u32 %v5155, 4294901760
          %5157 = vmatpush1.msra.mxu0 %v5156
          %5158 = vmatprep.subr.mxu0 0.0
          %v5159 = vand.u32 %v5016, 4294901760
          %v5160 = vsub.f32 %v5016, %v5159
          %v5161 = vand.u32 %v5160, 4294901760
          %v5162 = vsub.f32 %v5160, %v5161
          %v5163 = vand.u32 %v5162, 4294901760
          %5164 = vmatpush1.msra.mxu0 %v5163
          %5165 = vmatprep.subr.mxu0 0.0
          %v5166 = vand.u32 %v5017, 4294901760
          %v5167 = vsub.f32 %v5017, %v5166
          %v5168 = vand.u32 %v5167, 4294901760
          %v5169 = vsub.f32 %v5167, %v5168
          %v5170 = vand.u32 %v5169, 4294901760
          %5171 = vmatpush1.msra.mxu0 %v5170
          %5172 = vmatprep.subr.mxu0 0.0
          %v5173 = vand.u32 %v5018, 4294901760
          %v5174 = vsub.f32 %v5018, %v5173
          %v5175 = vand.u32 %v5174, 4294901760
          %v5176 = vsub.f32 %v5174, %v5175
          %v5177 = vand.u32 %v5176, 4294901760
          %5178 = vmatpush1.msra.mxu0 %v5177
          %5179 = vmatprep.subr.mxu0 0.0
          %v5180 = vand.u32 %v5019, 4294901760
          %v5181 = vsub.f32 %v5019, %v5180
          %v5182 = vand.u32 %v5181, 4294901760
          %v5183 = vsub.f32 %v5181, %v5182
          %v5184 = vand.u32 %v5183, 4294901760
          %5185 = vmatpush1.msra.mxu0 %v5184
          %5186 = vmatprep.subr.mxu0 0.0
          %v5187 = vand.u32 %v5020, 4294901760
          %v5188 = vsub.f32 %v5020, %v5187
          %v5189 = vand.u32 %v5188, 4294901760
          %v5190 = vsub.f32 %v5188, %v5189
          %v5191 = vand.u32 %v5190, 4294901760
          %5192 = vmatpush1.msra.mxu0 %v5191
          %5193 = vmatprep.subr.mxu0 0.0
          %v5194 = vand.u32 %v5021, 4294901760
          %v5195 = vsub.f32 %v5021, %v5194
          %v5196 = vand.u32 %v5195, 4294901760
          %v5197 = vsub.f32 %v5195, %v5196
          %v5198 = vand.u32 %v5197, 4294901760
          %5199 = vmatpush1.msra.mxu0 %v5198
          %5200 = vmatprep.subr.mxu0 0.0
          %v5201 = vand.u32 %v5022, 4294901760
          %v5202 = vsub.f32 %v5022, %v5201
          %v5203 = vand.u32 %v5202, 4294901760
          %v5204 = vsub.f32 %v5202, %v5203
          %v5205 = vand.u32 %v5204, 4294901760
          %5206 = vmatpush1.msra.mxu0 %v5205
          %5207 = vmatprep.subr.mxu0 0.0
          %v5208 = vand.u32 %v5023, 4294901760
          %v5209 = vsub.f32 %v5023, %v5208
          %v5210 = vand.u32 %v5209, 4294901760
          %v5211 = vsub.f32 %v5209, %v5210
          %v5212 = vand.u32 %v5211, 4294901760
          %5213 = vmatpush1.msra.mxu0 %v5212
          %5214 = vmatprep.subr.mxu0 0.0
          %v5215 = vand.u32 %v5024, 4294901760
          %v5216 = vsub.f32 %v5024, %v5215
          %v5217 = vand.u32 %v5216, 4294901760
          %v5218 = vsub.f32 %v5216, %v5217
          %v5219 = vand.u32 %v5218, 4294901760
          %5220 = vmatpush1.msra.mxu0 %v5219
          %5221 = vmatprep.subr.mxu0 0.0
          %v5222 = vand.u32 %v5025, 4294901760
          %v5223 = vsub.f32 %v5025, %v5222
          %v5224 = vand.u32 %v5223, 4294901760
          %v5225 = vsub.f32 %v5223, %v5224
          %v5226 = vand.u32 %v5225, 4294901760
          %5227 = vmatpush1.msra.mxu0 %v5226
          %5228 = vmatprep.subr.mxu0 0.0
          %v5229 = vand.u32 %v5026, 4294901760
          %v5230 = vsub.f32 %v5026, %v5229
          %v5231 = vand.u32 %v5230, 4294901760
          %v5232 = vsub.f32 %v5230, %v5231
          %v5233 = vand.u32 %v5232, 4294901760
          %5234 = vmatpush1.msra.mxu0 %v5233
          %5235 = vmatprep.subr.mxu0 0.0
          %v5236 = vand.u32 %v5027, 4294901760
          %v5237 = vsub.f32 %v5027, %v5236
          %v5238 = vand.u32 %v5237, 4294901760
          %v5239 = vsub.f32 %v5237, %v5238
          %v5240 = vand.u32 %v5239, 4294901760
          %5241 = vmatpush1.msra.mxu0 %v5240
          %5242 = vmatprep.subr.mxu0 0.0
          %v5243 = vand.u32 %v5028, 4294901760
          %v5244 = vsub.f32 %v5028, %v5243
          %v5245 = vand.u32 %v5244, 4294901760
          %v5246 = vsub.f32 %v5244, %v5245
          %v5247 = vand.u32 %v5246, 4294901760
          %5248 = vmatpush1.msra.mxu0 %v5247
          %5249 = vmatprep.subr.mxu0 0.0
          %5250 = vmatpush1.msra.mxu0 0.0
          %5251 = vmatprep.subr.mxu0 0.0
          %5252 = vmatpush1.msra.mxu0 0.0
          %5253 = vmatprep.subr.mxu0 0.0
          %5254 = vmatpush1.msra.mxu0 0.0
          %5255 = vmatprep.subr.mxu0 0.0
          %5256 = vmatpush1.msra.mxu0 0.0
          %5257 = vmatprep.subr.mxu0 0.0
          %5258 = vmatpush1.msra.mxu0 0.0
          %5259 = vmatprep.subr.mxu0 0.0
          %5260 = vmatpush1.msra.mxu0 0.0
          %5261 = vmatprep.subr.mxu0 0.0
          %5262 = vmatpush1.msra.mxu0 0.0
          %5263 = vmatprep.subr.mxu0 0.0
          %5264 = vmatpush1.msra.mxu0 0.0
          %5265 = vmatprep.subr.mxu0 0.0
          %5266 = vmatpush1.msra.mxu0 0.0
          %5267 = vmatprep.subr.mxu0 0.0
          %5268 = vmatpush1.msra.mxu0 0.0
          %5269 = vmatprep.subr.mxu0 0.0
          %5270 = vmatpush1.msra.mxu0 0.0
          %5271 = vmatprep.subr.mxu0 0.0
          %5272 = vmatpush1.msra.mxu0 0.0
          %5273 = vmatprep.subr.mxu0 0.0
          %5274 = vmatpush1.msra.mxu0 0.0
          %5275 = vmatprep.subr.mxu0 0.0
          %5276 = vmatpush1.msra.mxu0 0.0
          %5277 = vmatprep.subr.mxu0 0.0
          %5278 = vmatpush1.msra.mxu0 0.0
          %5279 = vmatprep.subr.mxu0 0.0
          %5280 = vmatpush1.msra.mxu0 0.0
          %5281 = vmatprep.mubr.f32.mxu0 0.0
          %v5282 = vand.u32 %v5011, 4294901760
          %5283 = vmatmul.mubr.f32.gmra.mrb[0].mxu0 %v5282
          %v5284 = vpop.f32.mrb[0].mxu0
          %v5285 = vadd.f32 %v5124, %v5284
          %v5286 = vpop.f32.mrb[0].mxu0
          %5287 = vmatprep.mubr.f32.mxu0 0.0
          %v5288 = vand.u32 %v5012, 4294901760
          %5289 = vmatmul.mubr.f32.gmra.mrb[0].mxu0 %v5288
          %v5290 = vpop.f32.mrb[0].mxu0
          %v5291 = vadd.f32 %v5134, %v5290
          %v5292 = vpop.f32.mrb[0].mxu0
          %5293 = vdwg.mxu0
          %5294 = vmatprep.subr.mxu0 0.0
          %v5295 = vand.u32 %v5013, 4294901760
          %v5296 = vsub.f32 %v5013, %v5295
          %5297 = vmatpush1.msra.mxu0 %v5296
          %5298 = vmatprep.subr.mxu0 0.0
          %v5299 = vand.u32 %v5014, 4294901760
          %v5300 = vsub.f32 %v5014, %v5299
          %5301 = vmatpush1.msra.mxu0 %v5300
          %5302 = vmatprep.subr.mxu0 0.0
          %v5303 = vand.u32 %v5015, 4294901760
          %v5304 = vsub.f32 %v5015, %v5303
          %5305 = vmatpush1.msra.mxu0 %v5304
          %5306 = vmatprep.subr.mxu0 0.0
          %v5307 = vand.u32 %v5016, 4294901760
          %v5308 = vsub.f32 %v5016, %v5307
          %5309 = vmatpush1.msra.mxu0 %v5308
          %5310 = vmatprep.subr.mxu0 0.0
          %v5311 = vand.u32 %v5017, 4294901760
          %v5312 = vsub.f32 %v5017, %v5311
          %5313 = vmatpush1.msra.mxu0 %v5312
          %5314 = vmatprep.subr.mxu0 0.0
          %v5315 = vand.u32 %v5018, 4294901760
          %v5316 = vsub.f32 %v5018, %v5315
          %5317 = vmatpush1.msra.mxu0 %v5316
          %5318 = vmatprep.subr.mxu0 0.0
          %v5319 = vand.u32 %v5019, 4294901760
          %v5320 = vsub.f32 %v5019, %v5319
          %5321 = vmatpush1.msra.mxu0 %v5320
          %5322 = vmatprep.subr.mxu0 0.0
          %v5323 = vand.u32 %v5020, 4294901760
          %v5324 = vsub.f32 %v5020, %v5323
          %5325 = vmatpush1.msra.mxu0 %v5324
          %5326 = vmatprep.subr.mxu0 0.0
          %v5327 = vand.u32 %v5021, 4294901760
          %v5328 = vsub.f32 %v5021, %v5327
          %5329 = vmatpush1.msra.mxu0 %v5328
          %5330 = vmatprep.subr.mxu0 0.0
          %v5331 = vand.u32 %v5022, 4294901760
          %v5332 = vsub.f32 %v5022, %v5331
          %5333 = vmatpush1.msra.mxu0 %v5332
          %5334 = vmatprep.subr.mxu0 0.0
          %v5335 = vand.u32 %v5023, 4294901760
          %v5336 = vsub.f32 %v5023, %v5335
          %5337 = vmatpush1.msra.mxu0 %v5336
          %5338 = vmatprep.subr.mxu0 0.0
          %v5339 = vand.u32 %v5024, 4294901760
          %v5340 = vsub.f32 %v5024, %v5339
          %5341 = vmatpush1.msra.mxu0 %v5340
          %5342 = vmatprep.subr.mxu0 0.0
          %v5343 = vand.u32 %v5025, 4294901760
          %v5344 = vsub.f32 %v5025, %v5343
          %5345 = vmatpush1.msra.mxu0 %v5344
          %5346 = vmatprep.subr.mxu0 0.0
          %v5347 = vand.u32 %v5026, 4294901760
          %v5348 = vsub.f32 %v5026, %v5347
          %5349 = vmatpush1.msra.mxu0 %v5348
          %5350 = vmatprep.subr.mxu0 0.0
          %v5351 = vand.u32 %v5027, 4294901760
          %v5352 = vsub.f32 %v5027, %v5351
          %5353 = vmatpush1.msra.mxu0 %v5352
          %5354 = vmatprep.subr.mxu0 0.0
          %v5355 = vand.u32 %v5028, 4294901760
          %v5356 = vsub.f32 %v5028, %v5355
          %5357 = vmatpush1.msra.mxu0 %v5356
          %5358 = vmatprep.subr.mxu0 0.0
          %5359 = vmatpush1.msra.mxu0 0.0
          %5360 = vmatprep.subr.mxu0 0.0
          %5361 = vmatpush1.msra.mxu0 0.0
          %5362 = vmatprep.subr.mxu0 0.0
          %5363 = vmatpush1.msra.mxu0 0.0
          %5364 = vmatprep.subr.mxu0 0.0
          %5365 = vmatpush1.msra.mxu0 0.0
          %5366 = vmatprep.subr.mxu0 0.0
          %5367 = vmatpush1.msra.mxu0 0.0
          %5368 = vmatprep.subr.mxu0 0.0
          %5369 = vmatpush1.msra.mxu0 0.0
          %5370 = vmatprep.subr.mxu0 0.0
          %5371 = vmatpush1.msra.mxu0 0.0
          %5372 = vmatprep.subr.mxu0 0.0
          %5373 = vmatpush1.msra.mxu0 0.0
          %5374 = vmatprep.subr.mxu0 0.0
          %5375 = vmatpush1.msra.mxu0 0.0
          %5376 = vmatprep.subr.mxu0 0.0
          %5377 = vmatpush1.msra.mxu0 0.0
          %5378 = vmatprep.subr.mxu0 0.0
          %5379 = vmatpush1.msra.mxu0 0.0
          %5380 = vmatprep.subr.mxu0 0.0
          %5381 = vmatpush1.msra.mxu0 0.0
          %5382 = vmatprep.subr.mxu0 0.0
          %5383 = vmatpush1.msra.mxu0 0.0
          %5384 = vmatprep.subr.mxu0 0.0
          %5385 = vmatpush1.msra.mxu0 0.0
          %5386 = vmatprep.subr.mxu0 0.0
          %5387 = vmatpush1.msra.mxu0 0.0
          %5388 = vmatprep.subr.mxu0 0.0
          %5389 = vmatpush1.msra.mxu0 0.0
          %5390 = vmatprep.mubr.f32.mxu0 0.0
          %v5391 = vand.u32 %v5011, 4294901760
          %v5392 = vsub.f32 %v5011, %v5391
          %5393 = vmatmul.mubr.f32.gmra.mrb[0].mxu0 %v5392
          %v5394 = vpop.f32.mrb[0].mxu0
          %v5395 = vadd.f32 %v5285, %v5394
          %v5396 = vpop.f32.mrb[0].mxu0
          %5397 = vmatprep.mubr.f32.mxu0 0.0
          %v5398 = vand.u32 %v5012, 4294901760
          %v5399 = vsub.f32 %v5012, %v5398
          %5400 = vmatmul.mubr.f32.gmra.mrb[0].mxu0 %v5399
          %v5401 = vpop.f32.mrb[0].mxu0
          %v5402 = vadd.f32 %v5291, %v5401
          %v5403 = vpop.f32.mrb[0].mxu0
          %5404 = vdwg.mxu0
          %5405 = vmatprep.subr.mxu0 0.0
          %v5406 = vand.u32 %v5013, 4294901760
          %5407 = vmatpush1.msra.mxu0 %v5406
          %5408 = vmatprep.subr.mxu0 0.0
          %v5409 = vand.u32 %v5014, 4294901760
          %5410 = vmatpush1.msra.mxu0 %v5409
          %5411 = vmatprep.subr.mxu0 0.0
          %v5412 = vand.u32 %v5015, 4294901760
          %5413 = vmatpush1.msra.mxu0 %v5412
          %5414 = vmatprep.subr.mxu0 0.0
          %v5415 = vand.u32 %v5016, 4294901760
          %5416 = vmatpush1.msra.mxu0 %v5415
          %5417 = vmatprep.subr.mxu0 0.0
          %v5418 = vand.u32 %v5017, 4294901760
          %5419 = vmatpush1.msra.mxu0 %v5418
          %5420 = vmatprep.subr.mxu0 0.0
          %v5421 = vand.u32 %v5018, 4294901760
          %5422 = vmatpush1.msra.mxu0 %v5421
          %5423 = vmatprep.subr.mxu0 0.0
          %v5424 = vand.u32 %v5019, 4294901760
          %5425 = vmatpush1.msra.mxu0 %v5424
          %5426 = vmatprep.subr.mxu0 0.0
          %v5427 = vand.u32 %v5020, 4294901760
          %5428 = vmatpush1.msra.mxu0 %v5427
          %5429 = vmatprep.subr.mxu0 0.0
          %v5430 = vand.u32 %v5021, 4294901760
          %5431 = vmatpush1.msra.mxu0 %v5430
          %5432 = vmatprep.subr.mxu0 0.0
          %v5433 = vand.u32 %v5022, 4294901760
          %5434 = vmatpush1.msra.mxu0 %v5433
          %5435 = vmatprep.subr.mxu0 0.0
          %v5436 = vand.u32 %v5023, 4294901760
          %5437 = vmatpush1.msra.mxu0 %v5436
          %5438 = vmatprep.subr.mxu0 0.0
          %v5439 = vand.u32 %v5024, 4294901760
          %5440 = vmatpush1.msra.mxu0 %v5439
          %5441 = vmatprep.subr.mxu0 0.0
          %v5442 = vand.u32 %v5025, 4294901760
          %5443 = vmatpush1.msra.mxu0 %v5442
          %5444 = vmatprep.subr.mxu0 0.0
          %v5445 = vand.u32 %v5026, 4294901760
          %5446 = vmatpush1.msra.mxu0 %v5445
          %5447 = vmatprep.subr.mxu0 0.0
          %v5448 = vand.u32 %v5027, 4294901760
          %5449 = vmatpush1.msra.mxu0 %v5448
          %5450 = vmatprep.subr.mxu0 0.0
          %v5451 = vand.u32 %v5028, 4294901760
          %5452 = vmatpush1.msra.mxu0 %v5451
          %5453 = vmatprep.subr.mxu0 0.0
          %5454 = vmatpush1.msra.mxu0 0.0
          %5455 = vmatprep.subr.mxu0 0.0
          %5456 = vmatpush1.msra.mxu0 0.0
          %5457 = vmatprep.subr.mxu0 0.0
          %5458 = vmatpush1.msra.mxu0 0.0
          %5459 = vmatprep.subr.mxu0 0.0
          %5460 = vmatpush1.msra.mxu0 0.0
          %5461 = vmatprep.subr.mxu0 0.0
          %5462 = vmatpush1.msra.mxu0 0.0
          %5463 = vmatprep.subr.mxu0 0.0
          %5464 = vmatpush1.msra.mxu0 0.0
          %5465 = vmatprep.subr.mxu0 0.0
          %5466 = vmatpush1.msra.mxu0 0.0
          %5467 = vmatprep.subr.mxu0 0.0
          %5468 = vmatpush1.msra.mxu0 0.0
          %5469 = vmatprep.subr.mxu0 0.0
          %5470 = vmatpush1.msra.mxu0 0.0
          %5471 = vmatprep.subr.mxu0 0.0
          %5472 = vmatpush1.msra.mxu0 0.0
          %5473 = vmatprep.subr.mxu0 0.0
          %5474 = vmatpush1.msra.mxu0 0.0
          %5475 = vmatprep.subr.mxu0 0.0
          %5476 = vmatpush1.msra.mxu0 0.0
          %5477 = vmatprep.subr.mxu0 0.0
          %5478 = vmatpush1.msra.mxu0 0.0
          %5479 = vmatprep.subr.mxu0 0.0
          %5480 = vmatpush1.msra.mxu0 0.0
          %5481 = vmatprep.subr.mxu0 0.0
          %5482 = vmatpush1.msra.mxu0 0.0
          %5483 = vmatprep.subr.mxu0 0.0
          %5484 = vmatpush1.msra.mxu0 0.0
          %5485 = vmatprep.mubr.f32.mxu0 0.0
          %v5486 = vand.u32 %v5011, 4294901760
          %v5487 = vsub.f32 %v5011, %v5486
          %v5488 = vand.u32 %v5487, 4294901760
          %5489 = vmatmul.mubr.f32.gmra.mrb[0].mxu0 %v5488
          %v5490 = vpop.f32.mrb[0].mxu0
          %v5491 = vadd.f32 %v5395, %v5490
          %v5492 = vpop.f32.mrb[0].mxu0
          %5493 = vmatprep.mubr.f32.mxu0 0.0
          %v5494 = vand.u32 %v5012, 4294901760
          %v5495 = vsub.f32 %v5012, %v5494
          %v5496 = vand.u32 %v5495, 4294901760
          %5497 = vmatmul.mubr.f32.gmra.mrb[0].mxu0 %v5496
          %v5498 = vpop.f32.mrb[0].mxu0
          %v5499 = vadd.f32 %v5402, %v5498
          %v5500 = vpop.f32.mrb[0].mxu0
          %5501 = vdwg.mxu0
          %5502 = vmatprep.subr.mxu0 0.0
          %v5503 = vand.u32 %v5013, 4294901760
          %v5504 = vsub.f32 %v5013, %v5503
          %v5505 = vand.u32 %v5504, 4294901760
          %5506 = vmatpush1.msra.mxu0 %v5505
          %5507 = vmatprep.subr.mxu0 0.0
          %v5508 = vand.u32 %v5014, 4294901760
          %v5509 = vsub.f32 %v5014, %v5508
          %v5510 = vand.u32 %v5509, 4294901760
          %5511 = vmatpush1.msra.mxu0 %v5510
          %5512 = vmatprep.subr.mxu0 0.0
          %v5513 = vand.u32 %v5015, 4294901760
          %v5514 = vsub.f32 %v5015, %v5513
          %v5515 = vand.u32 %v5514, 4294901760
          %5516 = vmatpush1.msra.mxu0 %v5515
          %5517 = vmatprep.subr.mxu0 0.0
          %v5518 = vand.u32 %v5016, 4294901760
          %v5519 = vsub.f32 %v5016, %v5518
          %v5520 = vand.u32 %v5519, 4294901760
          %5521 = vmatpush1.msra.mxu0 %v5520
          %5522 = vmatprep.subr.mxu0 0.0
          %v5523 = vand.u32 %v5017, 4294901760
          %v5524 = vsub.f32 %v5017, %v5523
          %v5525 = vand.u32 %v5524, 4294901760
          %5526 = vmatpush1.msra.mxu0 %v5525
          %5527 = vmatprep.subr.mxu0 0.0
          %v5528 = vand.u32 %v5018, 4294901760
          %v5529 = vsub.f32 %v5018, %v5528
          %v5530 = vand.u32 %v5529, 4294901760
          %5531 = vmatpush1.msra.mxu0 %v5530
          %5532 = vmatprep.subr.mxu0 0.0
          %v5533 = vand.u32 %v5019, 4294901760
          %v5534 = vsub.f32 %v5019, %v5533
          %v5535 = vand.u32 %v5534, 4294901760
          %5536 = vmatpush1.msra.mxu0 %v5535
          %5537 = vmatprep.subr.mxu0 0.0
          %v5538 = vand.u32 %v5020, 4294901760
          %v5539 = vsub.f32 %v5020, %v5538
          %v5540 = vand.u32 %v5539, 4294901760
          %5541 = vmatpush1.msra.mxu0 %v5540
          %5542 = vmatprep.subr.mxu0 0.0
          %v5543 = vand.u32 %v5021, 4294901760
          %v5544 = vsub.f32 %v5021, %v5543
          %v5545 = vand.u32 %v5544, 4294901760
          %5546 = vmatpush1.msra.mxu0 %v5545
          %5547 = vmatprep.subr.mxu0 0.0
          %v5548 = vand.u32 %v5022, 4294901760
          %v5549 = vsub.f32 %v5022, %v5548
          %v5550 = vand.u32 %v5549, 4294901760
          %5551 = vmatpush1.msra.mxu0 %v5550
          %5552 = vmatprep.subr.mxu0 0.0
          %v5553 = vand.u32 %v5023, 4294901760
          %v5554 = vsub.f32 %v5023, %v5553
          %v5555 = vand.u32 %v5554, 4294901760
          %5556 = vmatpush1.msra.mxu0 %v5555
          %5557 = vmatprep.subr.mxu0 0.0
          %v5558 = vand.u32 %v5024, 4294901760
          %v5559 = vsub.f32 %v5024, %v5558
          %v5560 = vand.u32 %v5559, 4294901760
          %5561 = vmatpush1.msra.mxu0 %v5560
          %5562 = vmatprep.subr.mxu0 0.0
          %v5563 = vand.u32 %v5025, 4294901760
          %v5564 = vsub.f32 %v5025, %v5563
          %v5565 = vand.u32 %v5564, 4294901760
          %5566 = vmatpush1.msra.mxu0 %v5565
          %5567 = vmatprep.subr.mxu0 0.0
          %v5568 = vand.u32 %v5026, 4294901760
          %v5569 = vsub.f32 %v5026, %v5568
          %v5570 = vand.u32 %v5569, 4294901760
          %5571 = vmatpush1.msra.mxu0 %v5570
          %5572 = vmatprep.subr.mxu0 0.0
          %v5573 = vand.u32 %v5027, 4294901760
          %v5574 = vsub.f32 %v5027, %v5573
          %v5575 = vand.u32 %v5574, 4294901760
          %5576 = vmatpush1.msra.mxu0 %v5575
          %5577 = vmatprep.subr.mxu0 0.0
          %v5578 = vand.u32 %v5028, 4294901760
          %v5579 = vsub.f32 %v5028, %v5578
          %v5580 = vand.u32 %v5579, 4294901760
          %5581 = vmatpush1.msra.mxu0 %v5580
          %5582 = vmatprep.subr.mxu0 0.0
          %5583 = vmatpush1.msra.mxu0 0.0
          %5584 = vmatprep.subr.mxu0 0.0
          %5585 = vmatpush1.msra.mxu0 0.0
          %5586 = vmatprep.subr.mxu0 0.0
          %5587 = vmatpush1.msra.mxu0 0.0
          %5588 = vmatprep.subr.mxu0 0.0
          %5589 = vmatpush1.msra.mxu0 0.0
          %5590 = vmatprep.subr.mxu0 0.0
          %5591 = vmatpush1.msra.mxu0 0.0
          %5592 = vmatprep.subr.mxu0 0.0
          %5593 = vmatpush1.msra.mxu0 0.0
          %5594 = vmatprep.subr.mxu0 0.0
          %5595 = vmatpush1.msra.mxu0 0.0
          %5596 = vmatprep.subr.mxu0 0.0
          %5597 = vmatpush1.msra.mxu0 0.0
          %5598 = vmatprep.subr.mxu0 0.0
          %5599 = vmatpush1.msra.mxu0 0.0
          %5600 = vmatprep.subr.mxu0 0.0
          %5601 = vmatpush1.msra.mxu0 0.0
          %5602 = vmatprep.subr.mxu0 0.0
          %5603 = vmatpush1.msra.mxu0 0.0
          %5604 = vmatprep.subr.mxu0 0.0
          %5605 = vmatpush1.msra.mxu0 0.0
          %5606 = vmatprep.subr.mxu0 0.0
          %5607 = vmatpush1.msra.mxu0 0.0
          %5608 = vmatprep.subr.mxu0 0.0
          %5609 = vmatpush1.msra.mxu0 0.0
          %5610 = vmatprep.subr.mxu0 0.0
          %5611 = vmatpush1.msra.mxu0 0.0
          %5612 = vmatprep.subr.mxu0 0.0
          %5613 = vmatpush1.msra.mxu0 0.0
          %5614 = vmatprep.mubr.f32.mxu0 0.0
          %v5615 = vand.u32 %v5011, 4294901760
          %5616 = vmatmul.mubr.f32.gmra.mrb[0].mxu0 %v5615
          %v5617 = vpop.f32.mrb[0].mxu0
          %v5618 = vadd.f32 %v5491, %v5617
          %v5619 = vpop.f32.mrb[0].mxu0
          %5620 = vmatprep.mubr.f32.mxu0 0.0
          %v5621 = vand.u32 %v5012, 4294901760
          %5622 = vmatmul.mubr.f32.gmra.mrb[0].mxu0 %v5621
          %v5623 = vpop.f32.mrb[0].mxu0
          %v5624 = vadd.f32 %v5499, %v5623
          %v5625 = vpop.f32.mrb[0].mxu0
          %5626 = vdwg.mxu0
          %5627 = vmatprep.subr.mxu0 0.0
          %v5628 = vand.u32 %v5013, 4294901760
          %5629 = vmatpush1.msra.mxu0 %v5628
          %5630 = vmatprep.subr.mxu0 0.0
          %v5631 = vand.u32 %v5014, 4294901760
          %5632 = vmatpush1.msra.mxu0 %v5631
          %5633 = vmatprep.subr.mxu0 0.0
          %v5634 = vand.u32 %v5015, 4294901760
          %5635 = vmatpush1.msra.mxu0 %v5634
          %5636 = vmatprep.subr.mxu0 0.0
          %v5637 = vand.u32 %v5016, 4294901760
          %5638 = vmatpush1.msra.mxu0 %v5637
          %5639 = vmatprep.subr.mxu0 0.0
          %v5640 = vand.u32 %v5017, 4294901760
          %5641 = vmatpush1.msra.mxu0 %v5640
          %5642 = vmatprep.subr.mxu0 0.0
          %v5643 = vand.u32 %v5018, 4294901760
          %5644 = vmatpush1.msra.mxu0 %v5643
          %5645 = vmatprep.subr.mxu0 0.0
          %v5646 = vand.u32 %v5019, 4294901760
          %5647 = vmatpush1.msra.mxu0 %v5646
          %5648 = vmatprep.subr.mxu0 0.0
          %v5649 = vand.u32 %v5020, 4294901760
          %5650 = vmatpush1.msra.mxu0 %v5649
          %5651 = vmatprep.subr.mxu0 0.0
          %v5652 = vand.u32 %v5021, 4294901760
          %5653 = vmatpush1.msra.mxu0 %v5652
          %5654 = vmatprep.subr.mxu0 0.0
          %v5655 = vand.u32 %v5022, 4294901760
          %5656 = vmatpush1.msra.mxu0 %v5655
          %5657 = vmatprep.subr.mxu0 0.0
          %v5658 = vand.u32 %v5023, 4294901760
          %5659 = vmatpush1.msra.mxu0 %v5658
          %5660 = vmatprep.subr.mxu0 0.0
          %v5661 = vand.u32 %v5024, 4294901760
          %5662 = vmatpush1.msra.mxu0 %v5661
          %5663 = vmatprep.subr.mxu0 0.0
          %v5664 = vand.u32 %v5025, 4294901760
          %5665 = vmatpush1.msra.mxu0 %v5664
          %5666 = vmatprep.subr.mxu0 0.0
          %v5667 = vand.u32 %v5026, 4294901760
          %5668 = vmatpush1.msra.mxu0 %v5667
          %5669 = vmatprep.subr.mxu0 0.0
          %v5670 = vand.u32 %v5027, 4294901760
          %5671 = vmatpush1.msra.mxu0 %v5670
          %5672 = vmatprep.subr.mxu0 0.0
          %v5673 = vand.u32 %v5028, 4294901760
          %5674 = vmatpush1.msra.mxu0 %v5673
          %5675 = vmatprep.subr.mxu0 0.0
          %5676 = vmatpush1.msra.mxu0 0.0
          %5677 = vmatprep.subr.mxu0 0.0
          %5678 = vmatpush1.msra.mxu0 0.0
          %5679 = vmatprep.subr.mxu0 0.0
          %5680 = vmatpush1.msra.mxu0 0.0
          %5681 = vmatprep.subr.mxu0 0.0
          %5682 = vmatpush1.msra.mxu0 0.0
          %5683 = vmatprep.subr.mxu0 0.0
          %5684 = vmatpush1.msra.mxu0 0.0
          %5685 = vmatprep.subr.mxu0 0.0
          %5686 = vmatpush1.msra.mxu0 0.0
          %5687 = vmatprep.subr.mxu0 0.0
          %5688 = vmatpush1.msra.mxu0 0.0
          %5689 = vmatprep.subr.mxu0 0.0
          %5690 = vmatpush1.msra.mxu0 0.0
          %5691 = vmatprep.subr.mxu0 0.0
          %5692 = vmatpush1.msra.mxu0 0.0
          %5693 = vmatprep.subr.mxu0 0.0
          %5694 = vmatpush1.msra.mxu0 0.0
          %5695 = vmatprep.subr.mxu0 0.0
          %5696 = vmatpush1.msra.mxu0 0.0
          %5697 = vmatprep.subr.mxu0 0.0
          %5698 = vmatpush1.msra.mxu0 0.0
          %5699 = vmatprep.subr.mxu0 0.0
          %5700 = vmatpush1.msra.mxu0 0.0
          %5701 = vmatprep.subr.mxu0 0.0
          %5702 = vmatpush1.msra.mxu0 0.0
          %5703 = vmatprep.subr.mxu0 0.0
          %5704 = vmatpush1.msra.mxu0 0.0
          %5705 = vmatprep.subr.mxu0 0.0
          %5706 = vmatpush1.msra.mxu0 0.0
          %5707 = vmatprep.mubr.f32.mxu0 0.0
          %v5708 = vand.u32 %v5011, 4294901760
          %5709 = vmatmul.mubr.f32.gmra.mrb[0].mxu0 %v5708
          %v5710 = vpop.f32.mrb[0].mxu0
          %v5711 = vadd.f32 %v5618, %v5710
          %v5712 = vpop.f32.mrb[0].mxu0
          %5713 = vmatprep.mubr.f32.mxu0 0.0
          %v5714 = vand.u32 %v5012, 4294901760
          %5715 = vmatmul.mubr.f32.gmra.mrb[0].mxu0 %v5714
          %v5716 = vpop.f32.mrb[0].mxu0
          %v5717 = vadd.f32 %v5624, %v5716
          %v5718 = vpop.f32.mrb[0].mxu0
          %5719 = vdwg.mxu0
          %5720 = vst [vmem:[%s367] sm:$0xff] %v5711
          %5721 = vst [vmem:[%s367 + $0x8] sm:$0xff] %v5717
        $region64: #{tpu_custom_call.1} parent=55 // pred_fallthru
          _
        %s5722 = sand.u32 %s247, 1
        %s5723 = scalar_lea.sflag [#allocation4], %s5722
        %s5724 = sand.u32 %s247, 1
        %s5725 = smul.addr %s5724, 16
        %s5726 = scalar_lea.vmem [#allocation3], %s5725
        // Predicated region
        $region65: #{tpu_custom_call.1} parent=55 // pred_check
          %p5727 = pneg %p257
        $region66: #{tpu_custom_call.1} parent=55 // pred_check_branch
          %5729 = sbr.rel (%p5727) target = $region68
        $region67: #{tpu_custom_call.1} parent=55 // pred_region
          %s5730 = smul.u32 2, %s27
          %s5732 = ssub.s32 256, 256
          %5733 = vsyncadd %s5723, %s5732
          %s5734 = smul.addr %s5730, 128
          %s5735 = scalar_lea.hbm %s9, %s5734
          %s5736 = sshll.u32 %s5726, 4
          %s5737 = int_to_ptr.vmem [resolvable:$true] %s5736
          %5742 = dma.vmem_to_hbm [thread:$0]  %s5737, 256, %s5735, %s5723, 128, 128, 8
        $region68: #{tpu_custom_call.1} parent=55 // pred_fallthru
          _
      $region56: #{tpu_custom_call.1} parent=5 // pred_fallthru
        _
      %p5743 = scmp.le.s32.totalorder 2, %s18
      // Predicated region
      $region69: #{tpu_custom_call.1} parent=5 // pred_check
        %p5744 = pneg %p5743
      $region70: #{tpu_custom_call.1} parent=5 // pred_check_branch
        %5746 = sbr.rel (%p5744) target = $region72
      $region71: #{tpu_custom_call.1} parent=5 // pred_region
        %s5747 = ssub.s32 %s18, 2
        // Predicated region
        $region73: #{tpu_custom_call.1} parent=71 // pred_check
          %p5748 = pneg %p263
        $region74: #{tpu_custom_call.1} parent=71 // pred_check_branch
          %5750 = sbr.rel (%p5748) target = $region76
        $region75: #{tpu_custom_call.1} parent=71 // pred_region
          %s5751 = sand.u32 %s248, 1
          %s5752 = scalar_lea.sflag [#allocation4], %s5751
          %s5753 = sand.u32 %s248, 1
          %s5754 = smul.addr %s5753, 16
          %s5755 = scalar_lea.vmem [#allocation3], %s5754
          %5756 = dma.done %s5752, 256
        $region76: #{tpu_custom_call.1} parent=71 // pred_fallthru
          _
      $region72: #{tpu_custom_call.1} parent=5 // pred_fallthru
        _
    $region6: #{tpu_custom_call.1} parent=1 // loop_footer
      %s22 = sadd.s32 1, %s18
    $region7: #{tpu_custom_call.1} parent=1 // loop_footer_branch
      %17 = sbr.rel target = $region3
    $region8: #{tpu_custom_call.1} parent=1 // loop_exit
      _
    %5757 = vsyncpa [#allocation4], 1
    %s5758 = scalar_lea.sflag [#allocation4], 1
    %5759 = vsyncpa %s5758, 1

</llo_original>
